<compile_context>
chip_gen: v7x
topology: tpu7x:2x2x1
jax: 0.10.0
libtpu: 0.0.40
codegen_flags: <defaults>
</compile_context>

<pallas_src>
import functools

import jax
import jax.numpy as jnp
from jax import lax
from jax.experimental import pallas as pl
from jax.experimental.pallas import tpu as pltpu


def _conv3x3_band(pad_ref, w_ref, m0, mb, W, Cp):
    """One row-band of a 3x3 'same' conv.

    pad_ref: (H+2, W+2, Cp) bf16 padded activation (1-pixel zero halo).
    w_ref  : (3, 3*Cp, Cp)  bf16 weights, dy-major, rows = dx*Cp + cin.
    Returns (mb*W, Cp) float32 accumulator for output rows [m0, m0+mb).
    """
    slab = pad_ref[pl.ds(m0, mb + 2), :, :]                 # (mb+2, W+2, Cp)
    acc = jnp.zeros((mb * W, Cp), jnp.float32)
    for dy in range(3):
        rows = slab[dy:dy + mb]                             # (mb, W+2, Cp)
        # dx-tap merge: concat the 3 shifted windows along the lane axis.
        patch = jnp.concatenate(
            [rows[:, 0:W, :], rows[:, 1:W + 1, :], rows[:, 2:W + 2, :]],
            axis=-1).reshape(mb * W, 3 * Cp)                # (mb*W, 3*Cp) bf16
        acc = acc + jnp.dot(patch, w_ref[dy],
                            preferred_element_type=jnp.float32)
    return acc


def _basic_block_kernel(x_ref, w1_ref, w2_ref, b1_ref, b2_ref,
                        out_ref, xpad_ref, mid_ref, *, mb):
    """Fused conv3x3 -> (bn1-folded) bias+relu -> conv3x3 -> bias -> +res -> relu.

    x_ref  : (H, W, Cp)      unpadded input block (bf16)
    w*_ref : (3, 3*Cp, Cp)   BN-scale-folded conv weights, dy-major (bf16)
    b*_ref : (1, Cp)         folded BN bias (f32)
    out_ref: (H, W, Cp)      output block (bf16)
    xpad_ref, mid_ref : (H+2, W+2, Cp) bf16 VMEM scratch (padded input /
                        padded conv1 intermediate).
    """
    H, W, Cp = out_ref.shape
    nbands = H // mb

    # Zero only the four 1-pixel halo slabs, every grid step. Interiors are
    # fully overwritten each step; doing this unconditionally keeps it correct
    # when the parallel batch axis is split across TensorCores (v7x megacore).
    zrow = jnp.zeros((1, W + 2, Cp), xpad_ref.dtype)
    zcol = jnp.zeros((H, 1, Cp), xpad_ref.dtype)
    for pad in (xpad_ref, mid_ref):
        pad[0:1, :, :] = zrow
        pad[H + 1:H + 2, :, :] = zrow
        pad[1:H + 1, 0:1, :] = zcol
        pad[1:H + 1, W + 1:W + 2, :] = zcol

    # Copy the unpadded input into the padded scratch interior.
    xpad_ref[1:H + 1, 1:W + 1, :] = x_ref[...]

    b1 = b1_ref[...]                                        # (1, Cp) f32
    b2 = b2_ref[...]

    # --- conv1 (BN scale folded into w1) + bias + relu, banded over rows ---
    def conv1_band(t, carry):
        m0 = pl.multiple_of(t * mb, mb)
        acc = _conv3x3_band(xpad_ref, w1_ref, m0, mb, W, Cp)
        y = jnp.maximum(acc + b1, 0.0)
        mid_ref[pl.ds(m0 + 1, mb), 1:W + 1, :] = (
            y.reshape(mb, W, Cp).astype(mid_ref.dtype))
        return carry

    lax.fori_loop(0, nbands, conv1_band, 0)

    # --- conv2 (BN scale folded into w2) + bias + residual + relu ---
    def conv2_band(t, carry):
        m0 = pl.multiple_of(t * mb, mb)
        acc = _conv3x3_band(mid_ref, w2_ref, m0, mb, W, Cp)
        res = x_ref[pl.ds(m0, mb), :, :].astype(jnp.float32).reshape(mb * W, Cp)
        y = jnp.maximum(acc + b2 + res, 0.0)
        out_ref[pl.ds(m0, mb), :, :] = (
            y.reshape(mb, W, Cp).astype(out_ref.dtype))
        return carry

    lax.fori_loop(0, nbands, conv2_band, 0)


def _round_up(x, m):
    return ((x + m - 1) // m) * m


def _pick_band(H, W):
    """Band height so each f32 accumulator chunk is ~128 rows (<= 16 vregs)."""
    target = min(H, max(1, 128 // max(W, 1)))
    mb = target
    while H % mb != 0:
        mb -= 1
    return mb


def _fold_bn(gamma, beta, mean, var, eps=1e-5):
    scale = gamma / jnp.sqrt(var + eps)
    bias = beta - mean * scale
    return scale, bias


def basic_block_forward(x_nchw, params):
    """Runs the fused BasicBlock kernel. x_nchw: (N, C, H, W) float32."""
    x = jnp.transpose(x_nchw, (0, 2, 3, 1))                 # NCHW -> NHWC
    N, H, W, Cin = x.shape
    Cout = params["w1"].shape[0]
    assert Cin == Cout, "stride=1 / downsample=None path requires inplanes == planes"
    C = Cout
    Cp = _round_up(C, 128)                                  # lane-dense channel axis

    # Input: bf16, channels zero-padded to Cp (padded channels are exact 0).
    xb = jnp.pad(x.astype(jnp.bfloat16), ((0, 0), (0, 0), (0, 0), (0, Cp - C)))

    s1, b1 = _fold_bn(params["gamma1"], params["beta1"], params["mean1"], params["var1"])
    s2, b2 = _fold_bn(params["gamma2"], params["beta2"], params["mean2"], params["var2"])

    # torch conv weight (Cout, Cin, 3, 3) -> HWIO, BN scale folded per output
    # channel BEFORE the bf16 cast, channel-padded, then reshaped dy-major to
    # (3, 3*Cp, Cp) with row index = dx*Cp + cin (matches the lane concat).
    def prep_w(w, scale):
        w = jnp.transpose(w, (2, 3, 1, 0)) * scale          # (3, 3, Cin, Cout) f32
        w = w.astype(jnp.bfloat16)
        w = jnp.pad(w, ((0, 0), (0, 0), (0, Cp - C), (0, Cp - C)))
        return w.reshape(3, 3 * Cp, Cp)

    w1 = prep_w(params["w1"], s1)
    w2 = prep_w(params["w2"], s2)

    def prep_b(b):
        return jnp.pad(b, (0, Cp - C)).reshape(1, Cp).astype(jnp.float32)

    b1p = prep_b(b1)
    b2p = prep_b(b2)

    mb = _pick_band(H, W)

    out = pl.pallas_call(
        functools.partial(_basic_block_kernel, mb=mb),
        out_shape=jax.ShapeDtypeStruct((N, H, W, Cp), jnp.bfloat16),
        grid=(N,),
        in_specs=[
            pl.BlockSpec((None, H, W, Cp), lambda n: (n, 0, 0, 0)),
            # Weights are grid-invariant: single-buffer them to save VMEM.
            pl.BlockSpec((3, 3 * Cp, Cp), lambda n: (0, 0, 0),
                         pipeline_mode=pl.Buffered(1)),
            pl.BlockSpec((3, 3 * Cp, Cp), lambda n: (0, 0, 0),
                         pipeline_mode=pl.Buffered(1)),
            pl.BlockSpec((1, Cp), lambda n: (0, 0)),
            pl.BlockSpec((1, Cp), lambda n: (0, 0)),
        ],
        out_specs=pl.BlockSpec((None, H, W, Cp), lambda n: (n, 0, 0, 0)),
        scratch_shapes=[
            pltpu.VMEM((H + 2, W + 2, Cp), jnp.bfloat16),   # padded input
            pltpu.VMEM((H + 2, W + 2, Cp), jnp.bfloat16),   # padded intermediate
        ],
        compiler_params=pltpu.CompilerParams(dimension_semantics=("parallel",)),
    )(xb, w1, w2, b1p, b2p)

    out = out[..., :C]                                      # drop padded channels (bf16)
    return jnp.transpose(out, (0, 3, 1, 2))                 # NHWC -> NCHW, bf16


def basic_block_reference(x_nchw, params):
    """Pure-JAX reference with matching BN-scale folding + bf16 quantization."""
    x = jnp.transpose(x_nchw, (0, 2, 3, 1)).astype(jnp.bfloat16)
    dn = ("NHWC", "HWIO", "NHWC")
    s1, b1 = _fold_bn(params["gamma1"], params["beta1"], params["mean1"], params["var1"])
    s2, b2 = _fold_bn(params["gamma2"], params["beta2"], params["mean2"], params["var2"])
    w1 = (jnp.transpose(params["w1"], (2, 3, 1, 0)) * s1).astype(jnp.bfloat16)
    w2 = (jnp.transpose(params["w2"], (2, 3, 1, 0)) * s2).astype(jnp.bfloat16)

    out = lax.conv_general_dilated(x, w1, (1, 1), "SAME", dimension_numbers=dn,
                                   preferred_element_type=jnp.float32)
    out = jnp.maximum(out + b1, 0.0).astype(jnp.bfloat16)
    out = lax.conv_general_dilated(out, w2, (1, 1), "SAME", dimension_numbers=dn,
                                   preferred_element_type=jnp.float32)
    out = jnp.maximum(out + b2 + x.astype(jnp.float32), 0.0)
    return jnp.transpose(out, (0, 3, 1, 2))


def init_params(key, inplanes, planes):
    ks = jax.random.split(key, 10)
    return {
        "w1": 0.1 * jax.random.normal(ks[0], (planes, inplanes, 3, 3), jnp.float32),
        "w2": 0.1 * jax.random.normal(ks[1], (planes, planes, 3, 3), jnp.float32),
        "gamma1": 1.0 + 0.1 * jax.random.normal(ks[2], (planes,), jnp.float32),
        "beta1": 0.1 * jax.random.normal(ks[3], (planes,), jnp.float32),
        "mean1": 0.1 * jax.random.normal(ks[4], (planes,), jnp.float32),
        "var1": 1.0 + 0.1 * jax.random.uniform(ks[5], (planes,), jnp.float32),
        "gamma2": 1.0 + 0.1 * jax.random.normal(ks[6], (planes,), jnp.float32),
        "beta2": 0.1 * jax.random.normal(ks[7], (planes,), jnp.float32),
        "mean2": 0.1 * jax.random.normal(ks[8], (planes,), jnp.float32),
        "var2": 1.0 + 0.1 * jax.random.uniform(ks[9], (planes,), jnp.float32),
    }


if __name__ == "__main__":
    key = jax.random.PRNGKey(0)
    k_x, k_p = jax.random.split(key)

    N, C, H, W = 2, 4, 16, 16          # inplanes = planes = 4, stride = 1
    x = jax.random.normal(k_x, (N, C, H, W), jnp.float32)
    params = init_params(k_p, inplanes=C, planes=C)

    run = jax.jit(functools.partial(basic_block_forward, params=params))
    out = jax.block_until_ready(run(x))

    ref = basic_block_reference(x, params)
    assert out.shape == (N, C, H, W)
    assert out.dtype == jnp.bfloat16
    assert jnp.allclose(out.astype(jnp.float32), ref, rtol=2e-2, atol=2e-2), \
        "mismatch vs JAX reference"

    print("KERNEL_OK")
</pallas_src>

<mosaic_0001>
module attributes {stable_mosaic.version = 11 : i64} {
  func.func @_basic_block_kernel(%arg0: i32, %arg1: memref<1x16x16x128xbf16, #tpu.memory_space<vmem>>, %arg2: memref<3x384x128xbf16, #tpu.memory_space<vmem>>, %arg3: memref<3x384x128xbf16, #tpu.memory_space<vmem>>, %arg4: memref<1x128xf32, #tpu.memory_space<vmem>>, %arg5: memref<1x128xf32, #tpu.memory_space<vmem>>, %arg6: memref<1x16x16x128xbf16, #tpu.memory_space<vmem>>, %arg7: memref<18x18x128xbf16, #tpu.memory_space<vmem>>, %arg8: memref<18x18x128xbf16, #tpu.memory_space<vmem>>) attributes {dimension_semantics = [#tpu.dimension_semantics<parallel>], iteration_bounds = array<i64: 2>, scalar_prefetch = 0 : i64, scratch_operands = 2 : i64, tpu.core_type = #tpu.core_type<tc>, window_params = [{transform_indices = @transform_0, window_bounds = array<i64: 1, 16, 16, 128>}, {pipeline_mode = #tpu.pipeline_mode<synchronous>, transform_indices = @transform_1, window_bounds = array<i64: 3, 384, 128>}, {pipeline_mode = #tpu.pipeline_mode<synchronous>, transform_indices = @transform_2, window_bounds = array<i64: 3, 384, 128>}, {pipeline_mode = #tpu.pipeline_mode<synchronous>, transform_indices = @transform_3, window_bounds = array<i64: 1, 128>}, {pipeline_mode = #tpu.pipeline_mode<synchronous>, transform_indices = @transform_4, window_bounds = array<i64: 1, 128>}, {transform_indices = @transform_5, window_bounds = array<i64: 1, 16, 16, 128>}]} {
    %cst = arith.constant 0.000000e+00 : bf16
    %0 = vector.broadcast %cst : bf16 to vector<1x18x128xbf16>
    %cst_0 = arith.constant 0.000000e+00 : bf16
    %1 = vector.broadcast %cst_0 : bf16 to vector<16x1x128xbf16>
    %c0 = arith.constant 0 : index
    %c0_1 = arith.constant 0 : index
    %c0_2 = arith.constant 0 : index
    %2 = vector.load %arg7[%c0, %c0_1, %c0_2] : memref<18x18x128xbf16, #tpu.memory_space<vmem>>, vector<1x18x128xbf16>
    tpu.vector_store %arg7[%c0, %c0_1, %c0_2], %0 {strides = array<i32>} : memref<18x18x128xbf16, #tpu.memory_space<vmem>>, vector<1x18x128xbf16>,
    %c17 = arith.constant 17 : index
    %c0_3 = arith.constant 0 : index
    %c0_4 = arith.constant 0 : index
    %3 = vector.load %arg7[%c17, %c0_3, %c0_4] : memref<18x18x128xbf16, #tpu.memory_space<vmem>>, vector<1x18x128xbf16>
    tpu.vector_store %arg7[%c17, %c0_3, %c0_4], %0 {strides = array<i32>} : memref<18x18x128xbf16, #tpu.memory_space<vmem>>, vector<1x18x128xbf16>,
    %c1 = arith.constant 1 : index
    %c0_5 = arith.constant 0 : index
    %c0_6 = arith.constant 0 : index
    %4 = vector.load %arg7[%c1, %c0_5, %c0_6] : memref<18x18x128xbf16, #tpu.memory_space<vmem>>, vector<16x1x128xbf16>
    tpu.vector_store %arg7[%c1, %c0_5, %c0_6], %1 {strides = array<i32>} : memref<18x18x128xbf16, #tpu.memory_space<vmem>>, vector<16x1x128xbf16>,
    %c1_7 = arith.constant 1 : index
    %c17_8 = arith.constant 17 : index
    %c0_9 = arith.constant 0 : index
    %5 = vector.load %arg7[%c1_7, %c17_8, %c0_9] : memref<18x18x128xbf16, #tpu.memory_space<vmem>>, vector<16x1x128xbf16>
    tpu.vector_store %arg7[%c1_7, %c17_8, %c0_9], %1 {strides = array<i32>} : memref<18x18x128xbf16, #tpu.memory_space<vmem>>, vector<16x1x128xbf16>,
    %c0_10 = arith.constant 0 : index
    %c0_11 = arith.constant 0 : index
    %c0_12 = arith.constant 0 : index
    %6 = vector.load %arg8[%c0_10, %c0_11, %c0_12] : memref<18x18x128xbf16, #tpu.memory_space<vmem>>, vector<1x18x128xbf16>
    tpu.vector_store %arg8[%c0_10, %c0_11, %c0_12], %0 {strides = array<i32>} : memref<18x18x128xbf16, #tpu.memory_space<vmem>>, vector<1x18x128xbf16>,
    %c17_13 = arith.constant 17 : index
    %c0_14 = arith.constant 0 : index
    %c0_15 = arith.constant 0 : index
    %7 = vector.load %arg8[%c17_13, %c0_14, %c0_15] : memref<18x18x128xbf16, #tpu.memory_space<vmem>>, vector<1x18x128xbf16>
    tpu.vector_store %arg8[%c17_13, %c0_14, %c0_15], %0 {strides = array<i32>} : memref<18x18x128xbf16, #tpu.memory_space<vmem>>, vector<1x18x128xbf16>,
    %c1_16 = arith.constant 1 : index
    %c0_17 = arith.constant 0 : index
    %c0_18 = arith.constant 0 : index
    %8 = vector.load %arg8[%c1_16, %c0_17, %c0_18] : memref<18x18x128xbf16, #tpu.memory_space<vmem>>, vector<16x1x128xbf16>
    tpu.vector_store %arg8[%c1_16, %c0_17, %c0_18], %1 {strides = array<i32>} : memref<18x18x128xbf16, #tpu.memory_space<vmem>>, vector<16x1x128xbf16>,
    %c1_19 = arith.constant 1 : index
    %c17_20 = arith.constant 17 : index
    %c0_21 = arith.constant 0 : index
    %9 = vector.load %arg8[%c1_19, %c17_20, %c0_21] : memref<18x18x128xbf16, #tpu.memory_space<vmem>>, vector<16x1x128xbf16>
    tpu.vector_store %arg8[%c1_19, %c17_20, %c0_21], %1 {strides = array<i32>} : memref<18x18x128xbf16, #tpu.memory_space<vmem>>, vector<16x1x128xbf16>,
    %c0_22 = arith.constant 0 : index
    %c0_23 = arith.constant 0 : index
    %c0_24 = arith.constant 0 : index
    %c0_25 = arith.constant 0 : index
    %10 = vector.load %arg1[%c0_22, %c0_23, %c0_24, %c0_25] : memref<1x16x16x128xbf16, #tpu.memory_space<vmem>>, vector<1x16x16x128xbf16>
    %11 = vector.shape_cast %10 : vector<1x16x16x128xbf16> to vector<16x16x128xbf16>
    %c1_26 = arith.constant 1 : index
    %c1_27 = arith.constant 1 : index
    %c0_28 = arith.constant 0 : index
    %12 = vector.load %arg7[%c1_26, %c1_27, %c0_28] : memref<18x18x128xbf16, #tpu.memory_space<vmem>>, vector<16x16x128xbf16>
    tpu.vector_store %arg7[%c1_26, %c1_27, %c0_28], %11 {strides = array<i32>} : memref<18x18x128xbf16, #tpu.memory_space<vmem>>, vector<16x16x128xbf16>,
    %c0_29 = arith.constant 0 : index
    %c0_30 = arith.constant 0 : index
    %13 = vector.load %arg4[%c0_29, %c0_30] : memref<1x128xf32, #tpu.memory_space<vmem>>, vector<1x128xf32>
    %c0_31 = arith.constant 0 : index
    %c0_32 = arith.constant 0 : index
    %14 = vector.load %arg5[%c0_31, %c0_32] : memref<1x128xf32, #tpu.memory_space<vmem>>, vector<1x128xf32>
    %c0_i32 = arith.constant 0 : i32
    %c2_i32 = arith.constant 2 : i32
    %15 = arith.addi %c0_i32, %c2_i32 : i32
    %c1_i32 = arith.constant 1 : i32
    scf.for %arg9 = %c0_i32 to %15 step %c1_i32  : i32 {
      %c8_i32 = arith.constant 8 : i32
      %17 = arith.muli %arg9, %c8_i32 : i32
      %18 = tpu.assume_multiple %17, 8 : i32
      %19 = arith.index_cast %18 : i32 to index
      %c0_38 = arith.constant 0 : index
      %c0_39 = arith.constant 0 : index
      %20 = vector.load %arg7[%19, %c0_38, %c0_39] : memref<18x18x128xbf16, #tpu.memory_space<vmem>>, vector<10x18x128xbf16>
      %cst_40 = arith.constant 0.000000e+00 : f32
      %21 = vector.broadcast %cst_40 : f32 to vector<128x128xf32>
      %22 = vector.extract_strided_slice %20 {offsets = [0, 0, 0], sizes = [8, 18, 128], strides = [1, 1, 1]} : vector<10x18x128xbf16> to vector<8x18x128xbf16>
      %23 = vector.extract_strided_slice %22 {offsets = [0, 0, 0], sizes = [8, 16, 128], strides = [1, 1, 1]} : vector<8x18x128xbf16> to vector<8x16x128xbf16>
      %24 = vector.extract_strided_slice %22 {offsets = [0, 1, 0], sizes = [8, 16, 128], strides = [1, 1, 1]} : vector<8x18x128xbf16> to vector<8x16x128xbf16>
      %25 = vector.extract_strided_slice %22 {offsets = [0, 2, 0], sizes = [8, 16, 128], strides = [1, 1, 1]} : vector<8x18x128xbf16> to vector<8x16x128xbf16>
      %26 = tpu.concatenate %23, %24, %25 in 2 : vector<8x16x128xbf16>, vector<8x16x128xbf16>, vector<8x16x128xbf16> -> vector<8x16x384xbf16>
      %27 = vector.shape_cast %26 : vector<8x16x384xbf16> to vector<128x384xbf16>
      %c0_41 = arith.constant 0 : index
      %c0_42 = arith.constant 0 : index
      %c0_43 = arith.constant 0 : index
      %28 = vector.load %arg2[%c0_41, %c0_42, %c0_43] : memref<3x384x128xbf16, #tpu.memory_space<vmem>>, vector<1x384x128xbf16>
      %29 = vector.shape_cast %28 : vector<1x384x128xbf16> to vector<384x128xbf16>
      %cst_44 = arith.constant dense<0.000000e+00> : vector<128x128xf32>
      %30 = tpu.matmul %27, %29, %cst_44 {dimension_numbers = #tpu.dot_dimension_numbers<[1], [0], [0], [1], [0, 0, 1, 1], [], []>} : vector<128x384xbf16>, vector<384x128xbf16>, vector<128x128xf32> -> vector<128x128xf32>
      %31 = arith.addf %21, %30 : vector<128x128xf32>
      %32 = vector.extract_strided_slice %20 {offsets = [1, 0, 0], sizes = [8, 18, 128], strides = [1, 1, 1]} : vector<10x18x128xbf16> to vector<8x18x128xbf16>
      %33 = vector.extract_strided_slice %32 {offsets = [0, 0, 0], sizes = [8, 16, 128], strides = [1, 1, 1]} : vector<8x18x128xbf16> to vector<8x16x128xbf16>
      %34 = vector.extract_strided_slice %32 {offsets = [0, 1, 0], sizes = [8, 16, 128], strides = [1, 1, 1]} : vector<8x18x128xbf16> to vector<8x16x128xbf16>
      %35 = vector.extract_strided_slice %32 {offsets = [0, 2, 0], sizes = [8, 16, 128], strides = [1, 1, 1]} : vector<8x18x128xbf16> to vector<8x16x128xbf16>
      %36 = tpu.concatenate %33, %34, %35 in 2 : vector<8x16x128xbf16>, vector<8x16x128xbf16>, vector<8x16x128xbf16> -> vector<8x16x384xbf16>
      %37 = vector.shape_cast %36 : vector<8x16x384xbf16> to vector<128x384xbf16>
      %c1_45 = arith.constant 1 : index
      %c0_46 = arith.constant 0 : index
      %c0_47 = arith.constant 0 : index
      %38 = vector.load %arg2[%c1_45, %c0_46, %c0_47] : memref<3x384x128xbf16, #tpu.memory_space<vmem>>, vector<1x384x128xbf16>
      %39 = vector.shape_cast %38 : vector<1x384x128xbf16> to vector<384x128xbf16>
      %cst_48 = arith.constant dense<0.000000e+00> : vector<128x128xf32>
      %40 = tpu.matmul %37, %39, %cst_48 {dimension_numbers = #tpu.dot_dimension_numbers<[1], [0], [0], [1], [0, 0, 1, 1], [], []>} : vector<128x384xbf16>, vector<384x128xbf16>, vector<128x128xf32> -> vector<128x128xf32>
      %41 = arith.addf %31, %40 : vector<128x128xf32>
      %42 = vector.extract_strided_slice %20 {offsets = [2, 0, 0], sizes = [8, 18, 128], strides = [1, 1, 1]} : vector<10x18x128xbf16> to vector<8x18x128xbf16>
      %43 = vector.extract_strided_slice %42 {offsets = [0, 0, 0], sizes = [8, 16, 128], strides = [1, 1, 1]} : vector<8x18x128xbf16> to vector<8x16x128xbf16>
      %44 = vector.extract_strided_slice %42 {offsets = [0, 1, 0], sizes = [8, 16, 128], strides = [1, 1, 1]} : vector<8x18x128xbf16> to vector<8x16x128xbf16>
      %45 = vector.extract_strided_slice %42 {offsets = [0, 2, 0], sizes = [8, 16, 128], strides = [1, 1, 1]} : vector<8x18x128xbf16> to vector<8x16x128xbf16>
      %46 = tpu.concatenate %43, %44, %45 in 2 : vector<8x16x128xbf16>, vector<8x16x128xbf16>, vector<8x16x128xbf16> -> vector<8x16x384xbf16>
      %47 = vector.shape_cast %46 : vector<8x16x384xbf16> to vector<128x384xbf16>
      %c2 = arith.constant 2 : index
      %c0_49 = arith.constant 0 : index
      %c0_50 = arith.constant 0 : index
      %48 = vector.load %arg2[%c2, %c0_49, %c0_50] : memref<3x384x128xbf16, #tpu.memory_space<vmem>>, vector<1x384x128xbf16>
      %49 = vector.shape_cast %48 : vector<1x384x128xbf16> to vector<384x128xbf16>
      %cst_51 = arith.constant dense<0.000000e+00> : vector<128x128xf32>
      %50 = tpu.matmul %47, %49, %cst_51 {dimension_numbers = #tpu.dot_dimension_numbers<[1], [0], [0], [1], [0, 0, 1, 1], [], []>} : vector<128x384xbf16>, vector<384x128xbf16>, vector<128x128xf32> -> vector<128x128xf32>
      %51 = arith.addf %41, %50 : vector<128x128xf32>
      %52 = vector.broadcast %13 : vector<1x128xf32> to vector<128x128xf32>
      %53 = arith.addf %51, %52 : vector<128x128xf32>
      %cst_52 = arith.constant 0.000000e+00 : f32
      %54 = vector.broadcast %cst_52 : f32 to vector<128x128xf32>
      %55 = arith.maximumf %53, %54 : vector<128x128xf32>
      %56 = vector.shape_cast %55 : vector<128x128xf32> to vector<8x16x128xf32>
      %57 = arith.truncf %56 : vector<8x16x128xf32> to vector<8x16x128xbf16>
      %c1_i32_53 = arith.constant 1 : i32
      %58 = arith.addi %18, %c1_i32_53 : i32
      %59 = arith.index_cast %58 : i32 to index
      %c1_54 = arith.constant 1 : index
      %c0_55 = arith.constant 0 : index
      %60 = vector.load %arg8[%59, %c1_54, %c0_55] : memref<18x18x128xbf16, #tpu.memory_space<vmem>>, vector<8x16x128xbf16>
      tpu.vector_store %arg8[%59, %c1_54, %c0_55], %57 {strides = array<i32>} : memref<18x18x128xbf16, #tpu.memory_space<vmem>>, vector<8x16x128xbf16>,
    }
    %c2_i32_33 = arith.constant 2 : i32
    %c0_i32_34 = arith.constant 0 : i32
    %c2_i32_35 = arith.constant 2 : i32
    %16 = arith.addi %c0_i32_34, %c2_i32_35 : i32
    %c1_i32_36 = arith.constant 1 : i32
    scf.for %arg9 = %c0_i32_34 to %16 step %c1_i32_36  : i32 {
      %c8_i32 = arith.constant 8 : i32
      %17 = arith.muli %arg9, %c8_i32 : i32
      %18 = tpu.assume_multiple %17, 8 : i32
      %19 = arith.index_cast %18 : i32 to index
      %c0_38 = arith.constant 0 : index
      %c0_39 = arith.constant 0 : index
      %20 = vector.load %arg8[%19, %c0_38, %c0_39] : memref<18x18x128xbf16, #tpu.memory_space<vmem>>, vector<10x18x128xbf16>
      %cst_40 = arith.constant 0.000000e+00 : f32
      %21 = vector.broadcast %cst_40 : f32 to vector<128x128xf32>
      %22 = vector.extract_strided_slice %20 {offsets = [0, 0, 0], sizes = [8, 18, 128], strides = [1, 1, 1]} : vector<10x18x128xbf16> to vector<8x18x128xbf16>
      %23 = vector.extract_strided_slice %22 {offsets = [0, 0, 0], sizes = [8, 16, 128], strides = [1, 1, 1]} : vector<8x18x128xbf16> to vector<8x16x128xbf16>
      %24 = vector.extract_strided_slice %22 {offsets = [0, 1, 0], sizes = [8, 16, 128], strides = [1, 1, 1]} : vector<8x18x128xbf16> to vector<8x16x128xbf16>
      %25 = vector.extract_strided_slice %22 {offsets = [0, 2, 0], sizes = [8, 16, 128], strides = [1, 1, 1]} : vector<8x18x128xbf16> to vector<8x16x128xbf16>
      %26 = tpu.concatenate %23, %24, %25 in 2 : vector<8x16x128xbf16>, vector<8x16x128xbf16>, vector<8x16x128xbf16> -> vector<8x16x384xbf16>
      %27 = vector.shape_cast %26 : vector<8x16x384xbf16> to vector<128x384xbf16>
      %c0_41 = arith.constant 0 : index
      %c0_42 = arith.constant 0 : index
      %c0_43 = arith.constant 0 : index
      %28 = vector.load %arg3[%c0_41, %c0_42, %c0_43] : memref<3x384x128xbf16, #tpu.memory_space<vmem>>, vector<1x384x128xbf16>
      %29 = vector.shape_cast %28 : vector<1x384x128xbf16> to vector<384x128xbf16>
      %cst_44 = arith.constant dense<0.000000e+00> : vector<128x128xf32>
      %30 = tpu.matmul %27, %29, %cst_44 {dimension_numbers = #tpu.dot_dimension_numbers<[1], [0], [0], [1], [0, 0, 1, 1], [], []>} : vector<128x384xbf16>, vector<384x128xbf16>, vector<128x128xf32> -> vector<128x128xf32>
      %31 = arith.addf %21, %30 : vector<128x128xf32>
      %32 = vector.extract_strided_slice %20 {offsets = [1, 0, 0], sizes = [8, 18, 128], strides = [1, 1, 1]} : vector<10x18x128xbf16> to vector<8x18x128xbf16>
      %33 = vector.extract_strided_slice %32 {offsets = [0, 0, 0], sizes = [8, 16, 128], strides = [1, 1, 1]} : vector<8x18x128xbf16> to vector<8x16x128xbf16>
      %34 = vector.extract_strided_slice %32 {offsets = [0, 1, 0], sizes = [8, 16, 128], strides = [1, 1, 1]} : vector<8x18x128xbf16> to vector<8x16x128xbf16>
      %35 = vector.extract_strided_slice %32 {offsets = [0, 2, 0], sizes = [8, 16, 128], strides = [1, 1, 1]} : vector<8x18x128xbf16> to vector<8x16x128xbf16>
      %36 = tpu.concatenate %33, %34, %35 in 2 : vector<8x16x128xbf16>, vector<8x16x128xbf16>, vector<8x16x128xbf16> -> vector<8x16x384xbf16>
      %37 = vector.shape_cast %36 : vector<8x16x384xbf16> to vector<128x384xbf16>
      %c1_45 = arith.constant 1 : index
      %c0_46 = arith.constant 0 : index
      %c0_47 = arith.constant 0 : index
      %38 = vector.load %arg3[%c1_45, %c0_46, %c0_47] : memref<3x384x128xbf16, #tpu.memory_space<vmem>>, vector<1x384x128xbf16>
      %39 = vector.shape_cast %38 : vector<1x384x128xbf16> to vector<384x128xbf16>
      %cst_48 = arith.constant dense<0.000000e+00> : vector<128x128xf32>
      %40 = tpu.matmul %37, %39, %cst_48 {dimension_numbers = #tpu.dot_dimension_numbers<[1], [0], [0], [1], [0, 0, 1, 1], [], []>} : vector<128x384xbf16>, vector<384x128xbf16>, vector<128x128xf32> -> vector<128x128xf32>
      %41 = arith.addf %31, %40 : vector<128x128xf32>
      %42 = vector.extract_strided_slice %20 {offsets = [2, 0, 0], sizes = [8, 18, 128], strides = [1, 1, 1]} : vector<10x18x128xbf16> to vector<8x18x128xbf16>
      %43 = vector.extract_strided_slice %42 {offsets = [0, 0, 0], sizes = [8, 16, 128], strides = [1, 1, 1]} : vector<8x18x128xbf16> to vector<8x16x128xbf16>
      %44 = vector.extract_strided_slice %42 {offsets = [0, 1, 0], sizes = [8, 16, 128], strides = [1, 1, 1]} : vector<8x18x128xbf16> to vector<8x16x128xbf16>
      %45 = vector.extract_strided_slice %42 {offsets = [0, 2, 0], sizes = [8, 16, 128], strides = [1, 1, 1]} : vector<8x18x128xbf16> to vector<8x16x128xbf16>
      %46 = tpu.concatenate %43, %44, %45 in 2 : vector<8x16x128xbf16>, vector<8x16x128xbf16>, vector<8x16x128xbf16> -> vector<8x16x384xbf16>
      %47 = vector.shape_cast %46 : vector<8x16x384xbf16> to vector<128x384xbf16>
      %c2 = arith.constant 2 : index
      %c0_49 = arith.constant 0 : index
      %c0_50 = arith.constant 0 : index
      %48 = vector.load %arg3[%c2, %c0_49, %c0_50] : memref<3x384x128xbf16, #tpu.memory_space<vmem>>, vector<1x384x128xbf16>
      %49 = vector.shape_cast %48 : vector<1x384x128xbf16> to vector<384x128xbf16>
      %cst_51 = arith.constant dense<0.000000e+00> : vector<128x128xf32>
      %50 = tpu.matmul %47, %49, %cst_51 {dimension_numbers = #tpu.dot_dimension_numbers<[1], [0], [0], [1], [0, 0, 1, 1], [], []>} : vector<128x384xbf16>, vector<384x128xbf16>, vector<128x128xf32> -> vector<128x128xf32>
      %51 = arith.addf %41, %50 : vector<128x128xf32>
      %c0_52 = arith.constant 0 : index
      %52 = arith.index_cast %18 : i32 to index
      %c0_53 = arith.constant 0 : index
      %c0_54 = arith.constant 0 : index
      %53 = vector.load %arg1[%c0_52, %52, %c0_53, %c0_54] : memref<1x16x16x128xbf16, #tpu.memory_space<vmem>>, vector<1x8x16x128xbf16>
      %54 = vector.shape_cast %53 : vector<1x8x16x128xbf16> to vector<8x16x128xbf16>
      %55 = arith.extf %54 : vector<8x16x128xbf16> to vector<8x16x128xf32>
      %56 = vector.shape_cast %55 : vector<8x16x128xf32> to vector<128x128xf32>
      %57 = vector.broadcast %14 : vector<1x128xf32> to vector<128x128xf32>
      %58 = arith.addf %51, %57 : vector<128x128xf32>
      %59 = arith.addf %58, %56 : vector<128x128xf32>
      %cst_55 = arith.constant 0.000000e+00 : f32
      %60 = vector.broadcast %cst_55 : f32 to vector<128x128xf32>
      %61 = arith.maximumf %59, %60 : vector<128x128xf32>
      %62 = vector.shape_cast %61 : vector<128x128xf32> to vector<8x16x128xf32>
      %63 = arith.truncf %62 : vector<8x16x128xf32> to vector<8x16x128xbf16>
      %c0_56 = arith.constant 0 : index
      %64 = arith.index_cast %18 : i32 to index
      %c0_57 = arith.constant 0 : index
      %c0_58 = arith.constant 0 : index
      %65 = vector.load %arg6[%c0_56, %64, %c0_57, %c0_58] : memref<1x16x16x128xbf16, #tpu.memory_space<vmem>>, vector<1x8x16x128xbf16>
      %66 = vector.shape_cast %65 : vector<1x8x16x128xbf16> to vector<8x16x128xbf16>
      %67 = vector.shape_cast %63 : vector<8x16x128xbf16> to vector<1x8x16x128xbf16>
      tpu.vector_store %arg6[%c0_56, %64, %c0_57, %c0_58], %67 {strides = array<i32>} : memref<1x16x16x128xbf16, #tpu.memory_space<vmem>>, vector<1x8x16x128xbf16>,
    }
    %c2_i32_37 = arith.constant 2 : i32
    return
  }
  func.func @transform_0(%arg0: i32) -> (i32, i32, i32, i32) {
    %c0_i32 = arith.constant 0 : i32
    %c0_i32_0 = arith.constant 0 : i32
    %c0_i32_1 = arith.constant 0 : i32
    %c0_i32_2 = arith.constant 0 : i32
    return %arg0, %c0_i32, %c0_i32_0, %c0_i32_1 : i32, i32, i32, i32
  }
  func.func @transform_1(%arg0: i32) -> (i32, i32, i32) {
    %c0_i32 = arith.constant 0 : i32
    %c0_i32_0 = arith.constant 0 : i32
    %c0_i32_1 = arith.constant 0 : i32
    %c0_i32_2 = arith.constant 0 : i32
    return %c0_i32, %c0_i32_0, %c0_i32_1 : i32, i32, i32
  }
  func.func @transform_2(%arg0: i32) -> (i32, i32, i32) {
    %c0_i32 = arith.constant 0 : i32
    %c0_i32_0 = arith.constant 0 : i32
    %c0_i32_1 = arith.constant 0 : i32
    %c0_i32_2 = arith.constant 0 : i32
    return %c0_i32, %c0_i32_0, %c0_i32_1 : i32, i32, i32
  }
  func.func @transform_3(%arg0: i32) -> (i32, i32) {
    %c0_i32 = arith.constant 0 : i32
    %c0_i32_0 = arith.constant 0 : i32
    %c0_i32_1 = arith.constant 0 : i32
    return %c0_i32, %c0_i32_0 : i32, i32
  }
  func.func @transform_4(%arg0: i32) -> (i32, i32) {
    %c0_i32 = arith.constant 0 : i32
    %c0_i32_0 = arith.constant 0 : i32
    %c0_i32_1 = arith.constant 0 : i32
    return %c0_i32, %c0_i32_0 : i32, i32
  }
  func.func @transform_5(%arg0: i32) -> (i32, i32, i32, i32) {
    %c0_i32 = arith.constant 0 : i32
    %c0_i32_0 = arith.constant 0 : i32
    %c0_i32_1 = arith.constant 0 : i32
    %c0_i32_2 = arith.constant 0 : i32
    return %arg0, %c0_i32, %c0_i32_0, %c0_i32_1 : i32, i32, i32, i32
  }
}

</mosaic_0001>

<llo_original>
// kernel: basic_block_forward.1
$region0: #{basic_block_forward.1}
  #allocation0 [shape = 'u32[]', space=smem, size = 0x4, offset = 0x4, fixed_abs, tag = 'smem constant byte address 0x4 - core index']
  #allocation1 [shape = 'u32[144,128]{1,0:T(1,128)}', space=vmem, size = 0x12000, scoped, tag = 'internal scratch']
  #allocation2 [shape = 'bf16[18,18,128]{2,1,0:T(8,128)(2,1)}', space=vmem, size = 0x1b000, scoped, tag = 'scratch operand']
  #allocation3 [shape = 'bf16[18,18,128]{2,1,0:T(8,128)(2,1)}', space=vmem, size = 0x1b000, scoped, tag = 'scratch operand']
  %s0 = inlined_call_operand.vmem [shape: bf16[2,16,16,128], index: 0, kind: input, shape index: {}]
  %s1 = inlined_call_operand.hbm [shape: bf16[3,384,128], index: 1, kind: input, shape index: {}]
  %s2 = inlined_call_operand.vmem [shape: bf16[3,384,128], index: 2, kind: input, shape index: {}]
  %s3 = inlined_call_operand.vmem [shape: f32[1,128], index: 3, kind: input, shape index: {}]
  %s4 = inlined_call_operand.vmem [shape: f32[1,128], index: 4, kind: input, shape index: {}]
  %s5 = inlined_call_operand.vmem [shape: bf16[2,16,16,128], index: 5, kind: output, shape index: {}]
  %s6 = sld [smem:[#allocation0]]
  $region71: #{basic_block_forward.1} parent=0
    _
  %s8 = ssub.s32 1, %s6
  %s9 = scalar_select 0, %s8, %s6
  $region1: #{basic_block_forward.1} parent=0
    #allocation4 [shape = 'u8[294912]{0}', space=vmem, size = 0x48000, scoped, tag = 'input window, operand 1, single buffered']
    #allocation5 [shape = 's32[2]{0}', space=sflag, size = 0x8, scoped, tag = 'scoped memory for basic_block_forward.1']
    %10 = vsyncpa [#allocation5], 0
    loop: start=0, step=1, limit=4
    $region2: #{basic_block_forward.1} parent=1 // loop_pre_header
      _
    $region3: #{basic_block_forward.1} parent=1 // loop_header
      %s12 = sphi 0, %s16
      %p13 = scmp.ge.s32.totalorder %s12, 4
      %s22 = sphi 0, %s24
      %s25 = sphi 0, %s22
      %s26 = sphi 0, %s25
      %s42 = sphi 0, %s26
      %s46 = sphi 0, %s46
      %s48 = sphi 0, %s46
      %s49 = sphi 0, %s48
      %s63 = sphi 0, %s49
      %s67 = sphi 0, %s67
      %s69 = sphi 0, %s67
      %s70 = sphi 0, %s69
      %s84 = sphi 0, %s70
      %s88 = sphi 0, %s88
      %s90 = sphi 0, %s88
      %s91 = sphi 0, %s90
      %s105 = sphi 0, %s91
      %s109 = sphi 0, %s109
      %s111 = sphi 0, %s109
      %s112 = sphi 0, %s111
      %s126 = sphi 0, %s112
      %s132 = sphi 0, %s134
      %s135 = sphi 0, %s132
      %s136 = sphi 0, %s135
      %s152 = sphi 0, %s136
    $region4: #{basic_block_forward.1} parent=1 // loop_header_branch
      %15 = sbr.rel (%p13) target = $region8
    $region5: #{basic_block_forward.1} parent=1 // loop_body
      %s17 = ssub.s32 %s12, 1
      %s18 = ssub.s32 %s12, 2
      %s19 = sadd.s32 %s12, 1
      %s20 = ssub.s32 %s12, %s19
      %p21 = scmp.eq.s32.totalorder %s20, 0
      %s23 = sadd.s32 %s22, 1
      %s24 = scalar_select %p21, %s22, %s23
      %p27 = pneg %p21
      %p28 = scmp.eq.s32.totalorder %s12, 1
      %p29 = por %p27, %p28
      %p30 = scmp.ne.s32.totalorder %s22, %s25
      %p31 = scmp.eq.s32.totalorder %s12, 0
      %p32 = por %p30, %p31
      %p33 = scmp.ne.s32.totalorder %s22, %s25
      %p34 = scmp.eq.s32.totalorder %s17, 1
      %p35 = por %p33, %p34
      %p36 = scmp.ne.s32.totalorder %s25, %s26
      %p37 = scmp.eq.s32.totalorder %s17, 0
      %p38 = por %p36, %p37
      %p39 = scmp.ne.s32.totalorder %s25, %s26
      %p40 = scmp.eq.s32.totalorder %s18, 1
      %p41 = por %p39, %p40
      %p43 = scmp.ne.s32.totalorder %s26, %s42
      %p44 = scmp.eq.s32.totalorder %s18, 0
      %p45 = por %p43, %p44
      %s47 = sadd.s32 %s46, 1
      %p50 = scmp.eq.s32.totalorder %s12, 1
      %p51 = scmp.ne.s32.totalorder %s46, %s48
      %p52 = scmp.eq.s32.totalorder %s12, 0
      %p53 = por %p51, %p52
      %p54 = scmp.ne.s32.totalorder %s46, %s48
      %p55 = scmp.eq.s32.totalorder %s17, 1
      %p56 = por %p54, %p55
      %p57 = scmp.ne.s32.totalorder %s48, %s49
      %p58 = scmp.eq.s32.totalorder %s17, 0
      %p59 = por %p57, %p58
      %p60 = scmp.ne.s32.totalorder %s48, %s49
      %p61 = scmp.eq.s32.totalorder %s18, 1
      %p62 = por %p60, %p61
      %p64 = scmp.ne.s32.totalorder %s49, %s63
      %p65 = scmp.eq.s32.totalorder %s18, 0
      %p66 = por %p64, %p65
      %s68 = sadd.s32 %s67, 1
      %p71 = scmp.eq.s32.totalorder %s12, 1
      %p72 = scmp.ne.s32.totalorder %s67, %s69
      %p73 = scmp.eq.s32.totalorder %s12, 0
      %p74 = por %p72, %p73
      %p75 = scmp.ne.s32.totalorder %s67, %s69
      %p76 = scmp.eq.s32.totalorder %s17, 1
      %p77 = por %p75, %p76
      %p78 = scmp.ne.s32.totalorder %s69, %s70
      %p79 = scmp.eq.s32.totalorder %s17, 0
      %p80 = por %p78, %p79
      %p81 = scmp.ne.s32.totalorder %s69, %s70
      %p82 = scmp.eq.s32.totalorder %s18, 1
      %p83 = por %p81, %p82
      %p85 = scmp.ne.s32.totalorder %s70, %s84
      %p86 = scmp.eq.s32.totalorder %s18, 0
      %p87 = por %p85, %p86
      %s89 = sadd.s32 %s88, 1
      %p92 = scmp.eq.s32.totalorder %s12, 1
      %p93 = scmp.ne.s32.totalorder %s88, %s90
      %p94 = scmp.eq.s32.totalorder %s12, 0
      %p95 = por %p93, %p94
      %p96 = scmp.ne.s32.totalorder %s88, %s90
      %p97 = scmp.eq.s32.totalorder %s17, 1
      %p98 = por %p96, %p97
      %p99 = scmp.ne.s32.totalorder %s90, %s91
      %p100 = scmp.eq.s32.totalorder %s17, 0
      %p101 = por %p99, %p100
      %p102 = scmp.ne.s32.totalorder %s90, %s91
      %p103 = scmp.eq.s32.totalorder %s18, 1
      %p104 = por %p102, %p103
      %p106 = scmp.ne.s32.totalorder %s91, %s105
      %p107 = scmp.eq.s32.totalorder %s18, 0
      %p108 = por %p106, %p107
      %s110 = sadd.s32 %s109, 1
      %p113 = scmp.eq.s32.totalorder %s12, 1
      %p114 = scmp.ne.s32.totalorder %s109, %s111
      %p115 = scmp.eq.s32.totalorder %s12, 0
      %p116 = por %p114, %p115
      %p117 = scmp.ne.s32.totalorder %s109, %s111
      %p118 = scmp.eq.s32.totalorder %s17, 1
      %p119 = por %p117, %p118
      %p120 = scmp.ne.s32.totalorder %s111, %s112
      %p121 = scmp.eq.s32.totalorder %s17, 0
      %p122 = por %p120, %p121
      %p123 = scmp.ne.s32.totalorder %s111, %s112
      %p124 = scmp.eq.s32.totalorder %s18, 1
      %p125 = por %p123, %p124
      %p127 = scmp.ne.s32.totalorder %s112, %s126
      %p128 = scmp.eq.s32.totalorder %s18, 0
      %p129 = por %p127, %p128
      %s130 = ssub.s32 %s12, %s19
      %p131 = scmp.eq.s32.totalorder %s130, 0
      %s133 = sadd.s32 %s132, 1
      %s134 = scalar_select %p131, %s132, %s133
      %p137 = pneg %p131
      %p138 = scmp.eq.s32.totalorder %s12, 1
      %p139 = por %p137, %p138
      %p140 = scmp.ne.s32.totalorder %s132, %s135
      %p141 = scmp.eq.s32.totalorder %s12, 0
      %p142 = por %p140, %p141
      %p143 = scmp.ne.s32.totalorder %s132, %s135
      %p144 = scmp.eq.s32.totalorder %s17, 1
      %p145 = por %p143, %p144
      %p146 = scmp.ne.s32.totalorder %s135, %s136
      %p147 = scmp.eq.s32.totalorder %s17, 0
      %p148 = por %p146, %p147
      %p149 = scmp.ne.s32.totalorder %s135, %s136
      %p150 = scmp.eq.s32.totalorder %s18, 1
      %p151 = por %p149, %p150
      %p153 = scmp.ne.s32.totalorder %s136, %s152
      %p154 = scmp.eq.s32.totalorder %s18, 0
      %p155 = por %p153, %p154
      %p156 = scmp.le.s32.totalorder 1, %s12
      %p157 = scmp.lt.s32.totalorder %s12, 3
      %p158 = pnand %p156, %p157
      %p159 = pneg %p158
      // Predicated region
      $region9: #{basic_block_forward.1} parent=5 // pred_check
        _
      $region10: #{basic_block_forward.1} parent=5 // pred_check_branch
        %161 = sbr.rel (%p158) target = $region12
      $region11: #{basic_block_forward.1} parent=5 // pred_region
        %s162 = ssub.s32 %s12, 1
        // Predicated region
        $region13: #{basic_block_forward.1} parent=11 // pred_check
          %p163 = pneg %p59
        $region14: #{basic_block_forward.1} parent=11 // pred_check_branch
          %165 = sbr.rel (%p163) target = $region16
        $region15: #{basic_block_forward.1} parent=11 // pred_region
          %s167 = ssub.s32 9216, 9216
          %168 = vsyncadd [#allocation5], %s167
          %s169 = sshll.u32 [#allocation4], 4
          %s170 = int_to_ptr.vmem [resolvable:$true] %s169
          %175 = dma.hbm_to_vmem [thread:$0]  %s1, 9216, %s170, [#allocation5], 64, 64, 4
        $region16: #{basic_block_forward.1} parent=11 // pred_fallthru
          _
        // Predicated region
        $region17: #{basic_block_forward.1} parent=11 // pred_check
          %p176 = pneg %p80
        $region18: #{basic_block_forward.1} parent=11 // pred_check_branch
          %178 = sbr.rel (%p176) target = $region20
        $region19: #{basic_block_forward.1} parent=11 // pred_region
          _
        $region20: #{basic_block_forward.1} parent=11 // pred_fallthru
          _
        // Predicated region
        $region21: #{basic_block_forward.1} parent=11 // pred_check
          %p179 = pneg %p101
        $region22: #{basic_block_forward.1} parent=11 // pred_check_branch
          %181 = sbr.rel (%p179) target = $region24
        $region23: #{basic_block_forward.1} parent=11 // pred_region
          _
        $region24: #{basic_block_forward.1} parent=11 // pred_fallthru
          _
        // Predicated region
        $region25: #{basic_block_forward.1} parent=11 // pred_check
          %p182 = pneg %p122
        $region26: #{basic_block_forward.1} parent=11 // pred_check_branch
          %184 = sbr.rel (%p182) target = $region28
        $region27: #{basic_block_forward.1} parent=11 // pred_region
          _
        $region28: #{basic_block_forward.1} parent=11 // pred_fallthru
          _
      $region12: #{basic_block_forward.1} parent=5 // pred_fallthru
        _
      %p185 = scmp.lt.s32.totalorder %s12, 2
      // Predicated region
      $region29: #{basic_block_forward.1} parent=5 // pred_check
        %p186 = pneg %p185
      $region30: #{basic_block_forward.1} parent=5 // pred_check_branch
        %188 = sbr.rel (%p186) target = $region32
      $region31: #{basic_block_forward.1} parent=5 // pred_region
        // Predicated region
        $region33: #{basic_block_forward.1} parent=31 // pred_check
          %p189 = pneg %p32
        $region34: #{basic_block_forward.1} parent=31 // pred_check_branch
          %191 = sbr.rel (%p189) target = $region36
        $region35: #{basic_block_forward.1} parent=31 // pred_region
          %p192 = scmp.lt.s32.totalorder %s12, 1
          %s193 = scalar_select %p192, %s12, 1
          %s194 = smul.addr %s193, 32
          %s195 = smul.addr %s194, 4
          %s196 = scalar_lea.vmem %s0, %s195
        $region36: #{basic_block_forward.1} parent=31 // pred_fallthru
          _
      $region32: #{basic_block_forward.1} parent=5 // pred_fallthru
        _
      %p197 = scmp.le.s32.totalorder 1, %s12
      %p198 = scmp.lt.s32.totalorder %s12, 3
      %p199 = pnand %p197, %p198
      %p200 = pneg %p199
      // Predicated region
      $region37: #{basic_block_forward.1} parent=5 // pred_check
        _
      $region38: #{basic_block_forward.1} parent=5 // pred_check_branch
        %202 = sbr.rel (%p199) target = $region40
      $region39: #{basic_block_forward.1} parent=5 // pred_region
        %s203 = ssub.s32 %s12, 1
        // Predicated region
        $region41: #{basic_block_forward.1} parent=39 // pred_check
          %p204 = pneg %p59
        $region42: #{basic_block_forward.1} parent=39 // pred_check_branch
          %206 = sbr.rel (%p204) target = $region44
        $region43: #{basic_block_forward.1} parent=39 // pred_region
          %207 = dma.done [#allocation5], 9216
        $region44: #{basic_block_forward.1} parent=39 // pred_fallthru
          _
        %p208 = scmp.lt.s32.totalorder %s17, 1
        %s209 = scalar_select %p208, %s17, 1
        %s210 = smul.addr %s209, 32
        %s211 = smul.addr %s210, 4
        %s212 = scalar_lea.vmem %s0, %s211
        %p213 = pneg %p38
        %p214 = pneg %p35
        %p215 = pneg %p59
        %p216 = pneg %p56
        %p217 = pneg %p80
        %p218 = pneg %p77
        %p219 = pneg %p101
        %p220 = pneg %p98
        %p221 = pneg %p122
        %p222 = pneg %p119
        %p223 = pneg %p148
        %p224 = pneg %p145
        %p225 = scmp.lt.s32.totalorder %s17, 1
        %s226 = scalar_select %p225, %s17, 1
        %s227 = smul.addr %s226, 32
        %s228 = smul.addr %s227, 4
        %s229 = scalar_lea.vmem %s5, %s228
        %p230 = scmp.lt.s32.totalorder %s17, 1
        %s231 = scalar_select %p230, %s17, 1
        %s232 = smul.addr %s231, 32
        %s233 = smul.addr %s232, 4
        %s234 = scalar_lea.vmem %s0, %s233
        %p235 = scmp.lt.s32.totalorder %s17, 1
        %s236 = scalar_select %p235, %s17, 1
        %s237 = smul.addr %s236, 32
        %s238 = smul.addr %s237, 4
        %s239 = scalar_lea.vmem %s5, %s238
        %241 = vst [vmem:[#allocation2] sm:$0xf] 0
        %242 = vst [vmem:[#allocation2 + $0x4] sm:$0xf] 0
        %243 = vst [vmem:[#allocation2 + $0x8] sm:$0x1] 0
        %s244 = scalar_lea.vmem [#allocation2], 204
        %245 = vst [vmem:[%s244] sm:$0xf] 0
        %246 = vst [vmem:[%s244 + $0x4] sm:$0xf] 0
        %247 = vst [vmem:[%s244 + $0x8] sm:$0x1] 0
        %s248 = scalar_lea.vmem [#allocation2], 12
        %vm249 = vcmask 1040384
        %vm250 = vsmask.f32 256
        %vm251 = vmand %vm249, %vm250
        %v252 = vld [vmem:[%s248] sm:$0x1]
        %v253 = vsel %vm251, 0, %v252
        %254 = vst [vmem:[%s248] sm:$0x1] %v253
        %v255 = vld [vmem:[%s248 + $0xc] sm:$0x1]
        %v256 = vsel %vm251, 0, %v255
        %257 = vst [vmem:[%s248 + $0xc] sm:$0x1] %v256
        %v258 = vld [vmem:[%s248 + $0x18] sm:$0x1]
        %v259 = vsel %vm251, 0, %v258
        %260 = vst [vmem:[%s248 + $0x18] sm:$0x1] %v259
        %v261 = vld [vmem:[%s248 + $0x24] sm:$0x1]
        %v262 = vsel %vm251, 0, %v261
        %263 = vst [vmem:[%s248 + $0x24] sm:$0x1] %v262
        %v264 = vld [vmem:[%s248 + $0x30] sm:$0x1]
        %v265 = vsel %vm251, 0, %v264
        %266 = vst [vmem:[%s248 + $0x30] sm:$0x1] %v265
        %v267 = vld [vmem:[%s248 + $0x3c] sm:$0x1]
        %v268 = vsel %vm251, 0, %v267
        %269 = vst [vmem:[%s248 + $0x3c] sm:$0x1] %v268
        %v270 = vld [vmem:[%s248 + $0x48] sm:$0x1]
        %v271 = vsel %vm251, 0, %v270
        %272 = vst [vmem:[%s248 + $0x48] sm:$0x1] %v271
        %v273 = vld [vmem:[%s248 + $0x54] sm:$0x1]
        %v274 = vsel %vm251, 0, %v273
        %275 = vst [vmem:[%s248 + $0x54] sm:$0x1] %v274
        %v276 = vld [vmem:[%s248 + $0x60] sm:$0x1]
        %v277 = vsel %vm251, 0, %v276
        %278 = vst [vmem:[%s248 + $0x60] sm:$0x1] %v277
        %v279 = vld [vmem:[%s248 + $0x6c] sm:$0x1]
        %v280 = vsel %vm251, 0, %v279
        %281 = vst [vmem:[%s248 + $0x6c] sm:$0x1] %v280
        %v282 = vld [vmem:[%s248 + $0x78] sm:$0x1]
        %v283 = vsel %vm251, 0, %v282
        %284 = vst [vmem:[%s248 + $0x78] sm:$0x1] %v283
        %v285 = vld [vmem:[%s248 + $0x84] sm:$0x1]
        %v286 = vsel %vm251, 0, %v285
        %287 = vst [vmem:[%s248 + $0x84] sm:$0x1] %v286
        %v288 = vld [vmem:[%s248 + $0x90] sm:$0x1]
        %v289 = vsel %vm251, 0, %v288
        %290 = vst [vmem:[%s248 + $0x90] sm:$0x1] %v289
        %v291 = vld [vmem:[%s248 + $0x9c] sm:$0x1]
        %v292 = vsel %vm251, 0, %v291
        %293 = vst [vmem:[%s248 + $0x9c] sm:$0x1] %v292
        %v294 = vld [vmem:[%s248 + $0xa8] sm:$0x1]
        %v295 = vsel %vm251, 0, %v294
        %296 = vst [vmem:[%s248 + $0xa8] sm:$0x1] %v295
        %v297 = vld [vmem:[%s248 + $0xb4] sm:$0x1]
        %v298 = vsel %vm251, 0, %v297
        %299 = vst [vmem:[%s248 + $0xb4] sm:$0x1] %v298
        %vm300 = vsmask.f32 7938
        %vm301 = vmand %vm249, %vm300
        %v302 = vld [vmem:[%s248 + $0x8] sm:$0x1]
        %v303 = vsel %vm301, 0, %v302
        %304 = vst [vmem:[%s248 + $0x8] sm:$0x1] %v303
        %v305 = vld [vmem:[%s248 + $0x14] sm:$0x1]
        %v306 = vsel %vm301, 0, %v305
        %307 = vst [vmem:[%s248 + $0x14] sm:$0x1] %v306
        %v308 = vld [vmem:[%s248 + $0x20] sm:$0x1]
        %v309 = vsel %vm301, 0, %v308
        %310 = vst [vmem:[%s248 + $0x20] sm:$0x1] %v309
        %v311 = vld [vmem:[%s248 + $0x2c] sm:$0x1]
        %v312 = vsel %vm301, 0, %v311
        %313 = vst [vmem:[%s248 + $0x2c] sm:$0x1] %v312
        %v314 = vld [vmem:[%s248 + $0x38] sm:$0x1]
        %v315 = vsel %vm301, 0, %v314
        %316 = vst [vmem:[%s248 + $0x38] sm:$0x1] %v315
        %v317 = vld [vmem:[%s248 + $0x44] sm:$0x1]
        %v318 = vsel %vm301, 0, %v317
        %319 = vst [vmem:[%s248 + $0x44] sm:$0x1] %v318
        %v320 = vld [vmem:[%s248 + $0x50] sm:$0x1]
        %v321 = vsel %vm301, 0, %v320
        %322 = vst [vmem:[%s248 + $0x50] sm:$0x1] %v321
        %v323 = vld [vmem:[%s248 + $0x5c] sm:$0x1]
        %v324 = vsel %vm301, 0, %v323
        %325 = vst [vmem:[%s248 + $0x5c] sm:$0x1] %v324
        %v326 = vld [vmem:[%s248 + $0x68] sm:$0x1]
        %v327 = vsel %vm301, 0, %v326
        %328 = vst [vmem:[%s248 + $0x68] sm:$0x1] %v327
        %v329 = vld [vmem:[%s248 + $0x74] sm:$0x1]
        %v330 = vsel %vm301, 0, %v329
        %331 = vst [vmem:[%s248 + $0x74] sm:$0x1] %v330
        %v332 = vld [vmem:[%s248 + $0x80] sm:$0x1]
        %v333 = vsel %vm301, 0, %v332
        %334 = vst [vmem:[%s248 + $0x80] sm:$0x1] %v333
        %v335 = vld [vmem:[%s248 + $0x8c] sm:$0x1]
        %v336 = vsel %vm301, 0, %v335
        %337 = vst [vmem:[%s248 + $0x8c] sm:$0x1] %v336
        %v338 = vld [vmem:[%s248 + $0x98] sm:$0x1]
        %v339 = vsel %vm301, 0, %v338
        %340 = vst [vmem:[%s248 + $0x98] sm:$0x1] %v339
        %v341 = vld [vmem:[%s248 + $0xa4] sm:$0x1]
        %v342 = vsel %vm301, 0, %v341
        %343 = vst [vmem:[%s248 + $0xa4] sm:$0x1] %v342
        %v344 = vld [vmem:[%s248 + $0xb0] sm:$0x1]
        %v345 = vsel %vm301, 0, %v344
        %346 = vst [vmem:[%s248 + $0xb0] sm:$0x1] %v345
        %v347 = vld [vmem:[%s248 + $0xbc] sm:$0x1]
        %v348 = vsel %vm301, 0, %v347
        %349 = vst [vmem:[%s248 + $0xbc] sm:$0x1] %v348
        %350 = vst [vmem:[#allocation3] sm:$0xf] 0
        %351 = vst [vmem:[#allocation3 + $0x4] sm:$0xf] 0
        %352 = vst [vmem:[#allocation3 + $0x8] sm:$0x1] 0
        %s353 = scalar_lea.vmem [#allocation3], 204
        %354 = vst [vmem:[%s353] sm:$0xf] 0
        %355 = vst [vmem:[%s353 + $0x4] sm:$0xf] 0
        %356 = vst [vmem:[%s353 + $0x8] sm:$0x1] 0
        %s357 = scalar_lea.vmem [#allocation3], 12
        %v358 = vld [vmem:[%s357] sm:$0x1]
        %v359 = vsel %vm251, 0, %v358
        %360 = vst [vmem:[%s357] sm:$0x1] %v359
        %v361 = vld [vmem:[%s357 + $0xc] sm:$0x1]
        %v362 = vsel %vm251, 0, %v361
        %363 = vst [vmem:[%s357 + $0xc] sm:$0x1] %v362
        %v364 = vld [vmem:[%s357 + $0x18] sm:$0x1]
        %v365 = vsel %vm251, 0, %v364
        %366 = vst [vmem:[%s357 + $0x18] sm:$0x1] %v365
        %v367 = vld [vmem:[%s357 + $0x24] sm:$0x1]
        %v368 = vsel %vm251, 0, %v367
        %369 = vst [vmem:[%s357 + $0x24] sm:$0x1] %v368
        %v370 = vld [vmem:[%s357 + $0x30] sm:$0x1]
        %v371 = vsel %vm251, 0, %v370
        %372 = vst [vmem:[%s357 + $0x30] sm:$0x1] %v371
        %v373 = vld [vmem:[%s357 + $0x3c] sm:$0x1]
        %v374 = vsel %vm251, 0, %v373
        %375 = vst [vmem:[%s357 + $0x3c] sm:$0x1] %v374
        %v376 = vld [vmem:[%s357 + $0x48] sm:$0x1]
        %v377 = vsel %vm251, 0, %v376
        %378 = vst [vmem:[%s357 + $0x48] sm:$0x1] %v377
        %v379 = vld [vmem:[%s357 + $0x54] sm:$0x1]
        %v380 = vsel %vm251, 0, %v379
        %381 = vst [vmem:[%s357 + $0x54] sm:$0x1] %v380
        %v382 = vld [vmem:[%s357 + $0x60] sm:$0x1]
        %v383 = vsel %vm251, 0, %v382
        %384 = vst [vmem:[%s357 + $0x60] sm:$0x1] %v383
        %v385 = vld [vmem:[%s357 + $0x6c] sm:$0x1]
        %v386 = vsel %vm251, 0, %v385
        %387 = vst [vmem:[%s357 + $0x6c] sm:$0x1] %v386
        %v388 = vld [vmem:[%s357 + $0x78] sm:$0x1]
        %v389 = vsel %vm251, 0, %v388
        %390 = vst [vmem:[%s357 + $0x78] sm:$0x1] %v389
        %v391 = vld [vmem:[%s357 + $0x84] sm:$0x1]
        %v392 = vsel %vm251, 0, %v391
        %393 = vst [vmem:[%s357 + $0x84] sm:$0x1] %v392
        %v394 = vld [vmem:[%s357 + $0x90] sm:$0x1]
        %v395 = vsel %vm251, 0, %v394
        %396 = vst [vmem:[%s357 + $0x90] sm:$0x1] %v395
        %v397 = vld [vmem:[%s357 + $0x9c] sm:$0x1]
        %v398 = vsel %vm251, 0, %v397
        %399 = vst [vmem:[%s357 + $0x9c] sm:$0x1] %v398
        %v400 = vld [vmem:[%s357 + $0xa8] sm:$0x1]
        %v401 = vsel %vm251, 0, %v400
        %402 = vst [vmem:[%s357 + $0xa8] sm:$0x1] %v401
        %v403 = vld [vmem:[%s357 + $0xb4] sm:$0x1]
        %v404 = vsel %vm251, 0, %v403
        %405 = vst [vmem:[%s357 + $0xb4] sm:$0x1] %v404
        %v406 = vld [vmem:[%s357 + $0x8] sm:$0x1]
        %v407 = vsel %vm301, 0, %v406
        %408 = vst [vmem:[%s357 + $0x8] sm:$0x1] %v407
        %v409 = vld [vmem:[%s357 + $0x14] sm:$0x1]
        %v410 = vsel %vm301, 0, %v409
        %411 = vst [vmem:[%s357 + $0x14] sm:$0x1] %v410
        %v412 = vld [vmem:[%s357 + $0x20] sm:$0x1]
        %v413 = vsel %vm301, 0, %v412
        %414 = vst [vmem:[%s357 + $0x20] sm:$0x1] %v413
        %v415 = vld [vmem:[%s357 + $0x2c] sm:$0x1]
        %v416 = vsel %vm301, 0, %v415
        %417 = vst [vmem:[%s357 + $0x2c] sm:$0x1] %v416
        %v418 = vld [vmem:[%s357 + $0x38] sm:$0x1]
        %v419 = vsel %vm301, 0, %v418
        %420 = vst [vmem:[%s357 + $0x38] sm:$0x1] %v419
        %v421 = vld [vmem:[%s357 + $0x44] sm:$0x1]
        %v422 = vsel %vm301, 0, %v421
        %423 = vst [vmem:[%s357 + $0x44] sm:$0x1] %v422
        %v424 = vld [vmem:[%s357 + $0x50] sm:$0x1]
        %v425 = vsel %vm301, 0, %v424
        %426 = vst [vmem:[%s357 + $0x50] sm:$0x1] %v425
        %v427 = vld [vmem:[%s357 + $0x5c] sm:$0x1]
        %v428 = vsel %vm301, 0, %v427
        %429 = vst [vmem:[%s357 + $0x5c] sm:$0x1] %v428
        %v430 = vld [vmem:[%s357 + $0x68] sm:$0x1]
        %v431 = vsel %vm301, 0, %v430
        %432 = vst [vmem:[%s357 + $0x68] sm:$0x1] %v431
        %v433 = vld [vmem:[%s357 + $0x74] sm:$0x1]
        %v434 = vsel %vm301, 0, %v433
        %435 = vst [vmem:[%s357 + $0x74] sm:$0x1] %v434
        %v436 = vld [vmem:[%s357 + $0x80] sm:$0x1]
        %v437 = vsel %vm301, 0, %v436
        %438 = vst [vmem:[%s357 + $0x80] sm:$0x1] %v437
        %v439 = vld [vmem:[%s357 + $0x8c] sm:$0x1]
        %v440 = vsel %vm301, 0, %v439
        %441 = vst [vmem:[%s357 + $0x8c] sm:$0x1] %v440
        %v442 = vld [vmem:[%s357 + $0x98] sm:$0x1]
        %v443 = vsel %vm301, 0, %v442
        %444 = vst [vmem:[%s357 + $0x98] sm:$0x1] %v443
        %v445 = vld [vmem:[%s357 + $0xa4] sm:$0x1]
        %v446 = vsel %vm301, 0, %v445
        %447 = vst [vmem:[%s357 + $0xa4] sm:$0x1] %v446
        %v448 = vld [vmem:[%s357 + $0xb0] sm:$0x1]
        %v449 = vsel %vm301, 0, %v448
        %450 = vst [vmem:[%s357 + $0xb0] sm:$0x1] %v449
        %v451 = vld [vmem:[%s357 + $0xbc] sm:$0x1]
        %v452 = vsel %vm301, 0, %v451
        %453 = vst [vmem:[%s357 + $0xbc] sm:$0x1] %v452
        %v454 = vld [vmem:[%s234] sm:$0xf]
        %v455 = vld [vmem:[%s234 + $0x4] sm:$0xf]
        %v456 = vld [vmem:[%s234 + $0x8] sm:$0xf]
        %v457 = vld [vmem:[%s234 + $0xc] sm:$0xf]
        %v458 = vld [vmem:[%s234 + $0x10] sm:$0xf]
        %v459 = vld [vmem:[%s234 + $0x14] sm:$0xf]
        %v460 = vld [vmem:[%s234 + $0x18] sm:$0xf]
        %v461 = vld [vmem:[%s234 + $0x1c] sm:$0xf]
        %v462 = vld [vmem:[%s234 + $0x20] sm:$0xf]
        %v463 = vld [vmem:[%s234 + $0x24] sm:$0xf]
        %v464 = vld [vmem:[%s234 + $0x28] sm:$0xf]
        %v465 = vld [vmem:[%s234 + $0x2c] sm:$0xf]
        %v466 = vld [vmem:[%s234 + $0x30] sm:$0xf]
        %v467 = vld [vmem:[%s234 + $0x34] sm:$0xf]
        %v468 = vld [vmem:[%s234 + $0x38] sm:$0xf]
        %v469 = vld [vmem:[%s234 + $0x3c] sm:$0xf]
        %v470 = vld [vmem:[%s234 + $0x40] sm:$0xf]
        %v471 = vld [vmem:[%s234 + $0x44] sm:$0xf]
        %v472 = vld [vmem:[%s234 + $0x48] sm:$0xf]
        %v473 = vld [vmem:[%s234 + $0x4c] sm:$0xf]
        %v474 = vld [vmem:[%s234 + $0x50] sm:$0xf]
        %v475 = vld [vmem:[%s234 + $0x54] sm:$0xf]
        %v476 = vld [vmem:[%s234 + $0x58] sm:$0xf]
        %v477 = vld [vmem:[%s234 + $0x5c] sm:$0xf]
        %v478 = vld [vmem:[%s234 + $0x60] sm:$0xf]
        %v479 = vld [vmem:[%s234 + $0x64] sm:$0xf]
        %v480 = vld [vmem:[%s234 + $0x68] sm:$0xf]
        %v481 = vld [vmem:[%s234 + $0x6c] sm:$0xf]
        %v482 = vld [vmem:[%s234 + $0x70] sm:$0xf]
        %v483 = vld [vmem:[%s234 + $0x74] sm:$0xf]
        %v484 = vld [vmem:[%s234 + $0x78] sm:$0xf]
        %v485 = vld [vmem:[%s234 + $0x7c] sm:$0xf]
        %vm486 = vsmask.f32 4368
        %vm487 = vmor %vm250, %vm486
        %v489 = vshrl.u32 %v454, 16
        %v491 = vrot.slane %v489, 7
        %v492 = vshll.u32 %v454, 16
        %v494 = vor.u32 %v491, %v492
        %v495 = vrot.slane %v491, 4
        %v497 = vshrl.u32 %v455, 16
        %v499 = vrot.slane %v497, 7
        %v500 = vshll.u32 %v455, 16
        %v502 = vor.u32 %v499, %v500
        %v503 = vsel %vm487, %v495, %v502
        %v504 = vrot.slane %v499, 4
        %v506 = vshrl.u32 %v456, 16
        %v508 = vrot.slane %v506, 7
        %v509 = vshll.u32 %v456, 16
        %v511 = vor.u32 %v508, %v509
        %v512 = vrot.slane %v508, 4
        %v514 = vshrl.u32 %v457, 16
        %v516 = vrot.slane %v514, 7
        %v517 = vshll.u32 %v457, 16
        %v519 = vor.u32 %v516, %v517
        %v520 = vsel %vm487, %v512, %v519
        %v521 = vrot.slane %v516, 4
        %v523 = vshrl.u32 %v458, 16
        %v525 = vrot.slane %v523, 7
        %v526 = vshll.u32 %v458, 16
        %v528 = vor.u32 %v525, %v526
        %v529 = vrot.slane %v525, 4
        %v531 = vshrl.u32 %v459, 16
        %v533 = vrot.slane %v531, 7
        %v534 = vshll.u32 %v459, 16
        %v536 = vor.u32 %v533, %v534
        %v537 = vsel %vm487, %v529, %v536
        %v538 = vrot.slane %v533, 4
        %v540 = vshrl.u32 %v460, 16
        %v542 = vrot.slane %v540, 7
        %v543 = vshll.u32 %v460, 16
        %v545 = vor.u32 %v542, %v543
        %v546 = vrot.slane %v542, 4
        %v548 = vshrl.u32 %v461, 16
        %v550 = vrot.slane %v548, 7
        %v551 = vshll.u32 %v461, 16
        %v553 = vor.u32 %v550, %v551
        %v554 = vsel %vm487, %v546, %v553
        %v555 = vrot.slane %v550, 4
        %v557 = vshrl.u32 %v462, 16
        %v559 = vrot.slane %v557, 7
        %v560 = vshll.u32 %v462, 16
        %v562 = vor.u32 %v559, %v560
        %v563 = vrot.slane %v559, 4
        %v565 = vshrl.u32 %v463, 16
        %v567 = vrot.slane %v565, 7
        %v568 = vshll.u32 %v463, 16
        %v570 = vor.u32 %v567, %v568
        %v571 = vsel %vm487, %v563, %v570
        %v572 = vrot.slane %v567, 4
        %v574 = vshrl.u32 %v464, 16
        %v576 = vrot.slane %v574, 7
        %v577 = vshll.u32 %v464, 16
        %v579 = vor.u32 %v576, %v577
        %v580 = vrot.slane %v576, 4
        %v582 = vshrl.u32 %v465, 16
        %v584 = vrot.slane %v582, 7
        %v585 = vshll.u32 %v465, 16
        %v587 = vor.u32 %v584, %v585
        %v588 = vsel %vm487, %v580, %v587
        %v589 = vrot.slane %v584, 4
        %v591 = vshrl.u32 %v466, 16
        %v593 = vrot.slane %v591, 7
        %v594 = vshll.u32 %v466, 16
        %v596 = vor.u32 %v593, %v594
        %v597 = vrot.slane %v593, 4
        %v599 = vshrl.u32 %v467, 16
        %v601 = vrot.slane %v599, 7
        %v602 = vshll.u32 %v467, 16
        %v604 = vor.u32 %v601, %v602
        %v605 = vsel %vm487, %v597, %v604
        %v606 = vrot.slane %v601, 4
        %v608 = vshrl.u32 %v468, 16
        %v610 = vrot.slane %v608, 7
        %v611 = vshll.u32 %v468, 16
        %v613 = vor.u32 %v610, %v611
        %v614 = vrot.slane %v610, 4
        %v616 = vshrl.u32 %v469, 16
        %v618 = vrot.slane %v616, 7
        %v619 = vshll.u32 %v469, 16
        %v621 = vor.u32 %v618, %v619
        %v622 = vsel %vm487, %v614, %v621
        %v623 = vrot.slane %v618, 4
        %v625 = vshrl.u32 %v470, 16
        %v627 = vrot.slane %v625, 7
        %v628 = vshll.u32 %v470, 16
        %v630 = vor.u32 %v627, %v628
        %v631 = vrot.slane %v627, 4
        %v633 = vshrl.u32 %v471, 16
        %v635 = vrot.slane %v633, 7
        %v636 = vshll.u32 %v471, 16
        %v638 = vor.u32 %v635, %v636
        %v639 = vsel %vm487, %v631, %v638
        %v640 = vrot.slane %v635, 4
        %v642 = vshrl.u32 %v472, 16
        %v644 = vrot.slane %v642, 7
        %v645 = vshll.u32 %v472, 16
        %v647 = vor.u32 %v644, %v645
        %v648 = vrot.slane %v644, 4
        %v650 = vshrl.u32 %v473, 16
        %v652 = vrot.slane %v650, 7
        %v653 = vshll.u32 %v473, 16
        %v655 = vor.u32 %v652, %v653
        %v656 = vsel %vm487, %v648, %v655
        %v657 = vrot.slane %v652, 4
        %v659 = vshrl.u32 %v474, 16
        %v661 = vrot.slane %v659, 7
        %v662 = vshll.u32 %v474, 16
        %v664 = vor.u32 %v661, %v662
        %v665 = vrot.slane %v661, 4
        %v667 = vshrl.u32 %v475, 16
        %v669 = vrot.slane %v667, 7
        %v670 = vshll.u32 %v475, 16
        %v672 = vor.u32 %v669, %v670
        %v673 = vsel %vm487, %v665, %v672
        %v674 = vrot.slane %v669, 4
        %v676 = vshrl.u32 %v476, 16
        %v678 = vrot.slane %v676, 7
        %v679 = vshll.u32 %v476, 16
        %v681 = vor.u32 %v678, %v679
        %v682 = vrot.slane %v678, 4
        %v684 = vshrl.u32 %v477, 16
        %v686 = vrot.slane %v684, 7
        %v687 = vshll.u32 %v477, 16
        %v689 = vor.u32 %v686, %v687
        %v690 = vsel %vm487, %v682, %v689
        %v691 = vrot.slane %v686, 4
        %v693 = vshrl.u32 %v478, 16
        %v695 = vrot.slane %v693, 7
        %v696 = vshll.u32 %v478, 16
        %v698 = vor.u32 %v695, %v696
        %v699 = vrot.slane %v695, 4
        %v701 = vshrl.u32 %v479, 16
        %v703 = vrot.slane %v701, 7
        %v704 = vshll.u32 %v479, 16
        %v706 = vor.u32 %v703, %v704
        %v707 = vsel %vm487, %v699, %v706
        %v708 = vrot.slane %v703, 4
        %v710 = vshrl.u32 %v480, 16
        %v712 = vrot.slane %v710, 7
        %v713 = vshll.u32 %v480, 16
        %v715 = vor.u32 %v712, %v713
        %v716 = vrot.slane %v712, 4
        %v718 = vshrl.u32 %v481, 16
        %v720 = vrot.slane %v718, 7
        %v721 = vshll.u32 %v481, 16
        %v723 = vor.u32 %v720, %v721
        %v724 = vsel %vm487, %v716, %v723
        %v725 = vrot.slane %v720, 4
        %v727 = vshrl.u32 %v482, 16
        %v729 = vrot.slane %v727, 7
        %v730 = vshll.u32 %v482, 16
        %v732 = vor.u32 %v729, %v730
        %v733 = vrot.slane %v729, 4
        %v735 = vshrl.u32 %v483, 16
        %v737 = vrot.slane %v735, 7
        %v738 = vshll.u32 %v483, 16
        %v740 = vor.u32 %v737, %v738
        %v741 = vsel %vm487, %v733, %v740
        %v742 = vrot.slane %v737, 4
        %v744 = vshrl.u32 %v484, 16
        %v746 = vrot.slane %v744, 7
        %v747 = vshll.u32 %v484, 16
        %v749 = vor.u32 %v746, %v747
        %v750 = vrot.slane %v746, 4
        %v752 = vshrl.u32 %v485, 16
        %v754 = vrot.slane %v752, 7
        %v755 = vshll.u32 %v485, 16
        %v757 = vor.u32 %v754, %v755
        %v758 = vsel %vm487, %v750, %v757
        %v759 = vrot.slane %v754, 4
        %vm808 = vcmask 1043456
        %vm809 = vmand %vm808, %vm300
        %v810 = vld [vmem:[%s248] sm:$0xf]
        %v811 = vsel %vm809, %v494, %v810
        %812 = vst [vmem:[%s248] sm:$0xf] %v811
        %813 = vst [vmem:[%s248 + $0x4] sm:$0xf] %v503
        %v814 = vld [vmem:[%s248 + $0x8] sm:$0x1]
        %v815 = vsel %vm251, %v504, %v814
        %816 = vst [vmem:[%s248 + $0x8] sm:$0x1] %v815
        %v817 = vld [vmem:[%s248 + $0xc] sm:$0xf]
        %v818 = vsel %vm809, %v511, %v817
        %819 = vst [vmem:[%s248 + $0xc] sm:$0xf] %v818
        %820 = vst [vmem:[%s248 + $0x10] sm:$0xf] %v520
        %v821 = vld [vmem:[%s248 + $0x14] sm:$0x1]
        %v822 = vsel %vm251, %v521, %v821
        %823 = vst [vmem:[%s248 + $0x14] sm:$0x1] %v822
        %v824 = vld [vmem:[%s248 + $0x18] sm:$0xf]
        %v825 = vsel %vm809, %v528, %v824
        %826 = vst [vmem:[%s248 + $0x18] sm:$0xf] %v825
        %827 = vst [vmem:[%s248 + $0x1c] sm:$0xf] %v537
        %v828 = vld [vmem:[%s248 + $0x20] sm:$0x1]
        %v829 = vsel %vm251, %v538, %v828
        %830 = vst [vmem:[%s248 + $0x20] sm:$0x1] %v829
        %v831 = vld [vmem:[%s248 + $0x24] sm:$0xf]
        %v832 = vsel %vm809, %v545, %v831
        %833 = vst [vmem:[%s248 + $0x24] sm:$0xf] %v832
        %834 = vst [vmem:[%s248 + $0x28] sm:$0xf] %v554
        %v835 = vld [vmem:[%s248 + $0x2c] sm:$0x1]
        %v836 = vsel %vm251, %v555, %v835
        %837 = vst [vmem:[%s248 + $0x2c] sm:$0x1] %v836
        %v838 = vld [vmem:[%s248 + $0x30] sm:$0xf]
        %v839 = vsel %vm809, %v562, %v838
        %840 = vst [vmem:[%s248 + $0x30] sm:$0xf] %v839
        %841 = vst [vmem:[%s248 + $0x34] sm:$0xf] %v571
        %v842 = vld [vmem:[%s248 + $0x38] sm:$0x1]
        %v843 = vsel %vm251, %v572, %v842
        %844 = vst [vmem:[%s248 + $0x38] sm:$0x1] %v843
        %v845 = vld [vmem:[%s248 + $0x3c] sm:$0xf]
        %v846 = vsel %vm809, %v579, %v845
        %847 = vst [vmem:[%s248 + $0x3c] sm:$0xf] %v846
        %848 = vst [vmem:[%s248 + $0x40] sm:$0xf] %v588
        %v849 = vld [vmem:[%s248 + $0x44] sm:$0x1]
        %v850 = vsel %vm251, %v589, %v849
        %851 = vst [vmem:[%s248 + $0x44] sm:$0x1] %v850
        %v852 = vld [vmem:[%s248 + $0x48] sm:$0xf]
        %v853 = vsel %vm809, %v596, %v852
        %854 = vst [vmem:[%s248 + $0x48] sm:$0xf] %v853
        %855 = vst [vmem:[%s248 + $0x4c] sm:$0xf] %v605
        %v856 = vld [vmem:[%s248 + $0x50] sm:$0x1]
        %v857 = vsel %vm251, %v606, %v856
        %858 = vst [vmem:[%s248 + $0x50] sm:$0x1] %v857
        %v859 = vld [vmem:[%s248 + $0x54] sm:$0xf]
        %v860 = vsel %vm809, %v613, %v859
        %861 = vst [vmem:[%s248 + $0x54] sm:$0xf] %v860
        %862 = vst [vmem:[%s248 + $0x58] sm:$0xf] %v622
        %v863 = vld [vmem:[%s248 + $0x5c] sm:$0x1]
        %v864 = vsel %vm251, %v623, %v863
        %865 = vst [vmem:[%s248 + $0x5c] sm:$0x1] %v864
        %v866 = vld [vmem:[%s248 + $0x60] sm:$0xf]
        %v867 = vsel %vm809, %v630, %v866
        %868 = vst [vmem:[%s248 + $0x60] sm:$0xf] %v867
        %869 = vst [vmem:[%s248 + $0x64] sm:$0xf] %v639
        %v870 = vld [vmem:[%s248 + $0x68] sm:$0x1]
        %v871 = vsel %vm251, %v640, %v870
        %872 = vst [vmem:[%s248 + $0x68] sm:$0x1] %v871
        %v873 = vld [vmem:[%s248 + $0x6c] sm:$0xf]
        %v874 = vsel %vm809, %v647, %v873
        %875 = vst [vmem:[%s248 + $0x6c] sm:$0xf] %v874
        %876 = vst [vmem:[%s248 + $0x70] sm:$0xf] %v656
        %v877 = vld [vmem:[%s248 + $0x74] sm:$0x1]
        %v878 = vsel %vm251, %v657, %v877
        %879 = vst [vmem:[%s248 + $0x74] sm:$0x1] %v878
        %v880 = vld [vmem:[%s248 + $0x78] sm:$0xf]
        %v881 = vsel %vm809, %v664, %v880
        %882 = vst [vmem:[%s248 + $0x78] sm:$0xf] %v881
        %883 = vst [vmem:[%s248 + $0x7c] sm:$0xf] %v673
        %v884 = vld [vmem:[%s248 + $0x80] sm:$0x1]
        %v885 = vsel %vm251, %v674, %v884
        %886 = vst [vmem:[%s248 + $0x80] sm:$0x1] %v885
        %v887 = vld [vmem:[%s248 + $0x84] sm:$0xf]
        %v888 = vsel %vm809, %v681, %v887
        %889 = vst [vmem:[%s248 + $0x84] sm:$0xf] %v888
        %890 = vst [vmem:[%s248 + $0x88] sm:$0xf] %v690
        %v891 = vld [vmem:[%s248 + $0x8c] sm:$0x1]
        %v892 = vsel %vm251, %v691, %v891
        %893 = vst [vmem:[%s248 + $0x8c] sm:$0x1] %v892
        %v894 = vld [vmem:[%s248 + $0x90] sm:$0xf]
        %v895 = vsel %vm809, %v698, %v894
        %896 = vst [vmem:[%s248 + $0x90] sm:$0xf] %v895
        %897 = vst [vmem:[%s248 + $0x94] sm:$0xf] %v707
        %v898 = vld [vmem:[%s248 + $0x98] sm:$0x1]
        %v899 = vsel %vm251, %v708, %v898
        %900 = vst [vmem:[%s248 + $0x98] sm:$0x1] %v899
        %v901 = vld [vmem:[%s248 + $0x9c] sm:$0xf]
        %v902 = vsel %vm809, %v715, %v901
        %903 = vst [vmem:[%s248 + $0x9c] sm:$0xf] %v902
        %904 = vst [vmem:[%s248 + $0xa0] sm:$0xf] %v724
        %v905 = vld [vmem:[%s248 + $0xa4] sm:$0x1]
        %v906 = vsel %vm251, %v725, %v905
        %907 = vst [vmem:[%s248 + $0xa4] sm:$0x1] %v906
        %v908 = vld [vmem:[%s248 + $0xa8] sm:$0xf]
        %v909 = vsel %vm809, %v732, %v908
        %910 = vst [vmem:[%s248 + $0xa8] sm:$0xf] %v909
        %911 = vst [vmem:[%s248 + $0xac] sm:$0xf] %v741
        %v912 = vld [vmem:[%s248 + $0xb0] sm:$0x1]
        %v913 = vsel %vm251, %v742, %v912
        %914 = vst [vmem:[%s248 + $0xb0] sm:$0x1] %v913
        %v915 = vld [vmem:[%s248 + $0xb4] sm:$0xf]
        %v916 = vsel %vm809, %v749, %v915
        %917 = vst [vmem:[%s248 + $0xb4] sm:$0xf] %v916
        %918 = vst [vmem:[%s248 + $0xb8] sm:$0xf] %v758
        %v919 = vld [vmem:[%s248 + $0xbc] sm:$0x1]
        %v920 = vsel %vm251, %v759, %v919
        %921 = vst [vmem:[%s248 + $0xbc] sm:$0x1] %v920
        %v922 = vld [vmem:[%s3] sm:$0x1]
        %v923 = vld [vmem:[%s4] sm:$0x1]
        loop: start=0, step=1, limit=2
        $region45: #{basic_block_forward.1} parent=39 // loop_pre_header
          _
        $region46: #{basic_block_forward.1} parent=39 // loop_header
          %s925 = sphi 0, %s929
          %p926 = scmp.ge.s32.totalorder %s925, 2
        $region47: #{basic_block_forward.1} parent=39 // loop_header_branch
          %928 = sbr.rel (%p926) target = $region51
        $region48: #{basic_block_forward.1} parent=39 // loop_body
          %s930 = smul.u32 %s925, 8
          %s931 = smul.u32 %s930, 3
          %s932 = smul.addr %s931, 4
          %s933 = scalar_lea.vmem [#allocation2], %s932
          %v934 = vld [vmem:[%s933] sm:$0xf]
          %v935 = vld [vmem:[%s933 + $0x4] sm:$0xf]
          %v936 = vld [vmem:[%s933 + $0x8] sm:$0x1]
          %v937 = vld [vmem:[%s933 + $0xc] sm:$0xf]
          %v938 = vld [vmem:[%s933 + $0x10] sm:$0xf]
          %v939 = vld [vmem:[%s933 + $0x14] sm:$0x1]
          %v940 = vld [vmem:[%s933 + $0x18] sm:$0xf]
          %v941 = vld [vmem:[%s933 + $0x1c] sm:$0xf]
          %v942 = vld [vmem:[%s933 + $0x20] sm:$0x1]
          %v943 = vld [vmem:[%s933 + $0x24] sm:$0xf]
          %v944 = vld [vmem:[%s933 + $0x28] sm:$0xf]
          %v945 = vld [vmem:[%s933 + $0x2c] sm:$0x1]
          %v946 = vld [vmem:[%s933 + $0x30] sm:$0xf]
          %v947 = vld [vmem:[%s933 + $0x34] sm:$0xf]
          %v948 = vld [vmem:[%s933 + $0x38] sm:$0x1]
          %v949 = vld [vmem:[%s933 + $0x3c] sm:$0xf]
          %v950 = vld [vmem:[%s933 + $0x40] sm:$0xf]
          %v951 = vld [vmem:[%s933 + $0x44] sm:$0x1]
          %v952 = vld [vmem:[%s933 + $0x48] sm:$0xf]
          %v953 = vld [vmem:[%s933 + $0x4c] sm:$0xf]
          %v954 = vld [vmem:[%s933 + $0x50] sm:$0x1]
          %v955 = vld [vmem:[%s933 + $0x54] sm:$0xf]
          %v956 = vld [vmem:[%s933 + $0x58] sm:$0xf]
          %v957 = vld [vmem:[%s933 + $0x5c] sm:$0x1]
          %v958 = vld [vmem:[%s933 + $0x60] sm:$0xf]
          %v959 = vld [vmem:[%s933 + $0x64] sm:$0xf]
          %v960 = vld [vmem:[%s933 + $0x68] sm:$0x1]
          %v961 = vld [vmem:[%s933 + $0x6c] sm:$0xf]
          %v962 = vld [vmem:[%s933 + $0x70] sm:$0xf]
          %v963 = vld [vmem:[%s933 + $0x74] sm:$0x1]
          %v980 = vunpack.c.l.b16 %v934
          %v981 = vunpack.c.l.b16 %v935
          %v982 = vunpack.c.l.b16 %v937
          %v983 = vunpack.c.l.b16 %v938
          %v984 = vunpack.c.l.b16 %v940
          %v985 = vunpack.c.l.b16 %v941
          %v986 = vunpack.c.l.b16 %v943
          %v987 = vunpack.c.l.b16 %v944
          %v988 = vunpack.c.l.b16 %v946
          %v989 = vunpack.c.l.b16 %v947
          %v990 = vunpack.c.l.b16 %v949
          %v991 = vunpack.c.l.b16 %v950
          %v992 = vunpack.c.l.b16 %v952
          %v993 = vunpack.c.l.b16 %v953
          %v994 = vunpack.c.l.b16 %v955
          %v995 = vunpack.c.l.b16 %v956
          %v996 = vpack.c.b16 %v981, %v980
          %v997 = vpack.c.b16 %v983, %v982
          %v998 = vpack.c.b16 %v985, %v984
          %v999 = vpack.c.b16 %v987, %v986
          %v1000 = vpack.c.b16 %v989, %v988
          %v1001 = vpack.c.b16 %v991, %v990
          %v1002 = vpack.c.b16 %v993, %v992
          %v1003 = vpack.c.b16 %v995, %v994
          %v1020 = vunpack.c.l.b16 %v936
          %v1021 = vunpack.c.l.b16 %v939
          %v1022 = vunpack.c.l.b16 %v942
          %v1023 = vunpack.c.l.b16 %v945
          %v1024 = vunpack.c.l.b16 %v948
          %v1025 = vunpack.c.l.b16 %v951
          %v1026 = vunpack.c.l.b16 %v954
          %v1027 = vunpack.c.l.b16 %v957
          %v1028 = vpack.c.b16 %v1020, %v1020
          %v1029 = vpack.c.b16 %v1021, %v1021
          %v1030 = vpack.c.b16 %v1022, %v1022
          %v1031 = vpack.c.b16 %v1023, %v1023
          %v1032 = vpack.c.b16 %v1024, %v1024
          %v1033 = vpack.c.b16 %v1025, %v1025
          %v1034 = vpack.c.b16 %v1026, %v1026
          %v1035 = vpack.c.b16 %v1027, %v1027
          %vm1036 = vsmask.f32 7424
          %v1038 = vshrl.u32 %v996, 16
          %v1040 = vshll.u32 %v996, 16
          %v1042 = vrot.slane %v1040, 1
          %v1043 = vor.u32 %v1038, %v1042
          %v1045 = vshll.u32 %v1028, 16
          %v1047 = vrot.slane %v1045, 1
          %v1048 = vsel %vm1036, %v1043, %v1047
          %v1050 = vshrl.u32 %v997, 16
          %v1052 = vshll.u32 %v997, 16
          %v1054 = vrot.slane %v1052, 1
          %v1055 = vor.u32 %v1050, %v1054
          %v1057 = vshll.u32 %v1029, 16
          %v1059 = vrot.slane %v1057, 1
          %v1060 = vsel %vm1036, %v1055, %v1059
          %v1062 = vshrl.u32 %v998, 16
          %v1064 = vshll.u32 %v998, 16
          %v1066 = vrot.slane %v1064, 1
          %v1067 = vor.u32 %v1062, %v1066
          %v1069 = vshll.u32 %v1030, 16
          %v1071 = vrot.slane %v1069, 1
          %v1072 = vsel %vm1036, %v1067, %v1071
          %v1074 = vshrl.u32 %v999, 16
          %v1076 = vshll.u32 %v999, 16
          %v1078 = vrot.slane %v1076, 1
          %v1079 = vor.u32 %v1074, %v1078
          %v1081 = vshll.u32 %v1031, 16
          %v1083 = vrot.slane %v1081, 1
          %v1084 = vsel %vm1036, %v1079, %v1083
          %v1086 = vshrl.u32 %v1000, 16
          %v1088 = vshll.u32 %v1000, 16
          %v1090 = vrot.slane %v1088, 1
          %v1091 = vor.u32 %v1086, %v1090
          %v1093 = vshll.u32 %v1032, 16
          %v1095 = vrot.slane %v1093, 1
          %v1096 = vsel %vm1036, %v1091, %v1095
          %v1098 = vshrl.u32 %v1001, 16
          %v1100 = vshll.u32 %v1001, 16
          %v1102 = vrot.slane %v1100, 1
          %v1103 = vor.u32 %v1098, %v1102
          %v1105 = vshll.u32 %v1033, 16
          %v1107 = vrot.slane %v1105, 1
          %v1108 = vsel %vm1036, %v1103, %v1107
          %v1110 = vshrl.u32 %v1002, 16
          %v1112 = vshll.u32 %v1002, 16
          %v1114 = vrot.slane %v1112, 1
          %v1115 = vor.u32 %v1110, %v1114
          %v1117 = vshll.u32 %v1034, 16
          %v1119 = vrot.slane %v1117, 1
          %v1120 = vsel %vm1036, %v1115, %v1119
          %v1122 = vshrl.u32 %v1003, 16
          %v1124 = vshll.u32 %v1003, 16
          %v1126 = vrot.slane %v1124, 1
          %v1127 = vor.u32 %v1122, %v1126
          %v1129 = vshll.u32 %v1035, 16
          %v1131 = vrot.slane %v1129, 1
          %v1132 = vsel %vm1036, %v1127, %v1131
          %vm1141 = vcmask 1046528
          %v1142 = vrot.slane %v996, 1
          %v1143 = vrot.slane %v1028, 1
          %v1144 = vsel %vm1141, %v1142, %v1143
          %v1145 = vrot.slane %v997, 1
          %v1146 = vrot.slane %v1029, 1
          %v1147 = vsel %vm1141, %v1145, %v1146
          %v1148 = vrot.slane %v998, 1
          %v1149 = vrot.slane %v1030, 1
          %v1150 = vsel %vm1141, %v1148, %v1149
          %v1151 = vrot.slane %v999, 1
          %v1152 = vrot.slane %v1031, 1
          %v1153 = vsel %vm1141, %v1151, %v1152
          %v1154 = vrot.slane %v1000, 1
          %v1155 = vrot.slane %v1032, 1
          %v1156 = vsel %vm1141, %v1154, %v1155
          %v1157 = vrot.slane %v1001, 1
          %v1158 = vrot.slane %v1033, 1
          %v1159 = vsel %vm1141, %v1157, %v1158
          %v1160 = vrot.slane %v1002, 1
          %v1161 = vrot.slane %v1034, 1
          %v1162 = vsel %vm1141, %v1160, %v1161
          %v1163 = vrot.slane %v1003, 1
          %v1164 = vrot.slane %v1035, 1
          %v1165 = vsel %vm1141, %v1163, %v1164
          %v1174 = vld [vmem:[#allocation4] sm:$0xf]
          %v1175 = vld [vmem:[#allocation4 + $0x4] sm:$0xf]
          %v1176 = vld [vmem:[#allocation4 + $0x8] sm:$0xf]
          %v1177 = vld [vmem:[#allocation4 + $0xc] sm:$0xf]
          %v1178 = vld [vmem:[#allocation4 + $0x10] sm:$0xf]
          %v1179 = vld [vmem:[#allocation4 + $0x14] sm:$0xf]
          %v1180 = vld [vmem:[#allocation4 + $0x18] sm:$0xf]
          %v1181 = vld [vmem:[#allocation4 + $0x1c] sm:$0xf]
          %v1182 = vld [vmem:[#allocation4 + $0x20] sm:$0xf]
          %v1183 = vld [vmem:[#allocation4 + $0x24] sm:$0xf]
          %v1184 = vld [vmem:[#allocation4 + $0x28] sm:$0xf]
          %v1185 = vld [vmem:[#allocation4 + $0x2c] sm:$0xf]
          %v1186 = vld [vmem:[#allocation4 + $0x30] sm:$0xf]
          %v1187 = vld [vmem:[#allocation4 + $0x34] sm:$0xf]
          %v1188 = vld [vmem:[#allocation4 + $0x38] sm:$0xf]
          %v1189 = vld [vmem:[#allocation4 + $0x3c] sm:$0xf]
          %v1190 = vld [vmem:[#allocation4 + $0x40] sm:$0xf]
          %v1191 = vld [vmem:[#allocation4 + $0x44] sm:$0xf]
          %v1192 = vld [vmem:[#allocation4 + $0x48] sm:$0xf]
          %v1193 = vld [vmem:[#allocation4 + $0x4c] sm:$0xf]
          %v1194 = vld [vmem:[#allocation4 + $0x50] sm:$0xf]
          %v1195 = vld [vmem:[#allocation4 + $0x54] sm:$0xf]
          %v1196 = vld [vmem:[#allocation4 + $0x58] sm:$0xf]
          %v1197 = vld [vmem:[#allocation4 + $0x5c] sm:$0xf]
          %v1198 = vld [vmem:[#allocation4 + $0x60] sm:$0xf]
          %v1199 = vld [vmem:[#allocation4 + $0x64] sm:$0xf]
          %v1200 = vld [vmem:[#allocation4 + $0x68] sm:$0xf]
          %v1201 = vld [vmem:[#allocation4 + $0x6c] sm:$0xf]
          %v1202 = vld [vmem:[#allocation4 + $0x70] sm:$0xf]
          %v1203 = vld [vmem:[#allocation4 + $0x74] sm:$0xf]
          %v1204 = vld [vmem:[#allocation4 + $0x78] sm:$0xf]
          %v1205 = vld [vmem:[#allocation4 + $0x7c] sm:$0xf]
          %v1206 = vld [vmem:[#allocation4 + $0x80] sm:$0xf]
          %v1207 = vld [vmem:[#allocation4 + $0x84] sm:$0xf]
          %v1208 = vld [vmem:[#allocation4 + $0x88] sm:$0xf]
          %v1209 = vld [vmem:[#allocation4 + $0x8c] sm:$0xf]
          %v1210 = vld [vmem:[#allocation4 + $0x90] sm:$0xf]
          %v1211 = vld [vmem:[#allocation4 + $0x94] sm:$0xf]
          %v1212 = vld [vmem:[#allocation4 + $0x98] sm:$0xf]
          %v1213 = vld [vmem:[#allocation4 + $0x9c] sm:$0xf]
          %v1214 = vld [vmem:[#allocation4 + $0xa0] sm:$0xf]
          %v1215 = vld [vmem:[#allocation4 + $0xa4] sm:$0xf]
          %v1216 = vld [vmem:[#allocation4 + $0xa8] sm:$0xf]
          %v1217 = vld [vmem:[#allocation4 + $0xac] sm:$0xf]
          %v1218 = vld [vmem:[#allocation4 + $0xb0] sm:$0xf]
          %v1219 = vld [vmem:[#allocation4 + $0xb4] sm:$0xf]
          %v1220 = vld [vmem:[#allocation4 + $0xb8] sm:$0xf]
          %v1221 = vld [vmem:[#allocation4 + $0xbc] sm:$0xf]
          %v1224 = vunpack.c.l.b16 %v958
          %v1225 = vunpack.c.l.b16 %v959
          %v1226 = vpack.c.b16 %v1225, %v1224
          %v1229 = vunpack.c.l.b16 %v960
          %v1230 = vpack.c.b16 %v1229, %v1229
          %v1232 = vshrl.u32 %v1226, 16
          %v1234 = vshll.u32 %v1226, 16
          %v1236 = vrot.slane %v1234, 1
          %v1237 = vor.u32 %v1232, %v1236
          %v1239 = vshll.u32 %v1230, 16
          %v1241 = vrot.slane %v1239, 1
          %v1242 = vsel %vm1036, %v1237, %v1241
          %v1244 = vrot.slane %v1226, 1
          %v1245 = vrot.slane %v1230, 1
          %v1246 = vsel %vm1141, %v1244, %v1245
          %s1248 = scalar_lea.vmem [#allocation4], 192
          %v1249 = vld [vmem:[%s1248] sm:$0xf]
          %v1250 = vld [vmem:[%s1248 + $0x4] sm:$0xf]
          %v1251 = vld [vmem:[%s1248 + $0x8] sm:$0xf]
          %v1252 = vld [vmem:[%s1248 + $0xc] sm:$0xf]
          %v1253 = vld [vmem:[%s1248 + $0x10] sm:$0xf]
          %v1254 = vld [vmem:[%s1248 + $0x14] sm:$0xf]
          %v1255 = vld [vmem:[%s1248 + $0x18] sm:$0xf]
          %v1256 = vld [vmem:[%s1248 + $0x1c] sm:$0xf]
          %v1257 = vld [vmem:[%s1248 + $0x20] sm:$0xf]
          %v1258 = vld [vmem:[%s1248 + $0x24] sm:$0xf]
          %v1259 = vld [vmem:[%s1248 + $0x28] sm:$0xf]
          %v1260 = vld [vmem:[%s1248 + $0x2c] sm:$0xf]
          %v1261 = vld [vmem:[%s1248 + $0x30] sm:$0xf]
          %v1262 = vld [vmem:[%s1248 + $0x34] sm:$0xf]
          %v1263 = vld [vmem:[%s1248 + $0x38] sm:$0xf]
          %v1264 = vld [vmem:[%s1248 + $0x3c] sm:$0xf]
          %v1265 = vld [vmem:[%s1248 + $0x40] sm:$0xf]
          %v1266 = vld [vmem:[%s1248 + $0x44] sm:$0xf]
          %v1267 = vld [vmem:[%s1248 + $0x48] sm:$0xf]
          %v1268 = vld [vmem:[%s1248 + $0x4c] sm:$0xf]
          %v1269 = vld [vmem:[%s1248 + $0x50] sm:$0xf]
          %v1270 = vld [vmem:[%s1248 + $0x54] sm:$0xf]
          %v1271 = vld [vmem:[%s1248 + $0x58] sm:$0xf]
          %v1272 = vld [vmem:[%s1248 + $0x5c] sm:$0xf]
          %v1273 = vld [vmem:[%s1248 + $0x60] sm:$0xf]
          %v1274 = vld [vmem:[%s1248 + $0x64] sm:$0xf]
          %v1275 = vld [vmem:[%s1248 + $0x68] sm:$0xf]
          %v1276 = vld [vmem:[%s1248 + $0x6c] sm:$0xf]
          %v1277 = vld [vmem:[%s1248 + $0x70] sm:$0xf]
          %v1278 = vld [vmem:[%s1248 + $0x74] sm:$0xf]
          %v1279 = vld [vmem:[%s1248 + $0x78] sm:$0xf]
          %v1280 = vld [vmem:[%s1248 + $0x7c] sm:$0xf]
          %v1281 = vld [vmem:[%s1248 + $0x80] sm:$0xf]
          %v1282 = vld [vmem:[%s1248 + $0x84] sm:$0xf]
          %v1283 = vld [vmem:[%s1248 + $0x88] sm:$0xf]
          %v1284 = vld [vmem:[%s1248 + $0x8c] sm:$0xf]
          %v1285 = vld [vmem:[%s1248 + $0x90] sm:$0xf]
          %v1286 = vld [vmem:[%s1248 + $0x94] sm:$0xf]
          %v1287 = vld [vmem:[%s1248 + $0x98] sm:$0xf]
          %v1288 = vld [vmem:[%s1248 + $0x9c] sm:$0xf]
          %v1289 = vld [vmem:[%s1248 + $0xa0] sm:$0xf]
          %v1290 = vld [vmem:[%s1248 + $0xa4] sm:$0xf]
          %v1291 = vld [vmem:[%s1248 + $0xa8] sm:$0xf]
          %v1292 = vld [vmem:[%s1248 + $0xac] sm:$0xf]
          %v1293 = vld [vmem:[%s1248 + $0xb0] sm:$0xf]
          %v1294 = vld [vmem:[%s1248 + $0xb4] sm:$0xf]
          %v1295 = vld [vmem:[%s1248 + $0xb8] sm:$0xf]
          %v1296 = vld [vmem:[%s1248 + $0xbc] sm:$0xf]
          %v1345 = vunpack.c.l.b16 %v1249
          %v1346 = vunpack.c.l.b16 %v1250
          %v1347 = vunpack.c.l.b16 %v1251
          %v1348 = vunpack.c.l.b16 %v1252
          %v1349 = vunpack.c.l.b16 %v1253
          %v1350 = vunpack.c.l.b16 %v1254
          %v1351 = vunpack.c.l.b16 %v1255
          %v1352 = vunpack.c.l.b16 %v1256
          %v1353 = vunpack.c.l.b16 %v1257
          %v1354 = vunpack.c.l.b16 %v1258
          %v1355 = vunpack.c.l.b16 %v1259
          %v1356 = vunpack.c.l.b16 %v1260
          %v1357 = vunpack.c.l.b16 %v1261
          %v1358 = vunpack.c.l.b16 %v1262
          %v1359 = vunpack.c.l.b16 %v1263
          %v1360 = vunpack.c.l.b16 %v1264
          %v1361 = vunpack.c.l.b16 %v1265
          %v1362 = vunpack.c.l.b16 %v1266
          %v1363 = vunpack.c.l.b16 %v1267
          %v1364 = vunpack.c.l.b16 %v1268
          %v1365 = vunpack.c.l.b16 %v1269
          %v1366 = vunpack.c.l.b16 %v1270
          %v1367 = vunpack.c.l.b16 %v1271
          %v1368 = vunpack.c.l.b16 %v1272
          %v1369 = vunpack.c.l.b16 %v1273
          %v1370 = vunpack.c.l.b16 %v1274
          %v1371 = vunpack.c.l.b16 %v1275
          %v1372 = vunpack.c.l.b16 %v1276
          %v1373 = vunpack.c.l.b16 %v1277
          %v1374 = vunpack.c.l.b16 %v1278
          %v1375 = vunpack.c.l.b16 %v1279
          %v1376 = vunpack.c.l.b16 %v1280
          %v1377 = vunpack.c.l.b16 %v1281
          %v1378 = vunpack.c.l.b16 %v1282
          %v1379 = vunpack.c.l.b16 %v1283
          %v1380 = vunpack.c.l.b16 %v1284
          %v1381 = vunpack.c.l.b16 %v1285
          %v1382 = vunpack.c.l.b16 %v1286
          %v1383 = vunpack.c.l.b16 %v1287
          %v1384 = vunpack.c.l.b16 %v1288
          %v1385 = vunpack.c.l.b16 %v1289
          %v1386 = vunpack.c.l.b16 %v1290
          %v1387 = vunpack.c.l.b16 %v1291
          %v1388 = vunpack.c.l.b16 %v1292
          %v1389 = vunpack.c.l.b16 %v1293
          %v1390 = vunpack.c.l.b16 %v1294
          %v1391 = vunpack.c.l.b16 %v1295
          %v1392 = vunpack.c.l.b16 %v1296
          %v1393 = vpack.c.b16 %v1346, %v1345
          %v1394 = vpack.c.b16 %v1348, %v1347
          %v1395 = vpack.c.b16 %v1350, %v1349
          %v1396 = vpack.c.b16 %v1352, %v1351
          %v1397 = vpack.c.b16 %v1354, %v1353
          %v1398 = vpack.c.b16 %v1356, %v1355
          %v1399 = vpack.c.b16 %v1358, %v1357
          %v1400 = vpack.c.b16 %v1360, %v1359
          %v1401 = vpack.c.b16 %v1362, %v1361
          %v1402 = vpack.c.b16 %v1364, %v1363
          %v1403 = vpack.c.b16 %v1366, %v1365
          %v1404 = vpack.c.b16 %v1368, %v1367
          %v1405 = vpack.c.b16 %v1370, %v1369
          %v1406 = vpack.c.b16 %v1372, %v1371
          %v1407 = vpack.c.b16 %v1374, %v1373
          %v1408 = vpack.c.b16 %v1376, %v1375
          %v1409 = vpack.c.b16 %v1378, %v1377
          %v1410 = vpack.c.b16 %v1380, %v1379
          %v1411 = vpack.c.b16 %v1382, %v1381
          %v1412 = vpack.c.b16 %v1384, %v1383
          %v1413 = vpack.c.b16 %v1386, %v1385
          %v1414 = vpack.c.b16 %v1388, %v1387
          %v1415 = vpack.c.b16 %v1390, %v1389
          %v1416 = vpack.c.b16 %v1392, %v1391
          %1441 = vmatprep.subr.bf16.mxu0 0
          %1442 = vmatpush1.bf16.msra.mxu0 %v1393
          %1443 = vmatprep.subr.bf16.mxu0 0
          %1444 = vmatpush1.bf16.msra.mxu0 %v1394
          %1445 = vmatprep.subr.bf16.mxu0 0
          %1446 = vmatpush1.bf16.msra.mxu0 %v1395
          %1447 = vmatprep.subr.bf16.mxu0 0
          %1448 = vmatpush1.bf16.msra.mxu0 %v1396
          %1449 = vmatprep.subr.bf16.mxu0 0
          %1450 = vmatpush1.bf16.msra.mxu0 %v1397
          %1451 = vmatprep.subr.bf16.mxu0 0
          %1452 = vmatpush1.bf16.msra.mxu0 %v1398
          %1453 = vmatprep.subr.bf16.mxu0 0
          %1454 = vmatpush1.bf16.msra.mxu0 %v1399
          %1455 = vmatprep.subr.bf16.mxu0 0
          %1456 = vmatpush1.bf16.msra.mxu0 %v1400
          %1457 = vmatprep.subr.bf16.mxu0 0
          %1458 = vmatpush1.bf16.msra.mxu0 %v1401
          %1459 = vmatprep.subr.bf16.mxu0 0
          %1460 = vmatpush1.bf16.msra.mxu0 %v1402
          %1461 = vmatprep.subr.bf16.mxu0 0
          %1462 = vmatpush1.bf16.msra.mxu0 %v1403
          %1463 = vmatprep.subr.bf16.mxu0 0
          %1464 = vmatpush1.bf16.msra.mxu0 %v1404
          %1465 = vmatprep.subr.bf16.mxu0 0
          %1466 = vmatpush1.bf16.msra.mxu0 %v1405
          %1467 = vmatprep.subr.bf16.mxu0 0
          %1468 = vmatpush1.bf16.msra.mxu0 %v1406
          %1469 = vmatprep.subr.bf16.mxu0 0
          %1470 = vmatpush1.bf16.msra.mxu0 %v1407
          %1471 = vmatprep.subr.bf16.mxu0 0
          %1472 = vmatpush1.bf16.msra.mxu0 %v1408
          %1473 = vmatprep.mubr.bf16.mxu0 %v1060
          %1474 = vmatmul.mubr.bf16.gmra.mrb[0].mxu0 %v997
          %v1475 = vpop.f32.mrb[0].mxu0
          %v1476 = vadd.f32 0.0, %v1475
          %v1477 = vpop.f32.mrb[0].mxu0
          %v1478 = vpop.f32.mrb[0].mxu0
          %v1479 = vadd.f32 0.0, %v1478
          %v1480 = vpop.f32.mrb[0].mxu0
          %1481 = vmatprep.mubr.bf16.mxu0 %v1072
          %1482 = vmatmul.mubr.bf16.gmra.mrb[0].mxu0 %v998
          %v1483 = vpop.f32.mrb[0].mxu0
          %v1484 = vadd.f32 0.0, %v1483
          %v1485 = vpop.f32.mrb[0].mxu0
          %v1486 = vpop.f32.mrb[0].mxu0
          %v1487 = vadd.f32 0.0, %v1486
          %v1488 = vpop.f32.mrb[0].mxu0
          %1489 = vmatprep.mubr.bf16.mxu0 %v1084
          %1490 = vmatmul.mubr.bf16.gmra.mrb[0].mxu0 %v999
          %v1491 = vpop.f32.mrb[0].mxu0
          %v1492 = vadd.f32 0.0, %v1491
          %v1493 = vpop.f32.mrb[0].mxu0
          %v1494 = vpop.f32.mrb[0].mxu0
          %v1495 = vadd.f32 0.0, %v1494
          %v1496 = vpop.f32.mrb[0].mxu0
          %1497 = vmatprep.mubr.bf16.mxu0 %v1096
          %1498 = vmatmul.mubr.bf16.gmra.mrb[0].mxu0 %v1000
          %v1499 = vpop.f32.mrb[0].mxu0
          %v1500 = vadd.f32 0.0, %v1499
          %v1501 = vpop.f32.mrb[0].mxu0
          %v1502 = vpop.f32.mrb[0].mxu0
          %v1503 = vadd.f32 0.0, %v1502
          %v1504 = vpop.f32.mrb[0].mxu0
          %1505 = vmatprep.mubr.bf16.mxu0 %v1108
          %1506 = vmatmul.mubr.bf16.gmra.mrb[0].mxu0 %v1001
          %v1507 = vpop.f32.mrb[0].mxu0
          %v1508 = vadd.f32 0.0, %v1507
          %v1509 = vpop.f32.mrb[0].mxu0
          %v1510 = vpop.f32.mrb[0].mxu0
          %v1511 = vadd.f32 0.0, %v1510
          %v1512 = vpop.f32.mrb[0].mxu0
          %1513 = vmatprep.mubr.bf16.mxu0 %v1120
          %1514 = vmatmul.mubr.bf16.gmra.mrb[0].mxu0 %v1002
          %v1515 = vpop.f32.mrb[0].mxu0
          %v1516 = vadd.f32 0.0, %v1515
          %v1517 = vpop.f32.mrb[0].mxu0
          %v1518 = vpop.f32.mrb[0].mxu0
          %v1519 = vadd.f32 0.0, %v1518
          %v1520 = vpop.f32.mrb[0].mxu0
          %1521 = vmatprep.mubr.bf16.mxu0 %v1132
          %1522 = vmatmul.mubr.bf16.gmra.mrb[0].mxu0 %v1003
          %v1523 = vpop.f32.mrb[0].mxu0
          %v1524 = vadd.f32 0.0, %v1523
          %v1525 = vpop.f32.mrb[0].mxu0
          %v1526 = vpop.f32.mrb[0].mxu0
          %v1527 = vadd.f32 0.0, %v1526
          %v1528 = vpop.f32.mrb[0].mxu0
          %1529 = vmatprep.mubr.bf16.mxu0 %v1242
          %1530 = vmatmul.mubr.bf16.gmra.mrb[0].mxu0 %v1226
          %v1531 = vpop.f32.mrb[0].mxu0
          %v1532 = vadd.f32 0.0, %v1531
          %v1533 = vpop.f32.mrb[0].mxu0
          %v1534 = vpop.f32.mrb[0].mxu0
          %v1535 = vadd.f32 0.0, %v1534
          %v1536 = vpop.f32.mrb[0].mxu0
          %1537 = vdwg.mxu0
          %1538 = vmatprep.subr.bf16.mxu0 0
          %1539 = vmatpush1.bf16.msra.mxu0 %v1409
          %1540 = vmatprep.subr.bf16.mxu0 0
          %1541 = vmatpush1.bf16.msra.mxu0 %v1410
          %1542 = vmatprep.subr.bf16.mxu0 0
          %1543 = vmatpush1.bf16.msra.mxu0 %v1411
          %1544 = vmatprep.subr.bf16.mxu0 0
          %1545 = vmatpush1.bf16.msra.mxu0 %v1412
          %1546 = vmatprep.subr.bf16.mxu0 0
          %1547 = vmatpush1.bf16.msra.mxu0 %v1413
          %1548 = vmatprep.subr.bf16.mxu0 0
          %1549 = vmatpush1.bf16.msra.mxu0 %v1414
          %1550 = vmatprep.subr.bf16.mxu0 0
          %1551 = vmatpush1.bf16.msra.mxu0 %v1415
          %1552 = vmatprep.subr.bf16.mxu0 0
          %1553 = vmatpush1.bf16.msra.mxu0 %v1416
          %1554 = vmatprep.subr.bf16.mxu0 0
          %1555 = vmatpush1.bf16.msra.mxu0 0
          %1556 = vmatprep.subr.bf16.mxu0 0
          %1557 = vmatpush1.bf16.msra.mxu0 0
          %1558 = vmatprep.subr.bf16.mxu0 0
          %1559 = vmatpush1.bf16.msra.mxu0 0
          %1560 = vmatprep.subr.bf16.mxu0 0
          %1561 = vmatpush1.bf16.msra.mxu0 0
          %1562 = vmatprep.subr.bf16.mxu0 0
          %1563 = vmatpush1.bf16.msra.mxu0 0
          %1564 = vmatprep.subr.bf16.mxu0 0
          %1565 = vmatpush1.bf16.msra.mxu0 0
          %1566 = vmatprep.subr.bf16.mxu0 0
          %1567 = vmatpush1.bf16.msra.mxu0 0
          %1568 = vmatprep.subr.bf16.mxu0 0
          %1569 = vmatpush1.bf16.msra.mxu0 0
          %1570 = vmatprep.mubr.bf16.mxu0 0
          %1571 = vmatmul.mubr.bf16.gmra.mrb[0].mxu0 %v1147
          %v1572 = vpop.f32.mrb[0].mxu0
          %v1573 = vadd.f32 %v1476, %v1572
          %v1574 = vpop.f32.mrb[0].mxu0
          %v1575 = vpop.f32.mrb[0].mxu0
          %v1576 = vadd.f32 %v1479, %v1575
          %v1577 = vpop.f32.mrb[0].mxu0
          %1578 = vmatprep.mubr.bf16.mxu0 0
          %1579 = vmatmul.mubr.bf16.gmra.mrb[0].mxu0 %v1150
          %v1580 = vpop.f32.mrb[0].mxu0
          %v1581 = vadd.f32 %v1484, %v1580
          %v1582 = vpop.f32.mrb[0].mxu0
          %v1583 = vpop.f32.mrb[0].mxu0
          %v1584 = vadd.f32 %v1487, %v1583
          %v1585 = vpop.f32.mrb[0].mxu0
          %1586 = vmatprep.mubr.bf16.mxu0 0
          %1587 = vmatmul.mubr.bf16.gmra.mrb[0].mxu0 %v1153
          %v1588 = vpop.f32.mrb[0].mxu0
          %v1589 = vadd.f32 %v1492, %v1588
          %v1590 = vpop.f32.mrb[0].mxu0
          %v1591 = vpop.f32.mrb[0].mxu0
          %v1592 = vadd.f32 %v1495, %v1591
          %v1593 = vpop.f32.mrb[0].mxu0
          %1594 = vmatprep.mubr.bf16.mxu0 0
          %1595 = vmatmul.mubr.bf16.gmra.mrb[0].mxu0 %v1156
          %v1596 = vpop.f32.mrb[0].mxu0
          %v1597 = vadd.f32 %v1500, %v1596
          %v1598 = vpop.f32.mrb[0].mxu0
          %v1599 = vpop.f32.mrb[0].mxu0
          %v1600 = vadd.f32 %v1503, %v1599
          %v1601 = vpop.f32.mrb[0].mxu0
          %1602 = vmatprep.mubr.bf16.mxu0 0
          %1603 = vmatmul.mubr.bf16.gmra.mrb[0].mxu0 %v1159
          %v1604 = vpop.f32.mrb[0].mxu0
          %v1605 = vadd.f32 %v1508, %v1604
          %v1606 = vpop.f32.mrb[0].mxu0
          %v1607 = vpop.f32.mrb[0].mxu0
          %v1608 = vadd.f32 %v1511, %v1607
          %v1609 = vpop.f32.mrb[0].mxu0
          %1610 = vmatprep.mubr.bf16.mxu0 0
          %1611 = vmatmul.mubr.bf16.gmra.mrb[0].mxu0 %v1162
          %v1612 = vpop.f32.mrb[0].mxu0
          %v1613 = vadd.f32 %v1516, %v1612
          %v1614 = vpop.f32.mrb[0].mxu0
          %v1615 = vpop.f32.mrb[0].mxu0
          %v1616 = vadd.f32 %v1519, %v1615
          %v1617 = vpop.f32.mrb[0].mxu0
          %1618 = vmatprep.mubr.bf16.mxu0 0
          %1619 = vmatmul.mubr.bf16.gmra.mrb[0].mxu0 %v1165
          %v1620 = vpop.f32.mrb[0].mxu0
          %v1621 = vadd.f32 %v1524, %v1620
          %v1622 = vpop.f32.mrb[0].mxu0
          %v1623 = vpop.f32.mrb[0].mxu0
          %v1624 = vadd.f32 %v1527, %v1623
          %v1625 = vpop.f32.mrb[0].mxu0
          %1626 = vmatprep.mubr.bf16.mxu0 0
          %1627 = vmatmul.mubr.bf16.gmra.mrb[0].mxu0 %v1246
          %v1628 = vpop.f32.mrb[0].mxu0
          %v1629 = vadd.f32 %v1532, %v1628
          %v1630 = vpop.f32.mrb[0].mxu0
          %v1631 = vpop.f32.mrb[0].mxu0
          %v1632 = vadd.f32 %v1535, %v1631
          %v1633 = vpop.f32.mrb[0].mxu0
          %1634 = vdwg.mxu0
          %v1683 = vunpack.c.l.b16 %v1174
          %v1684 = vunpack.c.l.b16 %v1175
          %v1685 = vunpack.c.l.b16 %v1176
          %v1686 = vunpack.c.l.b16 %v1177
          %v1687 = vunpack.c.l.b16 %v1178
          %v1688 = vunpack.c.l.b16 %v1179
          %v1689 = vunpack.c.l.b16 %v1180
          %v1690 = vunpack.c.l.b16 %v1181
          %v1691 = vunpack.c.l.b16 %v1182
          %v1692 = vunpack.c.l.b16 %v1183
          %v1693 = vunpack.c.l.b16 %v1184
          %v1694 = vunpack.c.l.b16 %v1185
          %v1695 = vunpack.c.l.b16 %v1186
          %v1696 = vunpack.c.l.b16 %v1187
          %v1697 = vunpack.c.l.b16 %v1188
          %v1698 = vunpack.c.l.b16 %v1189
          %v1699 = vunpack.c.l.b16 %v1190
          %v1700 = vunpack.c.l.b16 %v1191
          %v1701 = vunpack.c.l.b16 %v1192
          %v1702 = vunpack.c.l.b16 %v1193
          %v1703 = vunpack.c.l.b16 %v1194
          %v1704 = vunpack.c.l.b16 %v1195
          %v1705 = vunpack.c.l.b16 %v1196
          %v1706 = vunpack.c.l.b16 %v1197
          %v1707 = vunpack.c.l.b16 %v1198
          %v1708 = vunpack.c.l.b16 %v1199
          %v1709 = vunpack.c.l.b16 %v1200
          %v1710 = vunpack.c.l.b16 %v1201
          %v1711 = vunpack.c.l.b16 %v1202
          %v1712 = vunpack.c.l.b16 %v1203
          %v1713 = vunpack.c.l.b16 %v1204
          %v1714 = vunpack.c.l.b16 %v1205
          %v1715 = vunpack.c.l.b16 %v1206
          %v1716 = vunpack.c.l.b16 %v1207
          %v1717 = vunpack.c.l.b16 %v1208
          %v1718 = vunpack.c.l.b16 %v1209
          %v1719 = vunpack.c.l.b16 %v1210
          %v1720 = vunpack.c.l.b16 %v1211
          %v1721 = vunpack.c.l.b16 %v1212
          %v1722 = vunpack.c.l.b16 %v1213
          %v1723 = vunpack.c.l.b16 %v1214
          %v1724 = vunpack.c.l.b16 %v1215
          %v1725 = vunpack.c.l.b16 %v1216
          %v1726 = vunpack.c.l.b16 %v1217
          %v1727 = vunpack.c.l.b16 %v1218
          %v1728 = vunpack.c.l.b16 %v1219
          %v1729 = vunpack.c.l.b16 %v1220
          %v1730 = vunpack.c.l.b16 %v1221
          %v1731 = vpack.c.b16 %v1684, %v1683
          %v1732 = vpack.c.b16 %v1686, %v1685
          %v1733 = vpack.c.b16 %v1688, %v1687
          %v1734 = vpack.c.b16 %v1690, %v1689
          %v1735 = vpack.c.b16 %v1692, %v1691
          %v1736 = vpack.c.b16 %v1694, %v1693
          %v1737 = vpack.c.b16 %v1696, %v1695
          %v1738 = vpack.c.b16 %v1698, %v1697
          %v1739 = vpack.c.b16 %v1700, %v1699
          %v1740 = vpack.c.b16 %v1702, %v1701
          %v1741 = vpack.c.b16 %v1704, %v1703
          %v1742 = vpack.c.b16 %v1706, %v1705
          %v1743 = vpack.c.b16 %v1708, %v1707
          %v1744 = vpack.c.b16 %v1710, %v1709
          %v1745 = vpack.c.b16 %v1712, %v1711
          %v1746 = vpack.c.b16 %v1714, %v1713
          %v1747 = vpack.c.b16 %v1716, %v1715
          %v1748 = vpack.c.b16 %v1718, %v1717
          %v1749 = vpack.c.b16 %v1720, %v1719
          %v1750 = vpack.c.b16 %v1722, %v1721
          %v1751 = vpack.c.b16 %v1724, %v1723
          %v1752 = vpack.c.b16 %v1726, %v1725
          %v1753 = vpack.c.b16 %v1728, %v1727
          %v1754 = vpack.c.b16 %v1730, %v1729
          %1779 = vmatprep.subr.bf16.mxu0 0
          %1780 = vmatpush1.bf16.msra.mxu0 %v1731
          %1781 = vmatprep.subr.bf16.mxu0 0
          %1782 = vmatpush1.bf16.msra.mxu0 %v1732
          %1783 = vmatprep.subr.bf16.mxu0 0
          %1784 = vmatpush1.bf16.msra.mxu0 %v1733
          %1785 = vmatprep.subr.bf16.mxu0 0
          %1786 = vmatpush1.bf16.msra.mxu0 %v1734
          %1787 = vmatprep.subr.bf16.mxu0 0
          %1788 = vmatpush1.bf16.msra.mxu0 %v1735
          %1789 = vmatprep.subr.bf16.mxu0 0
          %1790 = vmatpush1.bf16.msra.mxu0 %v1736
          %1791 = vmatprep.subr.bf16.mxu0 0
          %1792 = vmatpush1.bf16.msra.mxu0 %v1737
          %1793 = vmatprep.subr.bf16.mxu0 0
          %1794 = vmatpush1.bf16.msra.mxu0 %v1738
          %1795 = vmatprep.subr.bf16.mxu0 0
          %1796 = vmatpush1.bf16.msra.mxu0 %v1739
          %1797 = vmatprep.subr.bf16.mxu0 0
          %1798 = vmatpush1.bf16.msra.mxu0 %v1740
          %1799 = vmatprep.subr.bf16.mxu0 0
          %1800 = vmatpush1.bf16.msra.mxu0 %v1741
          %1801 = vmatprep.subr.bf16.mxu0 0
          %1802 = vmatpush1.bf16.msra.mxu0 %v1742
          %1803 = vmatprep.subr.bf16.mxu0 0
          %1804 = vmatpush1.bf16.msra.mxu0 %v1743
          %1805 = vmatprep.subr.bf16.mxu0 0
          %1806 = vmatpush1.bf16.msra.mxu0 %v1744
          %1807 = vmatprep.subr.bf16.mxu0 0
          %1808 = vmatpush1.bf16.msra.mxu0 %v1745
          %1809 = vmatprep.subr.bf16.mxu0 0
          %1810 = vmatpush1.bf16.msra.mxu0 %v1746
          %1811 = vmatprep.mubr.bf16.mxu0 %v1048
          %1812 = vmatmul.mubr.bf16.gmra.mrb[0].mxu0 %v996
          %v1813 = vpop.f32.mrb[0].mxu0
          %v1814 = vadd.f32 %v1573, %v1813
          %v1815 = vpop.f32.mrb[0].mxu0
          %v1816 = vpop.f32.mrb[0].mxu0
          %v1817 = vadd.f32 %v1576, %v1816
          %v1818 = vpop.f32.mrb[0].mxu0
          %1819 = vmatprep.mubr.bf16.mxu0 %v1060
          %1820 = vmatmul.mubr.bf16.gmra.mrb[0].mxu0 %v997
          %v1821 = vpop.f32.mrb[0].mxu0
          %v1822 = vadd.f32 %v1581, %v1821
          %v1823 = vpop.f32.mrb[0].mxu0
          %v1824 = vpop.f32.mrb[0].mxu0
          %v1825 = vadd.f32 %v1584, %v1824
          %v1826 = vpop.f32.mrb[0].mxu0
          %1827 = vmatprep.mubr.bf16.mxu0 %v1072
          %1828 = vmatmul.mubr.bf16.gmra.mrb[0].mxu0 %v998
          %v1829 = vpop.f32.mrb[0].mxu0
          %v1830 = vadd.f32 %v1589, %v1829
          %v1831 = vpop.f32.mrb[0].mxu0
          %v1832 = vpop.f32.mrb[0].mxu0
          %v1833 = vadd.f32 %v1592, %v1832
          %v1834 = vpop.f32.mrb[0].mxu0
          %1835 = vmatprep.mubr.bf16.mxu0 %v1084
          %1836 = vmatmul.mubr.bf16.gmra.mrb[0].mxu0 %v999
          %v1837 = vpop.f32.mrb[0].mxu0
          %v1838 = vadd.f32 %v1597, %v1837
          %v1839 = vpop.f32.mrb[0].mxu0
          %v1840 = vpop.f32.mrb[0].mxu0
          %v1841 = vadd.f32 %v1600, %v1840
          %v1842 = vpop.f32.mrb[0].mxu0
          %1843 = vmatprep.mubr.bf16.mxu0 %v1096
          %1844 = vmatmul.mubr.bf16.gmra.mrb[0].mxu0 %v1000
          %v1845 = vpop.f32.mrb[0].mxu0
          %v1846 = vadd.f32 %v1605, %v1845
          %v1847 = vpop.f32.mrb[0].mxu0
          %v1848 = vpop.f32.mrb[0].mxu0
          %v1849 = vadd.f32 %v1608, %v1848
          %v1850 = vpop.f32.mrb[0].mxu0
          %1851 = vmatprep.mubr.bf16.mxu0 %v1108
          %1852 = vmatmul.mubr.bf16.gmra.mrb[0].mxu0 %v1001
          %v1853 = vpop.f32.mrb[0].mxu0
          %v1854 = vadd.f32 %v1613, %v1853
          %v1855 = vpop.f32.mrb[0].mxu0
          %v1856 = vpop.f32.mrb[0].mxu0
          %v1857 = vadd.f32 %v1616, %v1856
          %v1858 = vpop.f32.mrb[0].mxu0
          %1859 = vmatprep.mubr.bf16.mxu0 %v1120
          %1860 = vmatmul.mubr.bf16.gmra.mrb[0].mxu0 %v1002
          %v1861 = vpop.f32.mrb[0].mxu0
          %v1862 = vadd.f32 %v1621, %v1861
          %v1863 = vpop.f32.mrb[0].mxu0
          %v1864 = vpop.f32.mrb[0].mxu0
          %v1865 = vadd.f32 %v1624, %v1864
          %v1866 = vpop.f32.mrb[0].mxu0
          %1867 = vmatprep.mubr.bf16.mxu0 %v1132
          %1868 = vmatmul.mubr.bf16.gmra.mrb[0].mxu0 %v1003
          %v1869 = vpop.f32.mrb[0].mxu0
          %v1870 = vadd.f32 %v1629, %v1869
          %v1871 = vpop.f32.mrb[0].mxu0
          %v1872 = vpop.f32.mrb[0].mxu0
          %v1873 = vadd.f32 %v1632, %v1872
          %v1874 = vpop.f32.mrb[0].mxu0
          %1875 = vdwg.mxu0
          %1876 = vmatprep.subr.bf16.mxu0 0
          %1877 = vmatpush1.bf16.msra.mxu0 %v1747
          %1878 = vmatprep.subr.bf16.mxu0 0
          %1879 = vmatpush1.bf16.msra.mxu0 %v1748
          %1880 = vmatprep.subr.bf16.mxu0 0
          %1881 = vmatpush1.bf16.msra.mxu0 %v1749
          %1882 = vmatprep.subr.bf16.mxu0 0
          %1883 = vmatpush1.bf16.msra.mxu0 %v1750
          %1884 = vmatprep.subr.bf16.mxu0 0
          %1885 = vmatpush1.bf16.msra.mxu0 %v1751
          %1886 = vmatprep.subr.bf16.mxu0 0
          %1887 = vmatpush1.bf16.msra.mxu0 %v1752
          %1888 = vmatprep.subr.bf16.mxu0 0
          %1889 = vmatpush1.bf16.msra.mxu0 %v1753
          %1890 = vmatprep.subr.bf16.mxu0 0
          %1891 = vmatpush1.bf16.msra.mxu0 %v1754
          %1892 = vmatprep.subr.bf16.mxu0 0
          %1893 = vmatpush1.bf16.msra.mxu0 0
          %1894 = vmatprep.subr.bf16.mxu0 0
          %1895 = vmatpush1.bf16.msra.mxu0 0
          %1896 = vmatprep.subr.bf16.mxu0 0
          %1897 = vmatpush1.bf16.msra.mxu0 0
          %1898 = vmatprep.subr.bf16.mxu0 0
          %1899 = vmatpush1.bf16.msra.mxu0 0
          %1900 = vmatprep.subr.bf16.mxu0 0
          %1901 = vmatpush1.bf16.msra.mxu0 0
          %1902 = vmatprep.subr.bf16.mxu0 0
          %1903 = vmatpush1.bf16.msra.mxu0 0
          %1904 = vmatprep.subr.bf16.mxu0 0
          %1905 = vmatpush1.bf16.msra.mxu0 0
          %1906 = vmatprep.subr.bf16.mxu0 0
          %1907 = vmatpush1.bf16.msra.mxu0 0
          %1908 = vmatprep.mubr.bf16.mxu0 0
          %1909 = vmatmul.mubr.bf16.gmra.mrb[0].mxu0 %v1144
          %v1910 = vpop.f32.mrb[0].mxu0
          %v1911 = vadd.f32 %v1814, %v1910
          %v1912 = vpop.f32.mrb[0].mxu0
          %v1913 = vpop.f32.mrb[0].mxu0
          %v1914 = vadd.f32 %v1817, %v1913
          %v1915 = vpop.f32.mrb[0].mxu0
          %1916 = vmatprep.mubr.bf16.mxu0 0
          %1917 = vmatmul.mubr.bf16.gmra.mrb[0].mxu0 %v1147
          %v1918 = vpop.f32.mrb[0].mxu0
          %v1919 = vadd.f32 %v1822, %v1918
          %v1920 = vpop.f32.mrb[0].mxu0
          %v1921 = vpop.f32.mrb[0].mxu0
          %v1922 = vadd.f32 %v1825, %v1921
          %v1923 = vpop.f32.mrb[0].mxu0
          %1924 = vmatprep.mubr.bf16.mxu0 0
          %1925 = vmatmul.mubr.bf16.gmra.mrb[0].mxu0 %v1150
          %v1926 = vpop.f32.mrb[0].mxu0
          %v1927 = vadd.f32 %v1830, %v1926
          %v1928 = vpop.f32.mrb[0].mxu0
          %v1929 = vpop.f32.mrb[0].mxu0
          %v1930 = vadd.f32 %v1833, %v1929
          %v1931 = vpop.f32.mrb[0].mxu0
          %1932 = vmatprep.mubr.bf16.mxu0 0
          %1933 = vmatmul.mubr.bf16.gmra.mrb[0].mxu0 %v1153
          %v1934 = vpop.f32.mrb[0].mxu0
          %v1935 = vadd.f32 %v1838, %v1934
          %v1936 = vpop.f32.mrb[0].mxu0
          %v1937 = vpop.f32.mrb[0].mxu0
          %v1938 = vadd.f32 %v1841, %v1937
          %v1939 = vpop.f32.mrb[0].mxu0
          %1940 = vmatprep.mubr.bf16.mxu0 0
          %1941 = vmatmul.mubr.bf16.gmra.mrb[0].mxu0 %v1156
          %v1942 = vpop.f32.mrb[0].mxu0
          %v1943 = vadd.f32 %v1846, %v1942
          %v1944 = vpop.f32.mrb[0].mxu0
          %v1945 = vpop.f32.mrb[0].mxu0
          %v1946 = vadd.f32 %v1849, %v1945
          %v1947 = vpop.f32.mrb[0].mxu0
          %1948 = vmatprep.mubr.bf16.mxu0 0
          %1949 = vmatmul.mubr.bf16.gmra.mrb[0].mxu0 %v1159
          %v1950 = vpop.f32.mrb[0].mxu0
          %v1951 = vadd.f32 %v1854, %v1950
          %v1952 = vpop.f32.mrb[0].mxu0
          %v1953 = vpop.f32.mrb[0].mxu0
          %v1954 = vadd.f32 %v1857, %v1953
          %v1955 = vpop.f32.mrb[0].mxu0
          %1956 = vmatprep.mubr.bf16.mxu0 0
          %1957 = vmatmul.mubr.bf16.gmra.mrb[0].mxu0 %v1162
          %v1958 = vpop.f32.mrb[0].mxu0
          %v1959 = vadd.f32 %v1862, %v1958
          %v1960 = vpop.f32.mrb[0].mxu0
          %v1961 = vpop.f32.mrb[0].mxu0
          %v1962 = vadd.f32 %v1865, %v1961
          %v1963 = vpop.f32.mrb[0].mxu0
          %1964 = vmatprep.mubr.bf16.mxu0 0
          %1965 = vmatmul.mubr.bf16.gmra.mrb[0].mxu0 %v1165
          %v1966 = vpop.f32.mrb[0].mxu0
          %v1967 = vadd.f32 %v1870, %v1966
          %v1968 = vpop.f32.mrb[0].mxu0
          %v1969 = vpop.f32.mrb[0].mxu0
          %v1970 = vadd.f32 %v1873, %v1969
          %v1971 = vpop.f32.mrb[0].mxu0
          %1972 = vdwg.mxu0
          %v1975 = vunpack.c.l.b16 %v961
          %v1976 = vunpack.c.l.b16 %v962
          %v1977 = vpack.c.b16 %v1976, %v1975
          %v1980 = vunpack.c.l.b16 %v963
          %v1981 = vpack.c.b16 %v1980, %v1980
          %v1983 = vshrl.u32 %v1977, 16
          %v1985 = vshll.u32 %v1977, 16
          %v1987 = vrot.slane %v1985, 1
          %v1988 = vor.u32 %v1983, %v1987
          %v1990 = vshll.u32 %v1981, 16
          %v1992 = vrot.slane %v1990, 1
          %v1993 = vsel %vm1036, %v1988, %v1992
          %v1995 = vrot.slane %v1977, 1
          %v1996 = vrot.slane %v1981, 1
          %v1997 = vsel %vm1141, %v1995, %v1996
          %s1999 = scalar_lea.vmem [#allocation4], 384
          %v2000 = vld [vmem:[%s1999] sm:$0xf]
          %v2001 = vld [vmem:[%s1999 + $0x4] sm:$0xf]
          %v2002 = vld [vmem:[%s1999 + $0x8] sm:$0xf]
          %v2003 = vld [vmem:[%s1999 + $0xc] sm:$0xf]
          %v2004 = vld [vmem:[%s1999 + $0x10] sm:$0xf]
          %v2005 = vld [vmem:[%s1999 + $0x14] sm:$0xf]
          %v2006 = vld [vmem:[%s1999 + $0x18] sm:$0xf]
          %v2007 = vld [vmem:[%s1999 + $0x1c] sm:$0xf]
          %v2008 = vld [vmem:[%s1999 + $0x20] sm:$0xf]
          %v2009 = vld [vmem:[%s1999 + $0x24] sm:$0xf]
          %v2010 = vld [vmem:[%s1999 + $0x28] sm:$0xf]
          %v2011 = vld [vmem:[%s1999 + $0x2c] sm:$0xf]
          %v2012 = vld [vmem:[%s1999 + $0x30] sm:$0xf]
          %v2013 = vld [vmem:[%s1999 + $0x34] sm:$0xf]
          %v2014 = vld [vmem:[%s1999 + $0x38] sm:$0xf]
          %v2015 = vld [vmem:[%s1999 + $0x3c] sm:$0xf]
          %v2016 = vld [vmem:[%s1999 + $0x40] sm:$0xf]
          %v2017 = vld [vmem:[%s1999 + $0x44] sm:$0xf]
          %v2018 = vld [vmem:[%s1999 + $0x48] sm:$0xf]
          %v2019 = vld [vmem:[%s1999 + $0x4c] sm:$0xf]
          %v2020 = vld [vmem:[%s1999 + $0x50] sm:$0xf]
          %v2021 = vld [vmem:[%s1999 + $0x54] sm:$0xf]
          %v2022 = vld [vmem:[%s1999 + $0x58] sm:$0xf]
          %v2023 = vld [vmem:[%s1999 + $0x5c] sm:$0xf]
          %v2024 = vld [vmem:[%s1999 + $0x60] sm:$0xf]
          %v2025 = vld [vmem:[%s1999 + $0x64] sm:$0xf]
          %v2026 = vld [vmem:[%s1999 + $0x68] sm:$0xf]
          %v2027 = vld [vmem:[%s1999 + $0x6c] sm:$0xf]
          %v2028 = vld [vmem:[%s1999 + $0x70] sm:$0xf]
          %v2029 = vld [vmem:[%s1999 + $0x74] sm:$0xf]
          %v2030 = vld [vmem:[%s1999 + $0x78] sm:$0xf]
          %v2031 = vld [vmem:[%s1999 + $0x7c] sm:$0xf]
          %v2032 = vld [vmem:[%s1999 + $0x80] sm:$0xf]
          %v2033 = vld [vmem:[%s1999 + $0x84] sm:$0xf]
          %v2034 = vld [vmem:[%s1999 + $0x88] sm:$0xf]
          %v2035 = vld [vmem:[%s1999 + $0x8c] sm:$0xf]
          %v2036 = vld [vmem:[%s1999 + $0x90] sm:$0xf]
          %v2037 = vld [vmem:[%s1999 + $0x94] sm:$0xf]
          %v2038 = vld [vmem:[%s1999 + $0x98] sm:$0xf]
          %v2039 = vld [vmem:[%s1999 + $0x9c] sm:$0xf]
          %v2040 = vld [vmem:[%s1999 + $0xa0] sm:$0xf]
          %v2041 = vld [vmem:[%s1999 + $0xa4] sm:$0xf]
          %v2042 = vld [vmem:[%s1999 + $0xa8] sm:$0xf]
          %v2043 = vld [vmem:[%s1999 + $0xac] sm:$0xf]
          %v2044 = vld [vmem:[%s1999 + $0xb0] sm:$0xf]
          %v2045 = vld [vmem:[%s1999 + $0xb4] sm:$0xf]
          %v2046 = vld [vmem:[%s1999 + $0xb8] sm:$0xf]
          %v2047 = vld [vmem:[%s1999 + $0xbc] sm:$0xf]
          %v2096 = vunpack.c.l.b16 %v2000
          %v2097 = vunpack.c.l.b16 %v2001
          %v2098 = vunpack.c.l.b16 %v2002
          %v2099 = vunpack.c.l.b16 %v2003
          %v2100 = vunpack.c.l.b16 %v2004
          %v2101 = vunpack.c.l.b16 %v2005
          %v2102 = vunpack.c.l.b16 %v2006
          %v2103 = vunpack.c.l.b16 %v2007
          %v2104 = vunpack.c.l.b16 %v2008
          %v2105 = vunpack.c.l.b16 %v2009
          %v2106 = vunpack.c.l.b16 %v2010
          %v2107 = vunpack.c.l.b16 %v2011
          %v2108 = vunpack.c.l.b16 %v2012
          %v2109 = vunpack.c.l.b16 %v2013
          %v2110 = vunpack.c.l.b16 %v2014
          %v2111 = vunpack.c.l.b16 %v2015
          %v2112 = vunpack.c.l.b16 %v2016
          %v2113 = vunpack.c.l.b16 %v2017
          %v2114 = vunpack.c.l.b16 %v2018
          %v2115 = vunpack.c.l.b16 %v2019
          %v2116 = vunpack.c.l.b16 %v2020
          %v2117 = vunpack.c.l.b16 %v2021
          %v2118 = vunpack.c.l.b16 %v2022
          %v2119 = vunpack.c.l.b16 %v2023
          %v2120 = vunpack.c.l.b16 %v2024
          %v2121 = vunpack.c.l.b16 %v2025
          %v2122 = vunpack.c.l.b16 %v2026
          %v2123 = vunpack.c.l.b16 %v2027
          %v2124 = vunpack.c.l.b16 %v2028
          %v2125 = vunpack.c.l.b16 %v2029
          %v2126 = vunpack.c.l.b16 %v2030
          %v2127 = vunpack.c.l.b16 %v2031
          %v2128 = vunpack.c.l.b16 %v2032
          %v2129 = vunpack.c.l.b16 %v2033
          %v2130 = vunpack.c.l.b16 %v2034
          %v2131 = vunpack.c.l.b16 %v2035
          %v2132 = vunpack.c.l.b16 %v2036
          %v2133 = vunpack.c.l.b16 %v2037
          %v2134 = vunpack.c.l.b16 %v2038
          %v2135 = vunpack.c.l.b16 %v2039
          %v2136 = vunpack.c.l.b16 %v2040
          %v2137 = vunpack.c.l.b16 %v2041
          %v2138 = vunpack.c.l.b16 %v2042
          %v2139 = vunpack.c.l.b16 %v2043
          %v2140 = vunpack.c.l.b16 %v2044
          %v2141 = vunpack.c.l.b16 %v2045
          %v2142 = vunpack.c.l.b16 %v2046
          %v2143 = vunpack.c.l.b16 %v2047
          %v2144 = vpack.c.b16 %v2097, %v2096
          %v2145 = vpack.c.b16 %v2099, %v2098
          %v2146 = vpack.c.b16 %v2101, %v2100
          %v2147 = vpack.c.b16 %v2103, %v2102
          %v2148 = vpack.c.b16 %v2105, %v2104
          %v2149 = vpack.c.b16 %v2107, %v2106
          %v2150 = vpack.c.b16 %v2109, %v2108
          %v2151 = vpack.c.b16 %v2111, %v2110
          %v2152 = vpack.c.b16 %v2113, %v2112
          %v2153 = vpack.c.b16 %v2115, %v2114
          %v2154 = vpack.c.b16 %v2117, %v2116
          %v2155 = vpack.c.b16 %v2119, %v2118
          %v2156 = vpack.c.b16 %v2121, %v2120
          %v2157 = vpack.c.b16 %v2123, %v2122
          %v2158 = vpack.c.b16 %v2125, %v2124
          %v2159 = vpack.c.b16 %v2127, %v2126
          %v2160 = vpack.c.b16 %v2129, %v2128
          %v2161 = vpack.c.b16 %v2131, %v2130
          %v2162 = vpack.c.b16 %v2133, %v2132
          %v2163 = vpack.c.b16 %v2135, %v2134
          %v2164 = vpack.c.b16 %v2137, %v2136
          %v2165 = vpack.c.b16 %v2139, %v2138
          %v2166 = vpack.c.b16 %v2141, %v2140
          %v2167 = vpack.c.b16 %v2143, %v2142
          %2192 = vmatprep.subr.bf16.mxu0 0
          %2193 = vmatpush1.bf16.msra.mxu0 %v2144
          %2194 = vmatprep.subr.bf16.mxu0 0
          %2195 = vmatpush1.bf16.msra.mxu0 %v2145
          %2196 = vmatprep.subr.bf16.mxu0 0
          %2197 = vmatpush1.bf16.msra.mxu0 %v2146
          %2198 = vmatprep.subr.bf16.mxu0 0
          %2199 = vmatpush1.bf16.msra.mxu0 %v2147
          %2200 = vmatprep.subr.bf16.mxu0 0
          %2201 = vmatpush1.bf16.msra.mxu0 %v2148
          %2202 = vmatprep.subr.bf16.mxu0 0
          %2203 = vmatpush1.bf16.msra.mxu0 %v2149
          %2204 = vmatprep.subr.bf16.mxu0 0
          %2205 = vmatpush1.bf16.msra.mxu0 %v2150
          %2206 = vmatprep.subr.bf16.mxu0 0
          %2207 = vmatpush1.bf16.msra.mxu0 %v2151
          %2208 = vmatprep.subr.bf16.mxu0 0
          %2209 = vmatpush1.bf16.msra.mxu0 %v2152
          %2210 = vmatprep.subr.bf16.mxu0 0
          %2211 = vmatpush1.bf16.msra.mxu0 %v2153
          %2212 = vmatprep.subr.bf16.mxu0 0
          %2213 = vmatpush1.bf16.msra.mxu0 %v2154
          %2214 = vmatprep.subr.bf16.mxu0 0
          %2215 = vmatpush1.bf16.msra.mxu0 %v2155
          %2216 = vmatprep.subr.bf16.mxu0 0
          %2217 = vmatpush1.bf16.msra.mxu0 %v2156
          %2218 = vmatprep.subr.bf16.mxu0 0
          %2219 = vmatpush1.bf16.msra.mxu0 %v2157
          %2220 = vmatprep.subr.bf16.mxu0 0
          %2221 = vmatpush1.bf16.msra.mxu0 %v2158
          %2222 = vmatprep.subr.bf16.mxu0 0
          %2223 = vmatpush1.bf16.msra.mxu0 %v2159
          %2224 = vmatprep.mubr.bf16.mxu0 %v1072
          %2225 = vmatmul.mubr.bf16.gmra.mrb[0].mxu0 %v998
          %v2226 = vpop.f32.mrb[0].mxu0
          %v2227 = vadd.f32 0.0, %v2226
          %v2228 = vpop.f32.mrb[0].mxu0
          %v2229 = vpop.f32.mrb[0].mxu0
          %v2230 = vadd.f32 0.0, %v2229
          %v2231 = vpop.f32.mrb[0].mxu0
          %2232 = vmatprep.mubr.bf16.mxu0 %v1084
          %2233 = vmatmul.mubr.bf16.gmra.mrb[0].mxu0 %v999
          %v2234 = vpop.f32.mrb[0].mxu0
          %v2235 = vadd.f32 0.0, %v2234
          %v2236 = vpop.f32.mrb[0].mxu0
          %v2237 = vpop.f32.mrb[0].mxu0
          %v2238 = vadd.f32 0.0, %v2237
          %v2239 = vpop.f32.mrb[0].mxu0
          %2240 = vmatprep.mubr.bf16.mxu0 %v1096
          %2241 = vmatmul.mubr.bf16.gmra.mrb[0].mxu0 %v1000
          %v2242 = vpop.f32.mrb[0].mxu0
          %v2243 = vadd.f32 0.0, %v2242
          %v2244 = vpop.f32.mrb[0].mxu0
          %v2245 = vpop.f32.mrb[0].mxu0
          %v2246 = vadd.f32 0.0, %v2245
          %v2247 = vpop.f32.mrb[0].mxu0
          %2248 = vmatprep.mubr.bf16.mxu0 %v1108
          %2249 = vmatmul.mubr.bf16.gmra.mrb[0].mxu0 %v1001
          %v2250 = vpop.f32.mrb[0].mxu0
          %v2251 = vadd.f32 0.0, %v2250
          %v2252 = vpop.f32.mrb[0].mxu0
          %v2253 = vpop.f32.mrb[0].mxu0
          %v2254 = vadd.f32 0.0, %v2253
          %v2255 = vpop.f32.mrb[0].mxu0
          %2256 = vmatprep.mubr.bf16.mxu0 %v1120
          %2257 = vmatmul.mubr.bf16.gmra.mrb[0].mxu0 %v1002
          %v2258 = vpop.f32.mrb[0].mxu0
          %v2259 = vadd.f32 0.0, %v2258
          %v2260 = vpop.f32.mrb[0].mxu0
          %v2261 = vpop.f32.mrb[0].mxu0
          %v2262 = vadd.f32 0.0, %v2261
          %v2263 = vpop.f32.mrb[0].mxu0
          %2264 = vmatprep.mubr.bf16.mxu0 %v1132
          %2265 = vmatmul.mubr.bf16.gmra.mrb[0].mxu0 %v1003
          %v2266 = vpop.f32.mrb[0].mxu0
          %v2267 = vadd.f32 0.0, %v2266
          %v2268 = vpop.f32.mrb[0].mxu0
          %v2269 = vpop.f32.mrb[0].mxu0
          %v2270 = vadd.f32 0.0, %v2269
          %v2271 = vpop.f32.mrb[0].mxu0
          %2272 = vmatprep.mubr.bf16.mxu0 %v1242
          %2273 = vmatmul.mubr.bf16.gmra.mrb[0].mxu0 %v1226
          %v2274 = vpop.f32.mrb[0].mxu0
          %v2275 = vadd.f32 0.0, %v2274
          %v2276 = vpop.f32.mrb[0].mxu0
          %v2277 = vpop.f32.mrb[0].mxu0
          %v2278 = vadd.f32 0.0, %v2277
          %v2279 = vpop.f32.mrb[0].mxu0
          %2280 = vmatprep.mubr.bf16.mxu0 %v1993
          %2281 = vmatmul.mubr.bf16.gmra.mrb[0].mxu0 %v1977
          %v2282 = vpop.f32.mrb[0].mxu0
          %v2283 = vadd.f32 0.0, %v2282
          %v2284 = vpop.f32.mrb[0].mxu0
          %v2285 = vpop.f32.mrb[0].mxu0
          %v2286 = vadd.f32 0.0, %v2285
          %v2287 = vpop.f32.mrb[0].mxu0
          %2288 = vdwg.mxu0
          %2289 = vmatprep.subr.bf16.mxu0 0
          %2290 = vmatpush1.bf16.msra.mxu0 %v2160
          %2291 = vmatprep.subr.bf16.mxu0 0
          %2292 = vmatpush1.bf16.msra.mxu0 %v2161
          %2293 = vmatprep.subr.bf16.mxu0 0
          %2294 = vmatpush1.bf16.msra.mxu0 %v2162
          %2295 = vmatprep.subr.bf16.mxu0 0
          %2296 = vmatpush1.bf16.msra.mxu0 %v2163
          %2297 = vmatprep.subr.bf16.mxu0 0
          %2298 = vmatpush1.bf16.msra.mxu0 %v2164
          %2299 = vmatprep.subr.bf16.mxu0 0
          %2300 = vmatpush1.bf16.msra.mxu0 %v2165
          %2301 = vmatprep.subr.bf16.mxu0 0
          %2302 = vmatpush1.bf16.msra.mxu0 %v2166
          %2303 = vmatprep.subr.bf16.mxu0 0
          %2304 = vmatpush1.bf16.msra.mxu0 %v2167
          %2305 = vmatprep.subr.bf16.mxu0 0
          %2306 = vmatpush1.bf16.msra.mxu0 0
          %2307 = vmatprep.subr.bf16.mxu0 0
          %2308 = vmatpush1.bf16.msra.mxu0 0
          %2309 = vmatprep.subr.bf16.mxu0 0
          %2310 = vmatpush1.bf16.msra.mxu0 0
          %2311 = vmatprep.subr.bf16.mxu0 0
          %2312 = vmatpush1.bf16.msra.mxu0 0
          %2313 = vmatprep.subr.bf16.mxu0 0
          %2314 = vmatpush1.bf16.msra.mxu0 0
          %2315 = vmatprep.subr.bf16.mxu0 0
          %2316 = vmatpush1.bf16.msra.mxu0 0
          %2317 = vmatprep.subr.bf16.mxu0 0
          %2318 = vmatpush1.bf16.msra.mxu0 0
          %2319 = vmatprep.subr.bf16.mxu0 0
          %2320 = vmatpush1.bf16.msra.mxu0 0
          %2321 = vmatprep.mubr.bf16.mxu0 0
          %2322 = vmatmul.mubr.bf16.gmra.mrb[0].mxu0 %v1150
          %v2323 = vpop.f32.mrb[0].mxu0
          %v2324 = vadd.f32 %v2227, %v2323
          %v2325 = vpop.f32.mrb[0].mxu0
          %v2326 = vpop.f32.mrb[0].mxu0
          %v2327 = vadd.f32 %v2230, %v2326
          %v2328 = vpop.f32.mrb[0].mxu0
          %2329 = vmatprep.mubr.bf16.mxu0 0
          %2330 = vmatmul.mubr.bf16.gmra.mrb[0].mxu0 %v1153
          %v2331 = vpop.f32.mrb[0].mxu0
          %v2332 = vadd.f32 %v2235, %v2331
          %v2333 = vpop.f32.mrb[0].mxu0
          %v2334 = vpop.f32.mrb[0].mxu0
          %v2335 = vadd.f32 %v2238, %v2334
          %v2336 = vpop.f32.mrb[0].mxu0
          %2337 = vmatprep.mubr.bf16.mxu0 0
          %2338 = vmatmul.mubr.bf16.gmra.mrb[0].mxu0 %v1156
          %v2339 = vpop.f32.mrb[0].mxu0
          %v2340 = vadd.f32 %v2243, %v2339
          %v2341 = vpop.f32.mrb[0].mxu0
          %v2342 = vpop.f32.mrb[0].mxu0
          %v2343 = vadd.f32 %v2246, %v2342
          %v2344 = vpop.f32.mrb[0].mxu0
          %2345 = vmatprep.mubr.bf16.mxu0 0
          %2346 = vmatmul.mubr.bf16.gmra.mrb[0].mxu0 %v1159
          %v2347 = vpop.f32.mrb[0].mxu0
          %v2348 = vadd.f32 %v2251, %v2347
          %v2349 = vpop.f32.mrb[0].mxu0
          %v2350 = vpop.f32.mrb[0].mxu0
          %v2351 = vadd.f32 %v2254, %v2350
          %v2352 = vpop.f32.mrb[0].mxu0
          %2353 = vmatprep.mubr.bf16.mxu0 0
          %2354 = vmatmul.mubr.bf16.gmra.mrb[0].mxu0 %v1162
          %v2355 = vpop.f32.mrb[0].mxu0
          %v2356 = vadd.f32 %v2259, %v2355
          %v2357 = vpop.f32.mrb[0].mxu0
          %v2358 = vpop.f32.mrb[0].mxu0
          %v2359 = vadd.f32 %v2262, %v2358
          %v2360 = vpop.f32.mrb[0].mxu0
          %2361 = vmatprep.mubr.bf16.mxu0 0
          %2362 = vmatmul.mubr.bf16.gmra.mrb[0].mxu0 %v1165
          %v2363 = vpop.f32.mrb[0].mxu0
          %v2364 = vadd.f32 %v2267, %v2363
          %v2365 = vpop.f32.mrb[0].mxu0
          %v2366 = vpop.f32.mrb[0].mxu0
          %v2367 = vadd.f32 %v2270, %v2366
          %v2368 = vpop.f32.mrb[0].mxu0
          %2369 = vmatprep.mubr.bf16.mxu0 0
          %2370 = vmatmul.mubr.bf16.gmra.mrb[0].mxu0 %v1246
          %v2371 = vpop.f32.mrb[0].mxu0
          %v2372 = vadd.f32 %v2275, %v2371
          %v2373 = vpop.f32.mrb[0].mxu0
          %v2374 = vpop.f32.mrb[0].mxu0
          %v2375 = vadd.f32 %v2278, %v2374
          %v2376 = vpop.f32.mrb[0].mxu0
          %2377 = vmatprep.mubr.bf16.mxu0 0
          %2378 = vmatmul.mubr.bf16.gmra.mrb[0].mxu0 %v1997
          %v2379 = vpop.f32.mrb[0].mxu0
          %v2380 = vadd.f32 %v2283, %v2379
          %v2381 = vpop.f32.mrb[0].mxu0
          %v2382 = vpop.f32.mrb[0].mxu0
          %v2383 = vadd.f32 %v2286, %v2382
          %v2384 = vpop.f32.mrb[0].mxu0
          %2385 = vdwg.mxu0
          %v2386 = vadd.f32 %v1911, %v2324
          %v2387 = vadd.f32 %v1914, %v2327
          %v2388 = vadd.f32 %v1919, %v2332
          %v2389 = vadd.f32 %v1922, %v2335
          %v2390 = vadd.f32 %v1927, %v2340
          %v2391 = vadd.f32 %v1930, %v2343
          %v2392 = vadd.f32 %v1935, %v2348
          %v2393 = vadd.f32 %v1938, %v2351
          %v2394 = vadd.f32 %v1943, %v2356
          %v2395 = vadd.f32 %v1946, %v2359
          %v2396 = vadd.f32 %v1951, %v2364
          %v2397 = vadd.f32 %v1954, %v2367
          %v2398 = vadd.f32 %v1959, %v2372
          %v2399 = vadd.f32 %v1962, %v2375
          %v2400 = vadd.f32 %v1967, %v2380
          %v2401 = vadd.f32 %v1970, %v2383
          %v2403 = vlaneseq
          %v2404 = vshrl.u32 %v2403, 7
          %v2405 = vsub.s32 0, %v2404
          %v2406 = vrot.slane %v922, %v2405
          %v2408 = vadd.f32 %v2386, %v2406
          %v2409 = vadd.f32 %v2387, %v2406
          %v2410 = vadd.f32 %v2388, %v2406
          %v2411 = vadd.f32 %v2389, %v2406
          %v2412 = vadd.f32 %v2390, %v2406
          %v2413 = vadd.f32 %v2391, %v2406
          %v2414 = vadd.f32 %v2392, %v2406
          %v2415 = vadd.f32 %v2393, %v2406
          %v2416 = vadd.f32 %v2394, %v2406
          %v2417 = vadd.f32 %v2395, %v2406
          %v2418 = vadd.f32 %v2396, %v2406
          %v2419 = vadd.f32 %v2397, %v2406
          %v2420 = vadd.f32 %v2398, %v2406
          %v2421 = vadd.f32 %v2399, %v2406
          %v2422 = vadd.f32 %v2400, %v2406
          %v2423 = vadd.f32 %v2401, %v2406
          %v2424 = vmax.f32 %v2408, 0.0
          %v2425 = vmax.f32 %v2409, 0.0
          %v2426 = vmax.f32 %v2410, 0.0
          %v2427 = vmax.f32 %v2411, 0.0
          %v2428 = vmax.f32 %v2412, 0.0
          %v2429 = vmax.f32 %v2413, 0.0
          %v2430 = vmax.f32 %v2414, 0.0
          %v2431 = vmax.f32 %v2415, 0.0
          %v2432 = vmax.f32 %v2416, 0.0
          %v2433 = vmax.f32 %v2417, 0.0
          %v2434 = vmax.f32 %v2418, 0.0
          %v2435 = vmax.f32 %v2419, 0.0
          %v2436 = vmax.f32 %v2420, 0.0
          %v2437 = vmax.f32 %v2421, 0.0
          %v2438 = vmax.f32 %v2422, 0.0
          %v2439 = vmax.f32 %v2423, 0.0
          %v2440 = vpack.c.bf16 %v2425, %v2424
          %v2441 = vpack.c.bf16 %v2427, %v2426
          %v2442 = vpack.c.bf16 %v2429, %v2428
          %v2443 = vpack.c.bf16 %v2431, %v2430
          %v2444 = vpack.c.bf16 %v2433, %v2432
          %v2445 = vpack.c.bf16 %v2435, %v2434
          %v2446 = vpack.c.bf16 %v2437, %v2436
          %v2447 = vpack.c.bf16 %v2439, %v2438
          %s2448 = sadd.s32 %s930, 1
          %v2457 = vunpack.c.l.b16 %v2440
          %v2458 = vunpack.c.h.b16 %v2440
          %v2459 = vunpack.c.l.b16 %v2441
          %v2460 = vunpack.c.h.b16 %v2441
          %v2461 = vunpack.c.l.b16 %v2442
          %v2462 = vunpack.c.h.b16 %v2442
          %v2463 = vunpack.c.l.b16 %v2443
          %v2464 = vunpack.c.h.b16 %v2443
          %v2465 = vunpack.c.l.b16 %v2444
          %v2466 = vunpack.c.h.b16 %v2444
          %v2467 = vunpack.c.l.b16 %v2445
          %v2468 = vunpack.c.h.b16 %v2445
          %v2469 = vunpack.c.l.b16 %v2446
          %v2470 = vunpack.c.h.b16 %v2446
          %v2471 = vunpack.c.l.b16 %v2447
          %v2472 = vunpack.c.h.b16 %v2447
          %v2473 = vpack.c.b16 %v2457, %v2457
          %v2474 = vpack.c.b16 %v2458, %v2458
          %v2475 = vpack.c.b16 %v2459, %v2459
          %v2476 = vpack.c.b16 %v2460, %v2460
          %v2477 = vpack.c.b16 %v2461, %v2461
          %v2478 = vpack.c.b16 %v2462, %v2462
          %v2479 = vpack.c.b16 %v2463, %v2463
          %v2480 = vpack.c.b16 %v2464, %v2464
          %v2481 = vpack.c.b16 %v2465, %v2465
          %v2482 = vpack.c.b16 %v2466, %v2466
          %v2483 = vpack.c.b16 %v2467, %v2467
          %v2484 = vpack.c.b16 %v2468, %v2468
          %v2485 = vpack.c.b16 %v2469, %v2469
          %v2486 = vpack.c.b16 %v2470, %v2470
          %v2487 = vpack.c.b16 %v2471, %v2471
          %v2488 = vpack.c.b16 %v2472, %v2472
          %v2490 = vshrl.u32 %v2473, 16
          %v2492 = vrot.slane %v2490, 7
          %v2493 = vshll.u32 %v2473, 16
          %v2495 = vor.u32 %v2492, %v2493
          %v2496 = vrot.slane %v2492, 4
          %v2498 = vshrl.u32 %v2474, 16
          %v2500 = vrot.slane %v2498, 7
          %v2501 = vshll.u32 %v2474, 16
          %v2503 = vor.u32 %v2500, %v2501
          %v2504 = vsel %vm487, %v2496, %v2503
          %v2505 = vrot.slane %v2500, 4
          %v2507 = vshrl.u32 %v2475, 16
          %v2509 = vrot.slane %v2507, 7
          %v2510 = vshll.u32 %v2475, 16
          %v2512 = vor.u32 %v2509, %v2510
          %v2513 = vrot.slane %v2509, 4
          %v2515 = vshrl.u32 %v2476, 16
          %v2517 = vrot.slane %v2515, 7
          %v2518 = vshll.u32 %v2476, 16
          %v2520 = vor.u32 %v2517, %v2518
          %v2521 = vsel %vm487, %v2513, %v2520
          %v2522 = vrot.slane %v2517, 4
          %v2524 = vshrl.u32 %v2477, 16
          %v2526 = vrot.slane %v2524, 7
          %v2527 = vshll.u32 %v2477, 16
          %v2529 = vor.u32 %v2526, %v2527
          %v2530 = vrot.slane %v2526, 4
          %v2532 = vshrl.u32 %v2478, 16
          %v2534 = vrot.slane %v2532, 7
          %v2535 = vshll.u32 %v2478, 16
          %v2537 = vor.u32 %v2534, %v2535
          %v2538 = vsel %vm487, %v2530, %v2537
          %v2539 = vrot.slane %v2534, 4
          %v2541 = vshrl.u32 %v2479, 16
          %v2543 = vrot.slane %v2541, 7
          %v2544 = vshll.u32 %v2479, 16
          %v2546 = vor.u32 %v2543, %v2544
          %v2547 = vrot.slane %v2543, 4
          %v2549 = vshrl.u32 %v2480, 16
          %v2551 = vrot.slane %v2549, 7
          %v2552 = vshll.u32 %v2480, 16
          %v2554 = vor.u32 %v2551, %v2552
          %v2555 = vsel %vm487, %v2547, %v2554
          %v2556 = vrot.slane %v2551, 4
          %v2558 = vshrl.u32 %v2481, 16
          %v2560 = vrot.slane %v2558, 7
          %v2561 = vshll.u32 %v2481, 16
          %v2563 = vor.u32 %v2560, %v2561
          %v2564 = vrot.slane %v2560, 4
          %v2566 = vshrl.u32 %v2482, 16
          %v2568 = vrot.slane %v2566, 7
          %v2569 = vshll.u32 %v2482, 16
          %v2571 = vor.u32 %v2568, %v2569
          %v2572 = vsel %vm487, %v2564, %v2571
          %v2573 = vrot.slane %v2568, 4
          %v2575 = vshrl.u32 %v2483, 16
          %v2577 = vrot.slane %v2575, 7
          %v2578 = vshll.u32 %v2483, 16
          %v2580 = vor.u32 %v2577, %v2578
          %v2581 = vrot.slane %v2577, 4
          %v2583 = vshrl.u32 %v2484, 16
          %v2585 = vrot.slane %v2583, 7
          %v2586 = vshll.u32 %v2484, 16
          %v2588 = vor.u32 %v2585, %v2586
          %v2589 = vsel %vm487, %v2581, %v2588
          %v2590 = vrot.slane %v2585, 4
          %v2592 = vshrl.u32 %v2485, 16
          %v2594 = vrot.slane %v2592, 7
          %v2595 = vshll.u32 %v2485, 16
          %v2597 = vor.u32 %v2594, %v2595
          %v2598 = vrot.slane %v2594, 4
          %v2600 = vshrl.u32 %v2486, 16
          %v2602 = vrot.slane %v2600, 7
          %v2603 = vshll.u32 %v2486, 16
          %v2605 = vor.u32 %v2602, %v2603
          %v2606 = vsel %vm487, %v2598, %v2605
          %v2607 = vrot.slane %v2602, 4
          %v2609 = vshrl.u32 %v2487, 16
          %v2611 = vrot.slane %v2609, 7
          %v2612 = vshll.u32 %v2487, 16
          %v2614 = vor.u32 %v2611, %v2612
          %v2615 = vrot.slane %v2611, 4
          %v2617 = vshrl.u32 %v2488, 16
          %v2619 = vrot.slane %v2617, 7
          %v2620 = vshll.u32 %v2488, 16
          %v2622 = vor.u32 %v2619, %v2620
          %v2623 = vsel %vm487, %v2615, %v2622
          %v2624 = vrot.slane %v2619, 4
          %s2649 = smul.u32 %s2448, 3
          %s2650 = smul.addr %s2649, 4
          %s2651 = scalar_lea.vmem [#allocation3], %s2650
          %v2652 = vld [vmem:[%s2651] sm:$0xf]
          %v2653 = vsel %vm809, %v2495, %v2652
          %2654 = vst [vmem:[%s2651] sm:$0xf] %v2653
          %2655 = vst [vmem:[%s2651 + $0x4] sm:$0xf] %v2504
          %v2656 = vld [vmem:[%s2651 + $0x8] sm:$0x1]
          %v2657 = vsel %vm251, %v2505, %v2656
          %2658 = vst [vmem:[%s2651 + $0x8] sm:$0x1] %v2657
          %v2659 = vld [vmem:[%s2651 + $0xc] sm:$0xf]
          %v2660 = vsel %vm809, %v2512, %v2659
          %2661 = vst [vmem:[%s2651 + $0xc] sm:$0xf] %v2660
          %2662 = vst [vmem:[%s2651 + $0x10] sm:$0xf] %v2521
          %v2663 = vld [vmem:[%s2651 + $0x14] sm:$0x1]
          %v2664 = vsel %vm251, %v2522, %v2663
          %2665 = vst [vmem:[%s2651 + $0x14] sm:$0x1] %v2664
          %v2666 = vld [vmem:[%s2651 + $0x18] sm:$0xf]
          %v2667 = vsel %vm809, %v2529, %v2666
          %2668 = vst [vmem:[%s2651 + $0x18] sm:$0xf] %v2667
          %2669 = vst [vmem:[%s2651 + $0x1c] sm:$0xf] %v2538
          %v2670 = vld [vmem:[%s2651 + $0x20] sm:$0x1]
          %v2671 = vsel %vm251, %v2539, %v2670
          %2672 = vst [vmem:[%s2651 + $0x20] sm:$0x1] %v2671
          %v2673 = vld [vmem:[%s2651 + $0x24] sm:$0xf]
          %v2674 = vsel %vm809, %v2546, %v2673
          %2675 = vst [vmem:[%s2651 + $0x24] sm:$0xf] %v2674
          %2676 = vst [vmem:[%s2651 + $0x28] sm:$0xf] %v2555
          %v2677 = vld [vmem:[%s2651 + $0x2c] sm:$0x1]
          %v2678 = vsel %vm251, %v2556, %v2677
          %2679 = vst [vmem:[%s2651 + $0x2c] sm:$0x1] %v2678
          %v2680 = vld [vmem:[%s2651 + $0x30] sm:$0xf]
          %v2681 = vsel %vm809, %v2563, %v2680
          %2682 = vst [vmem:[%s2651 + $0x30] sm:$0xf] %v2681
          %2683 = vst [vmem:[%s2651 + $0x34] sm:$0xf] %v2572
          %v2684 = vld [vmem:[%s2651 + $0x38] sm:$0x1]
          %v2685 = vsel %vm251, %v2573, %v2684
          %2686 = vst [vmem:[%s2651 + $0x38] sm:$0x1] %v2685
          %v2687 = vld [vmem:[%s2651 + $0x3c] sm:$0xf]
          %v2688 = vsel %vm809, %v2580, %v2687
          %2689 = vst [vmem:[%s2651 + $0x3c] sm:$0xf] %v2688
          %2690 = vst [vmem:[%s2651 + $0x40] sm:$0xf] %v2589
          %v2691 = vld [vmem:[%s2651 + $0x44] sm:$0x1]
          %v2692 = vsel %vm251, %v2590, %v2691
          %2693 = vst [vmem:[%s2651 + $0x44] sm:$0x1] %v2692
          %v2694 = vld [vmem:[%s2651 + $0x48] sm:$0xf]
          %v2695 = vsel %vm809, %v2597, %v2694
          %2696 = vst [vmem:[%s2651 + $0x48] sm:$0xf] %v2695
          %2697 = vst [vmem:[%s2651 + $0x4c] sm:$0xf] %v2606
          %v2698 = vld [vmem:[%s2651 + $0x50] sm:$0x1]
          %v2699 = vsel %vm251, %v2607, %v2698
          %2700 = vst [vmem:[%s2651 + $0x50] sm:$0x1] %v2699
          %v2701 = vld [vmem:[%s2651 + $0x54] sm:$0xf]
          %v2702 = vsel %vm809, %v2614, %v2701
          %2703 = vst [vmem:[%s2651 + $0x54] sm:$0xf] %v2702
          %2704 = vst [vmem:[%s2651 + $0x58] sm:$0xf] %v2623
          %v2705 = vld [vmem:[%s2651 + $0x5c] sm:$0x1]
          %v2706 = vsel %vm251, %v2624, %v2705
          %2707 = vst [vmem:[%s2651 + $0x5c] sm:$0x1] %v2706
        $region49: #{basic_block_forward.1} parent=39 // loop_footer
          %s929 = sadd.s32 1, %s925
        $region50: #{basic_block_forward.1} parent=39 // loop_footer_branch
          %924 = sbr.rel target = $region46
        $region51: #{basic_block_forward.1} parent=39 // loop_exit
          _
        loop: start=0, step=1, limit=2
        $region52: #{basic_block_forward.1} parent=39 // loop_pre_header
          _
        $region53: #{basic_block_forward.1} parent=39 // loop_header
          %s2709 = sphi 0, %s2713
          %p2710 = scmp.ge.s32.totalorder %s2709, 2
        $region54: #{basic_block_forward.1} parent=39 // loop_header_branch
          %2712 = sbr.rel (%p2710) target = $region58
        $region55: #{basic_block_forward.1} parent=39 // loop_body
          %s2714 = smul.u32 %s2709, 8
          %s2715 = smul.u32 %s2714, 3
          %s2716 = smul.addr %s2715, 4
          %s2717 = scalar_lea.vmem [#allocation3], %s2716
          %v2718 = vld [vmem:[%s2717] sm:$0xf]
          %v2719 = vld [vmem:[%s2717 + $0x4] sm:$0xf]
          %v2720 = vld [vmem:[%s2717 + $0x8] sm:$0x1]
          %v2721 = vld [vmem:[%s2717 + $0xc] sm:$0xf]
          %v2722 = vld [vmem:[%s2717 + $0x10] sm:$0xf]
          %v2723 = vld [vmem:[%s2717 + $0x14] sm:$0x1]
          %v2724 = vld [vmem:[%s2717 + $0x18] sm:$0xf]
          %v2725 = vld [vmem:[%s2717 + $0x1c] sm:$0xf]
          %v2726 = vld [vmem:[%s2717 + $0x20] sm:$0x1]
          %v2727 = vld [vmem:[%s2717 + $0x24] sm:$0xf]
          %v2728 = vld [vmem:[%s2717 + $0x28] sm:$0xf]
          %v2729 = vld [vmem:[%s2717 + $0x2c] sm:$0x1]
          %v2730 = vld [vmem:[%s2717 + $0x30] sm:$0xf]
          %v2731 = vld [vmem:[%s2717 + $0x34] sm:$0xf]
          %v2732 = vld [vmem:[%s2717 + $0x38] sm:$0x1]
          %v2733 = vld [vmem:[%s2717 + $0x3c] sm:$0xf]
          %v2734 = vld [vmem:[%s2717 + $0x40] sm:$0xf]
          %v2735 = vld [vmem:[%s2717 + $0x44] sm:$0x1]
          %v2736 = vld [vmem:[%s2717 + $0x48] sm:$0xf]
          %v2737 = vld [vmem:[%s2717 + $0x4c] sm:$0xf]
          %v2738 = vld [vmem:[%s2717 + $0x50] sm:$0x1]
          %v2739 = vld [vmem:[%s2717 + $0x54] sm:$0xf]
          %v2740 = vld [vmem:[%s2717 + $0x58] sm:$0xf]
          %v2741 = vld [vmem:[%s2717 + $0x5c] sm:$0x1]
          %v2742 = vld [vmem:[%s2717 + $0x60] sm:$0xf]
          %v2743 = vld [vmem:[%s2717 + $0x64] sm:$0xf]
          %v2744 = vld [vmem:[%s2717 + $0x68] sm:$0x1]
          %v2745 = vld [vmem:[%s2717 + $0x6c] sm:$0xf]
          %v2746 = vld [vmem:[%s2717 + $0x70] sm:$0xf]
          %v2747 = vld [vmem:[%s2717 + $0x74] sm:$0x1]
          %v2764 = vunpack.c.l.b16 %v2718
          %v2765 = vunpack.c.l.b16 %v2719
          %v2766 = vunpack.c.l.b16 %v2721
          %v2767 = vunpack.c.l.b16 %v2722
          %v2768 = vunpack.c.l.b16 %v2724
          %v2769 = vunpack.c.l.b16 %v2725
          %v2770 = vunpack.c.l.b16 %v2727
          %v2771 = vunpack.c.l.b16 %v2728
          %v2772 = vunpack.c.l.b16 %v2730
          %v2773 = vunpack.c.l.b16 %v2731
          %v2774 = vunpack.c.l.b16 %v2733
          %v2775 = vunpack.c.l.b16 %v2734
          %v2776 = vunpack.c.l.b16 %v2736
          %v2777 = vunpack.c.l.b16 %v2737
          %v2778 = vunpack.c.l.b16 %v2739
          %v2779 = vunpack.c.l.b16 %v2740
          %v2780 = vpack.c.b16 %v2765, %v2764
          %v2781 = vpack.c.b16 %v2767, %v2766
          %v2782 = vpack.c.b16 %v2769, %v2768
          %v2783 = vpack.c.b16 %v2771, %v2770
          %v2784 = vpack.c.b16 %v2773, %v2772
          %v2785 = vpack.c.b16 %v2775, %v2774
          %v2786 = vpack.c.b16 %v2777, %v2776
          %v2787 = vpack.c.b16 %v2779, %v2778
          %v2804 = vunpack.c.l.b16 %v2720
          %v2805 = vunpack.c.l.b16 %v2723
          %v2806 = vunpack.c.l.b16 %v2726
          %v2807 = vunpack.c.l.b16 %v2729
          %v2808 = vunpack.c.l.b16 %v2732
          %v2809 = vunpack.c.l.b16 %v2735
          %v2810 = vunpack.c.l.b16 %v2738
          %v2811 = vunpack.c.l.b16 %v2741
          %v2812 = vpack.c.b16 %v2804, %v2804
          %v2813 = vpack.c.b16 %v2805, %v2805
          %v2814 = vpack.c.b16 %v2806, %v2806
          %v2815 = vpack.c.b16 %v2807, %v2807
          %v2816 = vpack.c.b16 %v2808, %v2808
          %v2817 = vpack.c.b16 %v2809, %v2809
          %v2818 = vpack.c.b16 %v2810, %v2810
          %v2819 = vpack.c.b16 %v2811, %v2811
          %vm2820 = vsmask.f32 7424
          %v2822 = vshrl.u32 %v2780, 16
          %v2824 = vshll.u32 %v2780, 16
          %v2826 = vrot.slane %v2824, 1
          %v2827 = vor.u32 %v2822, %v2826
          %v2829 = vshll.u32 %v2812, 16
          %v2831 = vrot.slane %v2829, 1
          %v2832 = vsel %vm2820, %v2827, %v2831
          %v2834 = vshrl.u32 %v2781, 16
          %v2836 = vshll.u32 %v2781, 16
          %v2838 = vrot.slane %v2836, 1
          %v2839 = vor.u32 %v2834, %v2838
          %v2841 = vshll.u32 %v2813, 16
          %v2843 = vrot.slane %v2841, 1
          %v2844 = vsel %vm2820, %v2839, %v2843
          %v2846 = vshrl.u32 %v2782, 16
          %v2848 = vshll.u32 %v2782, 16
          %v2850 = vrot.slane %v2848, 1
          %v2851 = vor.u32 %v2846, %v2850
          %v2853 = vshll.u32 %v2814, 16
          %v2855 = vrot.slane %v2853, 1
          %v2856 = vsel %vm2820, %v2851, %v2855
          %v2858 = vshrl.u32 %v2783, 16
          %v2860 = vshll.u32 %v2783, 16
          %v2862 = vrot.slane %v2860, 1
          %v2863 = vor.u32 %v2858, %v2862
          %v2865 = vshll.u32 %v2815, 16
          %v2867 = vrot.slane %v2865, 1
          %v2868 = vsel %vm2820, %v2863, %v2867
          %v2870 = vshrl.u32 %v2784, 16
          %v2872 = vshll.u32 %v2784, 16
          %v2874 = vrot.slane %v2872, 1
          %v2875 = vor.u32 %v2870, %v2874
          %v2877 = vshll.u32 %v2816, 16
          %v2879 = vrot.slane %v2877, 1
          %v2880 = vsel %vm2820, %v2875, %v2879
          %v2882 = vshrl.u32 %v2785, 16
          %v2884 = vshll.u32 %v2785, 16
          %v2886 = vrot.slane %v2884, 1
          %v2887 = vor.u32 %v2882, %v2886
          %v2889 = vshll.u32 %v2817, 16
          %v2891 = vrot.slane %v2889, 1
          %v2892 = vsel %vm2820, %v2887, %v2891
          %v2894 = vshrl.u32 %v2786, 16
          %v2896 = vshll.u32 %v2786, 16
          %v2898 = vrot.slane %v2896, 1
          %v2899 = vor.u32 %v2894, %v2898
          %v2901 = vshll.u32 %v2818, 16
          %v2903 = vrot.slane %v2901, 1
          %v2904 = vsel %vm2820, %v2899, %v2903
          %v2906 = vshrl.u32 %v2787, 16
          %v2908 = vshll.u32 %v2787, 16
          %v2910 = vrot.slane %v2908, 1
          %v2911 = vor.u32 %v2906, %v2910
          %v2913 = vshll.u32 %v2819, 16
          %v2915 = vrot.slane %v2913, 1
          %v2916 = vsel %vm2820, %v2911, %v2915
          %vm2925 = vcmask 1046528
          %v2926 = vrot.slane %v2780, 1
          %v2927 = vrot.slane %v2812, 1
          %v2928 = vsel %vm2925, %v2926, %v2927
          %v2929 = vrot.slane %v2781, 1
          %v2930 = vrot.slane %v2813, 1
          %v2931 = vsel %vm2925, %v2929, %v2930
          %v2932 = vrot.slane %v2782, 1
          %v2933 = vrot.slane %v2814, 1
          %v2934 = vsel %vm2925, %v2932, %v2933
          %v2935 = vrot.slane %v2783, 1
          %v2936 = vrot.slane %v2815, 1
          %v2937 = vsel %vm2925, %v2935, %v2936
          %v2938 = vrot.slane %v2784, 1
          %v2939 = vrot.slane %v2816, 1
          %v2940 = vsel %vm2925, %v2938, %v2939
          %v2941 = vrot.slane %v2785, 1
          %v2942 = vrot.slane %v2817, 1
          %v2943 = vsel %vm2925, %v2941, %v2942
          %v2944 = vrot.slane %v2786, 1
          %v2945 = vrot.slane %v2818, 1
          %v2946 = vsel %vm2925, %v2944, %v2945
          %v2947 = vrot.slane %v2787, 1
          %v2948 = vrot.slane %v2819, 1
          %v2949 = vsel %vm2925, %v2947, %v2948
          %v2958 = vld [vmem:[%s2] sm:$0xf]
          %v2959 = vld [vmem:[%s2 + $0x4] sm:$0xf]
          %v2960 = vld [vmem:[%s2 + $0x8] sm:$0xf]
          %v2961 = vld [vmem:[%s2 + $0xc] sm:$0xf]
          %v2962 = vld [vmem:[%s2 + $0x10] sm:$0xf]
          %v2963 = vld [vmem:[%s2 + $0x14] sm:$0xf]
          %v2964 = vld [vmem:[%s2 + $0x18] sm:$0xf]
          %v2965 = vld [vmem:[%s2 + $0x1c] sm:$0xf]
          %v2966 = vld [vmem:[%s2 + $0x20] sm:$0xf]
          %v2967 = vld [vmem:[%s2 + $0x24] sm:$0xf]
          %v2968 = vld [vmem:[%s2 + $0x28] sm:$0xf]
          %v2969 = vld [vmem:[%s2 + $0x2c] sm:$0xf]
          %v2970 = vld [vmem:[%s2 + $0x30] sm:$0xf]
          %v2971 = vld [vmem:[%s2 + $0x34] sm:$0xf]
          %v2972 = vld [vmem:[%s2 + $0x38] sm:$0xf]
          %v2973 = vld [vmem:[%s2 + $0x3c] sm:$0xf]
          %v2974 = vld [vmem:[%s2 + $0x40] sm:$0xf]
          %v2975 = vld [vmem:[%s2 + $0x44] sm:$0xf]
          %v2976 = vld [vmem:[%s2 + $0x48] sm:$0xf]
          %v2977 = vld [vmem:[%s2 + $0x4c] sm:$0xf]
          %v2978 = vld [vmem:[%s2 + $0x50] sm:$0xf]
          %v2979 = vld [vmem:[%s2 + $0x54] sm:$0xf]
          %v2980 = vld [vmem:[%s2 + $0x58] sm:$0xf]
          %v2981 = vld [vmem:[%s2 + $0x5c] sm:$0xf]
          %v2982 = vld [vmem:[%s2 + $0x60] sm:$0xf]
          %v2983 = vld [vmem:[%s2 + $0x64] sm:$0xf]
          %v2984 = vld [vmem:[%s2 + $0x68] sm:$0xf]
          %v2985 = vld [vmem:[%s2 + $0x6c] sm:$0xf]
          %v2986 = vld [vmem:[%s2 + $0x70] sm:$0xf]
          %v2987 = vld [vmem:[%s2 + $0x74] sm:$0xf]
          %v2988 = vld [vmem:[%s2 + $0x78] sm:$0xf]
          %v2989 = vld [vmem:[%s2 + $0x7c] sm:$0xf]
          %v2990 = vld [vmem:[%s2 + $0x80] sm:$0xf]
          %v2991 = vld [vmem:[%s2 + $0x84] sm:$0xf]
          %v2992 = vld [vmem:[%s2 + $0x88] sm:$0xf]
          %v2993 = vld [vmem:[%s2 + $0x8c] sm:$0xf]
          %v2994 = vld [vmem:[%s2 + $0x90] sm:$0xf]
          %v2995 = vld [vmem:[%s2 + $0x94] sm:$0xf]
          %v2996 = vld [vmem:[%s2 + $0x98] sm:$0xf]
          %v2997 = vld [vmem:[%s2 + $0x9c] sm:$0xf]
          %v2998 = vld [vmem:[%s2 + $0xa0] sm:$0xf]
          %v2999 = vld [vmem:[%s2 + $0xa4] sm:$0xf]
          %v3000 = vld [vmem:[%s2 + $0xa8] sm:$0xf]
          %v3001 = vld [vmem:[%s2 + $0xac] sm:$0xf]
          %v3002 = vld [vmem:[%s2 + $0xb0] sm:$0xf]
          %v3003 = vld [vmem:[%s2 + $0xb4] sm:$0xf]
          %v3004 = vld [vmem:[%s2 + $0xb8] sm:$0xf]
          %v3005 = vld [vmem:[%s2 + $0xbc] sm:$0xf]
          %v3008 = vunpack.c.l.b16 %v2742
          %v3009 = vunpack.c.l.b16 %v2743
          %v3010 = vpack.c.b16 %v3009, %v3008
          %v3013 = vunpack.c.l.b16 %v2744
          %v3014 = vpack.c.b16 %v3013, %v3013
          %v3016 = vshrl.u32 %v3010, 16
          %v3018 = vshll.u32 %v3010, 16
          %v3020 = vrot.slane %v3018, 1
          %v3021 = vor.u32 %v3016, %v3020
          %v3023 = vshll.u32 %v3014, 16
          %v3025 = vrot.slane %v3023, 1
          %v3026 = vsel %vm2820, %v3021, %v3025
          %v3028 = vrot.slane %v3010, 1
          %v3029 = vrot.slane %v3014, 1
          %v3030 = vsel %vm2925, %v3028, %v3029
          %s3032 = scalar_lea.vmem %s2, 192
          %v3033 = vld [vmem:[%s3032] sm:$0xf]
          %v3034 = vld [vmem:[%s3032 + $0x4] sm:$0xf]
          %v3035 = vld [vmem:[%s3032 + $0x8] sm:$0xf]
          %v3036 = vld [vmem:[%s3032 + $0xc] sm:$0xf]
          %v3037 = vld [vmem:[%s3032 + $0x10] sm:$0xf]
          %v3038 = vld [vmem:[%s3032 + $0x14] sm:$0xf]
          %v3039 = vld [vmem:[%s3032 + $0x18] sm:$0xf]
          %v3040 = vld [vmem:[%s3032 + $0x1c] sm:$0xf]
          %v3041 = vld [vmem:[%s3032 + $0x20] sm:$0xf]
          %v3042 = vld [vmem:[%s3032 + $0x24] sm:$0xf]
          %v3043 = vld [vmem:[%s3032 + $0x28] sm:$0xf]
          %v3044 = vld [vmem:[%s3032 + $0x2c] sm:$0xf]
          %v3045 = vld [vmem:[%s3032 + $0x30] sm:$0xf]
          %v3046 = vld [vmem:[%s3032 + $0x34] sm:$0xf]
          %v3047 = vld [vmem:[%s3032 + $0x38] sm:$0xf]
          %v3048 = vld [vmem:[%s3032 + $0x3c] sm:$0xf]
          %v3049 = vld [vmem:[%s3032 + $0x40] sm:$0xf]
          %v3050 = vld [vmem:[%s3032 + $0x44] sm:$0xf]
          %v3051 = vld [vmem:[%s3032 + $0x48] sm:$0xf]
          %v3052 = vld [vmem:[%s3032 + $0x4c] sm:$0xf]
          %v3053 = vld [vmem:[%s3032 + $0x50] sm:$0xf]
          %v3054 = vld [vmem:[%s3032 + $0x54] sm:$0xf]
          %v3055 = vld [vmem:[%s3032 + $0x58] sm:$0xf]
          %v3056 = vld [vmem:[%s3032 + $0x5c] sm:$0xf]
          %v3057 = vld [vmem:[%s3032 + $0x60] sm:$0xf]
          %v3058 = vld [vmem:[%s3032 + $0x64] sm:$0xf]
          %v3059 = vld [vmem:[%s3032 + $0x68] sm:$0xf]
          %v3060 = vld [vmem:[%s3032 + $0x6c] sm:$0xf]
          %v3061 = vld [vmem:[%s3032 + $0x70] sm:$0xf]
          %v3062 = vld [vmem:[%s3032 + $0x74] sm:$0xf]
          %v3063 = vld [vmem:[%s3032 + $0x78] sm:$0xf]
          %v3064 = vld [vmem:[%s3032 + $0x7c] sm:$0xf]
          %v3065 = vld [vmem:[%s3032 + $0x80] sm:$0xf]
          %v3066 = vld [vmem:[%s3032 + $0x84] sm:$0xf]
          %v3067 = vld [vmem:[%s3032 + $0x88] sm:$0xf]
          %v3068 = vld [vmem:[%s3032 + $0x8c] sm:$0xf]
          %v3069 = vld [vmem:[%s3032 + $0x90] sm:$0xf]
          %v3070 = vld [vmem:[%s3032 + $0x94] sm:$0xf]
          %v3071 = vld [vmem:[%s3032 + $0x98] sm:$0xf]
          %v3072 = vld [vmem:[%s3032 + $0x9c] sm:$0xf]
          %v3073 = vld [vmem:[%s3032 + $0xa0] sm:$0xf]
          %v3074 = vld [vmem:[%s3032 + $0xa4] sm:$0xf]
          %v3075 = vld [vmem:[%s3032 + $0xa8] sm:$0xf]
          %v3076 = vld [vmem:[%s3032 + $0xac] sm:$0xf]
          %v3077 = vld [vmem:[%s3032 + $0xb0] sm:$0xf]
          %v3078 = vld [vmem:[%s3032 + $0xb4] sm:$0xf]
          %v3079 = vld [vmem:[%s3032 + $0xb8] sm:$0xf]
          %v3080 = vld [vmem:[%s3032 + $0xbc] sm:$0xf]
          %v3129 = vunpack.c.l.b16 %v3033
          %v3130 = vunpack.c.l.b16 %v3034
          %v3131 = vunpack.c.l.b16 %v3035
          %v3132 = vunpack.c.l.b16 %v3036
          %v3133 = vunpack.c.l.b16 %v3037
          %v3134 = vunpack.c.l.b16 %v3038
          %v3135 = vunpack.c.l.b16 %v3039
          %v3136 = vunpack.c.l.b16 %v3040
          %v3137 = vunpack.c.l.b16 %v3041
          %v3138 = vunpack.c.l.b16 %v3042
          %v3139 = vunpack.c.l.b16 %v3043
          %v3140 = vunpack.c.l.b16 %v3044
          %v3141 = vunpack.c.l.b16 %v3045
          %v3142 = vunpack.c.l.b16 %v3046
          %v3143 = vunpack.c.l.b16 %v3047
          %v3144 = vunpack.c.l.b16 %v3048
          %v3145 = vunpack.c.l.b16 %v3049
          %v3146 = vunpack.c.l.b16 %v3050
          %v3147 = vunpack.c.l.b16 %v3051
          %v3148 = vunpack.c.l.b16 %v3052
          %v3149 = vunpack.c.l.b16 %v3053
          %v3150 = vunpack.c.l.b16 %v3054
          %v3151 = vunpack.c.l.b16 %v3055
          %v3152 = vunpack.c.l.b16 %v3056
          %v3153 = vunpack.c.l.b16 %v3057
          %v3154 = vunpack.c.l.b16 %v3058
          %v3155 = vunpack.c.l.b16 %v3059
          %v3156 = vunpack.c.l.b16 %v3060
          %v3157 = vunpack.c.l.b16 %v3061
          %v3158 = vunpack.c.l.b16 %v3062
          %v3159 = vunpack.c.l.b16 %v3063
          %v3160 = vunpack.c.l.b16 %v3064
          %v3161 = vunpack.c.l.b16 %v3065
          %v3162 = vunpack.c.l.b16 %v3066
          %v3163 = vunpack.c.l.b16 %v3067
          %v3164 = vunpack.c.l.b16 %v3068
          %v3165 = vunpack.c.l.b16 %v3069
          %v3166 = vunpack.c.l.b16 %v3070
          %v3167 = vunpack.c.l.b16 %v3071
          %v3168 = vunpack.c.l.b16 %v3072
          %v3169 = vunpack.c.l.b16 %v3073
          %v3170 = vunpack.c.l.b16 %v3074
          %v3171 = vunpack.c.l.b16 %v3075
          %v3172 = vunpack.c.l.b16 %v3076
          %v3173 = vunpack.c.l.b16 %v3077
          %v3174 = vunpack.c.l.b16 %v3078
          %v3175 = vunpack.c.l.b16 %v3079
          %v3176 = vunpack.c.l.b16 %v3080
          %v3177 = vpack.c.b16 %v3130, %v3129
          %v3178 = vpack.c.b16 %v3132, %v3131
          %v3179 = vpack.c.b16 %v3134, %v3133
          %v3180 = vpack.c.b16 %v3136, %v3135
          %v3181 = vpack.c.b16 %v3138, %v3137
          %v3182 = vpack.c.b16 %v3140, %v3139
          %v3183 = vpack.c.b16 %v3142, %v3141
          %v3184 = vpack.c.b16 %v3144, %v3143
          %v3185 = vpack.c.b16 %v3146, %v3145
          %v3186 = vpack.c.b16 %v3148, %v3147
          %v3187 = vpack.c.b16 %v3150, %v3149
          %v3188 = vpack.c.b16 %v3152, %v3151
          %v3189 = vpack.c.b16 %v3154, %v3153
          %v3190 = vpack.c.b16 %v3156, %v3155
          %v3191 = vpack.c.b16 %v3158, %v3157
          %v3192 = vpack.c.b16 %v3160, %v3159
          %v3193 = vpack.c.b16 %v3162, %v3161
          %v3194 = vpack.c.b16 %v3164, %v3163
          %v3195 = vpack.c.b16 %v3166, %v3165
          %v3196 = vpack.c.b16 %v3168, %v3167
          %v3197 = vpack.c.b16 %v3170, %v3169
          %v3198 = vpack.c.b16 %v3172, %v3171
          %v3199 = vpack.c.b16 %v3174, %v3173
          %v3200 = vpack.c.b16 %v3176, %v3175
          %3225 = vmatprep.subr.bf16.mxu0 0
          %3226 = vmatpush1.bf16.msra.mxu0 %v3177
          %3227 = vmatprep.subr.bf16.mxu0 0
          %3228 = vmatpush1.bf16.msra.mxu0 %v3178
          %3229 = vmatprep.subr.bf16.mxu0 0
          %3230 = vmatpush1.bf16.msra.mxu0 %v3179
          %3231 = vmatprep.subr.bf16.mxu0 0
          %3232 = vmatpush1.bf16.msra.mxu0 %v3180
          %3233 = vmatprep.subr.bf16.mxu0 0
          %3234 = vmatpush1.bf16.msra.mxu0 %v3181
          %3235 = vmatprep.subr.bf16.mxu0 0
          %3236 = vmatpush1.bf16.msra.mxu0 %v3182
          %3237 = vmatprep.subr.bf16.mxu0 0
          %3238 = vmatpush1.bf16.msra.mxu0 %v3183
          %3239 = vmatprep.subr.bf16.mxu0 0
          %3240 = vmatpush1.bf16.msra.mxu0 %v3184
          %3241 = vmatprep.subr.bf16.mxu0 0
          %3242 = vmatpush1.bf16.msra.mxu0 %v3185
          %3243 = vmatprep.subr.bf16.mxu0 0
          %3244 = vmatpush1.bf16.msra.mxu0 %v3186
          %3245 = vmatprep.subr.bf16.mxu0 0
          %3246 = vmatpush1.bf16.msra.mxu0 %v3187
          %3247 = vmatprep.subr.bf16.mxu0 0
          %3248 = vmatpush1.bf16.msra.mxu0 %v3188
          %3249 = vmatprep.subr.bf16.mxu0 0
          %3250 = vmatpush1.bf16.msra.mxu0 %v3189
          %3251 = vmatprep.subr.bf16.mxu0 0
          %3252 = vmatpush1.bf16.msra.mxu0 %v3190
          %3253 = vmatprep.subr.bf16.mxu0 0
          %3254 = vmatpush1.bf16.msra.mxu0 %v3191
          %3255 = vmatprep.subr.bf16.mxu0 0
          %3256 = vmatpush1.bf16.msra.mxu0 %v3192
          %3257 = vmatprep.mubr.bf16.mxu0 %v2844
          %3258 = vmatmul.mubr.bf16.gmra.mrb[0].mxu0 %v2781
          %v3259 = vpop.f32.mrb[0].mxu0
          %v3260 = vadd.f32 0.0, %v3259
          %v3261 = vpop.f32.mrb[0].mxu0
          %v3262 = vpop.f32.mrb[0].mxu0
          %v3263 = vadd.f32 0.0, %v3262
          %v3264 = vpop.f32.mrb[0].mxu0
          %3265 = vmatprep.mubr.bf16.mxu0 %v2856
          %3266 = vmatmul.mubr.bf16.gmra.mrb[0].mxu0 %v2782
          %v3267 = vpop.f32.mrb[0].mxu0
          %v3268 = vadd.f32 0.0, %v3267
          %v3269 = vpop.f32.mrb[0].mxu0
          %v3270 = vpop.f32.mrb[0].mxu0
          %v3271 = vadd.f32 0.0, %v3270
          %v3272 = vpop.f32.mrb[0].mxu0
          %3273 = vmatprep.mubr.bf16.mxu0 %v2868
          %3274 = vmatmul.mubr.bf16.gmra.mrb[0].mxu0 %v2783
          %v3275 = vpop.f32.mrb[0].mxu0
          %v3276 = vadd.f32 0.0, %v3275
          %v3277 = vpop.f32.mrb[0].mxu0
          %v3278 = vpop.f32.mrb[0].mxu0
          %v3279 = vadd.f32 0.0, %v3278
          %v3280 = vpop.f32.mrb[0].mxu0
          %3281 = vmatprep.mubr.bf16.mxu0 %v2880
          %3282 = vmatmul.mubr.bf16.gmra.mrb[0].mxu0 %v2784
          %v3283 = vpop.f32.mrb[0].mxu0
          %v3284 = vadd.f32 0.0, %v3283
          %v3285 = vpop.f32.mrb[0].mxu0
          %v3286 = vpop.f32.mrb[0].mxu0
          %v3287 = vadd.f32 0.0, %v3286
          %v3288 = vpop.f32.mrb[0].mxu0
          %3289 = vmatprep.mubr.bf16.mxu0 %v2892
          %3290 = vmatmul.mubr.bf16.gmra.mrb[0].mxu0 %v2785
          %v3291 = vpop.f32.mrb[0].mxu0
          %v3292 = vadd.f32 0.0, %v3291
          %v3293 = vpop.f32.mrb[0].mxu0
          %v3294 = vpop.f32.mrb[0].mxu0
          %v3295 = vadd.f32 0.0, %v3294
          %v3296 = vpop.f32.mrb[0].mxu0
          %3297 = vmatprep.mubr.bf16.mxu0 %v2904
          %3298 = vmatmul.mubr.bf16.gmra.mrb[0].mxu0 %v2786
          %v3299 = vpop.f32.mrb[0].mxu0
          %v3300 = vadd.f32 0.0, %v3299
          %v3301 = vpop.f32.mrb[0].mxu0
          %v3302 = vpop.f32.mrb[0].mxu0
          %v3303 = vadd.f32 0.0, %v3302
          %v3304 = vpop.f32.mrb[0].mxu0
          %3305 = vmatprep.mubr.bf16.mxu0 %v2916
          %3306 = vmatmul.mubr.bf16.gmra.mrb[0].mxu0 %v2787
          %v3307 = vpop.f32.mrb[0].mxu0
          %v3308 = vadd.f32 0.0, %v3307
          %v3309 = vpop.f32.mrb[0].mxu0
          %v3310 = vpop.f32.mrb[0].mxu0
          %v3311 = vadd.f32 0.0, %v3310
          %v3312 = vpop.f32.mrb[0].mxu0
          %3313 = vmatprep.mubr.bf16.mxu0 %v3026
          %3314 = vmatmul.mubr.bf16.gmra.mrb[0].mxu0 %v3010
          %v3315 = vpop.f32.mrb[0].mxu0
          %v3316 = vadd.f32 0.0, %v3315
          %v3317 = vpop.f32.mrb[0].mxu0
          %v3318 = vpop.f32.mrb[0].mxu0
          %v3319 = vadd.f32 0.0, %v3318
          %v3320 = vpop.f32.mrb[0].mxu0
          %3321 = vdwg.mxu0
          %3322 = vmatprep.subr.bf16.mxu0 0
          %3323 = vmatpush1.bf16.msra.mxu0 %v3193
          %3324 = vmatprep.subr.bf16.mxu0 0
          %3325 = vmatpush1.bf16.msra.mxu0 %v3194
          %3326 = vmatprep.subr.bf16.mxu0 0
          %3327 = vmatpush1.bf16.msra.mxu0 %v3195
          %3328 = vmatprep.subr.bf16.mxu0 0
          %3329 = vmatpush1.bf16.msra.mxu0 %v3196
          %3330 = vmatprep.subr.bf16.mxu0 0
          %3331 = vmatpush1.bf16.msra.mxu0 %v3197
          %3332 = vmatprep.subr.bf16.mxu0 0
          %3333 = vmatpush1.bf16.msra.mxu0 %v3198
          %3334 = vmatprep.subr.bf16.mxu0 0
          %3335 = vmatpush1.bf16.msra.mxu0 %v3199
          %3336 = vmatprep.subr.bf16.mxu0 0
          %3337 = vmatpush1.bf16.msra.mxu0 %v3200
          %3338 = vmatprep.subr.bf16.mxu0 0
          %3339 = vmatpush1.bf16.msra.mxu0 0
          %3340 = vmatprep.subr.bf16.mxu0 0
          %3341 = vmatpush1.bf16.msra.mxu0 0
          %3342 = vmatprep.subr.bf16.mxu0 0
          %3343 = vmatpush1.bf16.msra.mxu0 0
          %3344 = vmatprep.subr.bf16.mxu0 0
          %3345 = vmatpush1.bf16.msra.mxu0 0
          %3346 = vmatprep.subr.bf16.mxu0 0
          %3347 = vmatpush1.bf16.msra.mxu0 0
          %3348 = vmatprep.subr.bf16.mxu0 0
          %3349 = vmatpush1.bf16.msra.mxu0 0
          %3350 = vmatprep.subr.bf16.mxu0 0
          %3351 = vmatpush1.bf16.msra.mxu0 0
          %3352 = vmatprep.subr.bf16.mxu0 0
          %3353 = vmatpush1.bf16.msra.mxu0 0
          %3354 = vmatprep.mubr.bf16.mxu0 0
          %3355 = vmatmul.mubr.bf16.gmra.mrb[0].mxu0 %v2931
          %v3356 = vpop.f32.mrb[0].mxu0
          %v3357 = vadd.f32 %v3260, %v3356
          %v3358 = vpop.f32.mrb[0].mxu0
          %v3359 = vpop.f32.mrb[0].mxu0
          %v3360 = vadd.f32 %v3263, %v3359
          %v3361 = vpop.f32.mrb[0].mxu0
          %3362 = vmatprep.mubr.bf16.mxu0 0
          %3363 = vmatmul.mubr.bf16.gmra.mrb[0].mxu0 %v2934
          %v3364 = vpop.f32.mrb[0].mxu0
          %v3365 = vadd.f32 %v3268, %v3364
          %v3366 = vpop.f32.mrb[0].mxu0
          %v3367 = vpop.f32.mrb[0].mxu0
          %v3368 = vadd.f32 %v3271, %v3367
          %v3369 = vpop.f32.mrb[0].mxu0
          %3370 = vmatprep.mubr.bf16.mxu0 0
          %3371 = vmatmul.mubr.bf16.gmra.mrb[0].mxu0 %v2937
          %v3372 = vpop.f32.mrb[0].mxu0
          %v3373 = vadd.f32 %v3276, %v3372
          %v3374 = vpop.f32.mrb[0].mxu0
          %v3375 = vpop.f32.mrb[0].mxu0
          %v3376 = vadd.f32 %v3279, %v3375
          %v3377 = vpop.f32.mrb[0].mxu0
          %3378 = vmatprep.mubr.bf16.mxu0 0
          %3379 = vmatmul.mubr.bf16.gmra.mrb[0].mxu0 %v2940
          %v3380 = vpop.f32.mrb[0].mxu0
          %v3381 = vadd.f32 %v3284, %v3380
          %v3382 = vpop.f32.mrb[0].mxu0
          %v3383 = vpop.f32.mrb[0].mxu0
          %v3384 = vadd.f32 %v3287, %v3383
          %v3385 = vpop.f32.mrb[0].mxu0
          %3386 = vmatprep.mubr.bf16.mxu0 0
          %3387 = vmatmul.mubr.bf16.gmra.mrb[0].mxu0 %v2943
          %v3388 = vpop.f32.mrb[0].mxu0
          %v3389 = vadd.f32 %v3292, %v3388
          %v3390 = vpop.f32.mrb[0].mxu0
          %v3391 = vpop.f32.mrb[0].mxu0
          %v3392 = vadd.f32 %v3295, %v3391
          %v3393 = vpop.f32.mrb[0].mxu0
          %3394 = vmatprep.mubr.bf16.mxu0 0
          %3395 = vmatmul.mubr.bf16.gmra.mrb[0].mxu0 %v2946
          %v3396 = vpop.f32.mrb[0].mxu0
          %v3397 = vadd.f32 %v3300, %v3396
          %v3398 = vpop.f32.mrb[0].mxu0
          %v3399 = vpop.f32.mrb[0].mxu0
          %v3400 = vadd.f32 %v3303, %v3399
          %v3401 = vpop.f32.mrb[0].mxu0
          %3402 = vmatprep.mubr.bf16.mxu0 0
          %3403 = vmatmul.mubr.bf16.gmra.mrb[0].mxu0 %v2949
          %v3404 = vpop.f32.mrb[0].mxu0
          %v3405 = vadd.f32 %v3308, %v3404
          %v3406 = vpop.f32.mrb[0].mxu0
          %v3407 = vpop.f32.mrb[0].mxu0
          %v3408 = vadd.f32 %v3311, %v3407
          %v3409 = vpop.f32.mrb[0].mxu0
          %3410 = vmatprep.mubr.bf16.mxu0 0
          %3411 = vmatmul.mubr.bf16.gmra.mrb[0].mxu0 %v3030
          %v3412 = vpop.f32.mrb[0].mxu0
          %v3413 = vadd.f32 %v3316, %v3412
          %v3414 = vpop.f32.mrb[0].mxu0
          %v3415 = vpop.f32.mrb[0].mxu0
          %v3416 = vadd.f32 %v3319, %v3415
          %v3417 = vpop.f32.mrb[0].mxu0
          %3418 = vdwg.mxu0
          %v3467 = vunpack.c.l.b16 %v2958
          %v3468 = vunpack.c.l.b16 %v2959
          %v3469 = vunpack.c.l.b16 %v2960
          %v3470 = vunpack.c.l.b16 %v2961
          %v3471 = vunpack.c.l.b16 %v2962
          %v3472 = vunpack.c.l.b16 %v2963
          %v3473 = vunpack.c.l.b16 %v2964
          %v3474 = vunpack.c.l.b16 %v2965
          %v3475 = vunpack.c.l.b16 %v2966
          %v3476 = vunpack.c.l.b16 %v2967
          %v3477 = vunpack.c.l.b16 %v2968
          %v3478 = vunpack.c.l.b16 %v2969
          %v3479 = vunpack.c.l.b16 %v2970
          %v3480 = vunpack.c.l.b16 %v2971
          %v3481 = vunpack.c.l.b16 %v2972
          %v3482 = vunpack.c.l.b16 %v2973
          %v3483 = vunpack.c.l.b16 %v2974
          %v3484 = vunpack.c.l.b16 %v2975
          %v3485 = vunpack.c.l.b16 %v2976
          %v3486 = vunpack.c.l.b16 %v2977
          %v3487 = vunpack.c.l.b16 %v2978
          %v3488 = vunpack.c.l.b16 %v2979
          %v3489 = vunpack.c.l.b16 %v2980
          %v3490 = vunpack.c.l.b16 %v2981
          %v3491 = vunpack.c.l.b16 %v2982
          %v3492 = vunpack.c.l.b16 %v2983
          %v3493 = vunpack.c.l.b16 %v2984
          %v3494 = vunpack.c.l.b16 %v2985
          %v3495 = vunpack.c.l.b16 %v2986
          %v3496 = vunpack.c.l.b16 %v2987
          %v3497 = vunpack.c.l.b16 %v2988
          %v3498 = vunpack.c.l.b16 %v2989
          %v3499 = vunpack.c.l.b16 %v2990
          %v3500 = vunpack.c.l.b16 %v2991
          %v3501 = vunpack.c.l.b16 %v2992
          %v3502 = vunpack.c.l.b16 %v2993
          %v3503 = vunpack.c.l.b16 %v2994
          %v3504 = vunpack.c.l.b16 %v2995
          %v3505 = vunpack.c.l.b16 %v2996
          %v3506 = vunpack.c.l.b16 %v2997
          %v3507 = vunpack.c.l.b16 %v2998
          %v3508 = vunpack.c.l.b16 %v2999
          %v3509 = vunpack.c.l.b16 %v3000
          %v3510 = vunpack.c.l.b16 %v3001
          %v3511 = vunpack.c.l.b16 %v3002
          %v3512 = vunpack.c.l.b16 %v3003
          %v3513 = vunpack.c.l.b16 %v3004
          %v3514 = vunpack.c.l.b16 %v3005
          %v3515 = vpack.c.b16 %v3468, %v3467
          %v3516 = vpack.c.b16 %v3470, %v3469
          %v3517 = vpack.c.b16 %v3472, %v3471
          %v3518 = vpack.c.b16 %v3474, %v3473
          %v3519 = vpack.c.b16 %v3476, %v3475
          %v3520 = vpack.c.b16 %v3478, %v3477
          %v3521 = vpack.c.b16 %v3480, %v3479
          %v3522 = vpack.c.b16 %v3482, %v3481
          %v3523 = vpack.c.b16 %v3484, %v3483
          %v3524 = vpack.c.b16 %v3486, %v3485
          %v3525 = vpack.c.b16 %v3488, %v3487
          %v3526 = vpack.c.b16 %v3490, %v3489
          %v3527 = vpack.c.b16 %v3492, %v3491
          %v3528 = vpack.c.b16 %v3494, %v3493
          %v3529 = vpack.c.b16 %v3496, %v3495
          %v3530 = vpack.c.b16 %v3498, %v3497
          %v3531 = vpack.c.b16 %v3500, %v3499
          %v3532 = vpack.c.b16 %v3502, %v3501
          %v3533 = vpack.c.b16 %v3504, %v3503
          %v3534 = vpack.c.b16 %v3506, %v3505
          %v3535 = vpack.c.b16 %v3508, %v3507
          %v3536 = vpack.c.b16 %v3510, %v3509
          %v3537 = vpack.c.b16 %v3512, %v3511
          %v3538 = vpack.c.b16 %v3514, %v3513
          %3563 = vmatprep.subr.bf16.mxu0 0
          %3564 = vmatpush1.bf16.msra.mxu0 %v3515
          %3565 = vmatprep.subr.bf16.mxu0 0
          %3566 = vmatpush1.bf16.msra.mxu0 %v3516
          %3567 = vmatprep.subr.bf16.mxu0 0
          %3568 = vmatpush1.bf16.msra.mxu0 %v3517
          %3569 = vmatprep.subr.bf16.mxu0 0
          %3570 = vmatpush1.bf16.msra.mxu0 %v3518
          %3571 = vmatprep.subr.bf16.mxu0 0
          %3572 = vmatpush1.bf16.msra.mxu0 %v3519
          %3573 = vmatprep.subr.bf16.mxu0 0
          %3574 = vmatpush1.bf16.msra.mxu0 %v3520
          %3575 = vmatprep.subr.bf16.mxu0 0
          %3576 = vmatpush1.bf16.msra.mxu0 %v3521
          %3577 = vmatprep.subr.bf16.mxu0 0
          %3578 = vmatpush1.bf16.msra.mxu0 %v3522
          %3579 = vmatprep.subr.bf16.mxu0 0
          %3580 = vmatpush1.bf16.msra.mxu0 %v3523
          %3581 = vmatprep.subr.bf16.mxu0 0
          %3582 = vmatpush1.bf16.msra.mxu0 %v3524
          %3583 = vmatprep.subr.bf16.mxu0 0
          %3584 = vmatpush1.bf16.msra.mxu0 %v3525
          %3585 = vmatprep.subr.bf16.mxu0 0
          %3586 = vmatpush1.bf16.msra.mxu0 %v3526
          %3587 = vmatprep.subr.bf16.mxu0 0
          %3588 = vmatpush1.bf16.msra.mxu0 %v3527
          %3589 = vmatprep.subr.bf16.mxu0 0
          %3590 = vmatpush1.bf16.msra.mxu0 %v3528
          %3591 = vmatprep.subr.bf16.mxu0 0
          %3592 = vmatpush1.bf16.msra.mxu0 %v3529
          %3593 = vmatprep.subr.bf16.mxu0 0
          %3594 = vmatpush1.bf16.msra.mxu0 %v3530
          %3595 = vmatprep.mubr.bf16.mxu0 %v2832
          %3596 = vmatmul.mubr.bf16.gmra.mrb[0].mxu0 %v2780
          %v3597 = vpop.f32.mrb[0].mxu0
          %v3598 = vadd.f32 %v3357, %v3597
          %v3599 = vpop.f32.mrb[0].mxu0
          %v3600 = vpop.f32.mrb[0].mxu0
          %v3601 = vadd.f32 %v3360, %v3600
          %v3602 = vpop.f32.mrb[0].mxu0
          %3603 = vmatprep.mubr.bf16.mxu0 %v2844
          %3604 = vmatmul.mubr.bf16.gmra.mrb[0].mxu0 %v2781
          %v3605 = vpop.f32.mrb[0].mxu0
          %v3606 = vadd.f32 %v3365, %v3605
          %v3607 = vpop.f32.mrb[0].mxu0
          %v3608 = vpop.f32.mrb[0].mxu0
          %v3609 = vadd.f32 %v3368, %v3608
          %v3610 = vpop.f32.mrb[0].mxu0
          %3611 = vmatprep.mubr.bf16.mxu0 %v2856
          %3612 = vmatmul.mubr.bf16.gmra.mrb[0].mxu0 %v2782
          %v3613 = vpop.f32.mrb[0].mxu0
          %v3614 = vadd.f32 %v3373, %v3613
          %v3615 = vpop.f32.mrb[0].mxu0
          %v3616 = vpop.f32.mrb[0].mxu0
          %v3617 = vadd.f32 %v3376, %v3616
          %v3618 = vpop.f32.mrb[0].mxu0
          %3619 = vmatprep.mubr.bf16.mxu0 %v2868
          %3620 = vmatmul.mubr.bf16.gmra.mrb[0].mxu0 %v2783
          %v3621 = vpop.f32.mrb[0].mxu0
          %v3622 = vadd.f32 %v3381, %v3621
          %v3623 = vpop.f32.mrb[0].mxu0
          %v3624 = vpop.f32.mrb[0].mxu0
          %v3625 = vadd.f32 %v3384, %v3624
          %v3626 = vpop.f32.mrb[0].mxu0
          %3627 = vmatprep.mubr.bf16.mxu0 %v2880
          %3628 = vmatmul.mubr.bf16.gmra.mrb[0].mxu0 %v2784
          %v3629 = vpop.f32.mrb[0].mxu0
          %v3630 = vadd.f32 %v3389, %v3629
          %v3631 = vpop.f32.mrb[0].mxu0
          %v3632 = vpop.f32.mrb[0].mxu0
          %v3633 = vadd.f32 %v3392, %v3632
          %v3634 = vpop.f32.mrb[0].mxu0
          %3635 = vmatprep.mubr.bf16.mxu0 %v2892
          %3636 = vmatmul.mubr.bf16.gmra.mrb[0].mxu0 %v2785
          %v3637 = vpop.f32.mrb[0].mxu0
          %v3638 = vadd.f32 %v3397, %v3637
          %v3639 = vpop.f32.mrb[0].mxu0
          %v3640 = vpop.f32.mrb[0].mxu0
          %v3641 = vadd.f32 %v3400, %v3640
          %v3642 = vpop.f32.mrb[0].mxu0
          %3643 = vmatprep.mubr.bf16.mxu0 %v2904
          %3644 = vmatmul.mubr.bf16.gmra.mrb[0].mxu0 %v2786
          %v3645 = vpop.f32.mrb[0].mxu0
          %v3646 = vadd.f32 %v3405, %v3645
          %v3647 = vpop.f32.mrb[0].mxu0
          %v3648 = vpop.f32.mrb[0].mxu0
          %v3649 = vadd.f32 %v3408, %v3648
          %v3650 = vpop.f32.mrb[0].mxu0
          %3651 = vmatprep.mubr.bf16.mxu0 %v2916
          %3652 = vmatmul.mubr.bf16.gmra.mrb[0].mxu0 %v2787
          %v3653 = vpop.f32.mrb[0].mxu0
          %v3654 = vadd.f32 %v3413, %v3653
          %v3655 = vpop.f32.mrb[0].mxu0
          %v3656 = vpop.f32.mrb[0].mxu0
          %v3657 = vadd.f32 %v3416, %v3656
          %v3658 = vpop.f32.mrb[0].mxu0
          %3659 = vdwg.mxu0
          %3660 = vmatprep.subr.bf16.mxu0 0
          %3661 = vmatpush1.bf16.msra.mxu0 %v3531
          %3662 = vmatprep.subr.bf16.mxu0 0
          %3663 = vmatpush1.bf16.msra.mxu0 %v3532
          %3664 = vmatprep.subr.bf16.mxu0 0
          %3665 = vmatpush1.bf16.msra.mxu0 %v3533
          %3666 = vmatprep.subr.bf16.mxu0 0
          %3667 = vmatpush1.bf16.msra.mxu0 %v3534
          %3668 = vmatprep.subr.bf16.mxu0 0
          %3669 = vmatpush1.bf16.msra.mxu0 %v3535
          %3670 = vmatprep.subr.bf16.mxu0 0
          %3671 = vmatpush1.bf16.msra.mxu0 %v3536
          %3672 = vmatprep.subr.bf16.mxu0 0
          %3673 = vmatpush1.bf16.msra.mxu0 %v3537
          %3674 = vmatprep.subr.bf16.mxu0 0
          %3675 = vmatpush1.bf16.msra.mxu0 %v3538
          %3676 = vmatprep.subr.bf16.mxu0 0
          %3677 = vmatpush1.bf16.msra.mxu0 0
          %3678 = vmatprep.subr.bf16.mxu0 0
          %3679 = vmatpush1.bf16.msra.mxu0 0
          %3680 = vmatprep.subr.bf16.mxu0 0
          %3681 = vmatpush1.bf16.msra.mxu0 0
          %3682 = vmatprep.subr.bf16.mxu0 0
          %3683 = vmatpush1.bf16.msra.mxu0 0
          %3684 = vmatprep.subr.bf16.mxu0 0
          %3685 = vmatpush1.bf16.msra.mxu0 0
          %3686 = vmatprep.subr.bf16.mxu0 0
          %3687 = vmatpush1.bf16.msra.mxu0 0
          %3688 = vmatprep.subr.bf16.mxu0 0
          %3689 = vmatpush1.bf16.msra.mxu0 0
          %3690 = vmatprep.subr.bf16.mxu0 0
          %3691 = vmatpush1.bf16.msra.mxu0 0
          %3692 = vmatprep.mubr.bf16.mxu0 0
          %3693 = vmatmul.mubr.bf16.gmra.mrb[0].mxu0 %v2928
          %v3694 = vpop.f32.mrb[0].mxu0
          %v3695 = vadd.f32 %v3598, %v3694
          %v3696 = vpop.f32.mrb[0].mxu0
          %v3697 = vpop.f32.mrb[0].mxu0
          %v3698 = vadd.f32 %v3601, %v3697
          %v3699 = vpop.f32.mrb[0].mxu0
          %3700 = vmatprep.mubr.bf16.mxu0 0
          %3701 = vmatmul.mubr.bf16.gmra.mrb[0].mxu0 %v2931
          %v3702 = vpop.f32.mrb[0].mxu0
          %v3703 = vadd.f32 %v3606, %v3702
          %v3704 = vpop.f32.mrb[0].mxu0
          %v3705 = vpop.f32.mrb[0].mxu0
          %v3706 = vadd.f32 %v3609, %v3705
          %v3707 = vpop.f32.mrb[0].mxu0
          %3708 = vmatprep.mubr.bf16.mxu0 0
          %3709 = vmatmul.mubr.bf16.gmra.mrb[0].mxu0 %v2934
          %v3710 = vpop.f32.mrb[0].mxu0
          %v3711 = vadd.f32 %v3614, %v3710
          %v3712 = vpop.f32.mrb[0].mxu0
          %v3713 = vpop.f32.mrb[0].mxu0
          %v3714 = vadd.f32 %v3617, %v3713
          %v3715 = vpop.f32.mrb[0].mxu0
          %3716 = vmatprep.mubr.bf16.mxu0 0
          %3717 = vmatmul.mubr.bf16.gmra.mrb[0].mxu0 %v2937
          %v3718 = vpop.f32.mrb[0].mxu0
          %v3719 = vadd.f32 %v3622, %v3718
          %v3720 = vpop.f32.mrb[0].mxu0
          %v3721 = vpop.f32.mrb[0].mxu0
          %v3722 = vadd.f32 %v3625, %v3721
          %v3723 = vpop.f32.mrb[0].mxu0
          %3724 = vmatprep.mubr.bf16.mxu0 0
          %3725 = vmatmul.mubr.bf16.gmra.mrb[0].mxu0 %v2940
          %v3726 = vpop.f32.mrb[0].mxu0
          %v3727 = vadd.f32 %v3630, %v3726
          %v3728 = vpop.f32.mrb[0].mxu0
          %v3729 = vpop.f32.mrb[0].mxu0
          %v3730 = vadd.f32 %v3633, %v3729
          %v3731 = vpop.f32.mrb[0].mxu0
          %3732 = vmatprep.mubr.bf16.mxu0 0
          %3733 = vmatmul.mubr.bf16.gmra.mrb[0].mxu0 %v2943
          %v3734 = vpop.f32.mrb[0].mxu0
          %v3735 = vadd.f32 %v3638, %v3734
          %v3736 = vpop.f32.mrb[0].mxu0
          %v3737 = vpop.f32.mrb[0].mxu0
          %v3738 = vadd.f32 %v3641, %v3737
          %v3739 = vpop.f32.mrb[0].mxu0
          %3740 = vmatprep.mubr.bf16.mxu0 0
          %3741 = vmatmul.mubr.bf16.gmra.mrb[0].mxu0 %v2946
          %v3742 = vpop.f32.mrb[0].mxu0
          %v3743 = vadd.f32 %v3646, %v3742
          %v3744 = vpop.f32.mrb[0].mxu0
          %v3745 = vpop.f32.mrb[0].mxu0
          %v3746 = vadd.f32 %v3649, %v3745
          %v3747 = vpop.f32.mrb[0].mxu0
          %3748 = vmatprep.mubr.bf16.mxu0 0
          %3749 = vmatmul.mubr.bf16.gmra.mrb[0].mxu0 %v2949
          %v3750 = vpop.f32.mrb[0].mxu0
          %v3751 = vadd.f32 %v3654, %v3750
          %v3752 = vpop.f32.mrb[0].mxu0
          %v3753 = vpop.f32.mrb[0].mxu0
          %v3754 = vadd.f32 %v3657, %v3753
          %v3755 = vpop.f32.mrb[0].mxu0
          %3756 = vdwg.mxu0
          %v3759 = vunpack.c.l.b16 %v2745
          %v3760 = vunpack.c.l.b16 %v2746
          %v3761 = vpack.c.b16 %v3760, %v3759
          %v3764 = vunpack.c.l.b16 %v2747
          %v3765 = vpack.c.b16 %v3764, %v3764
          %v3767 = vshrl.u32 %v3761, 16
          %v3769 = vshll.u32 %v3761, 16
          %v3771 = vrot.slane %v3769, 1
          %v3772 = vor.u32 %v3767, %v3771
          %v3774 = vshll.u32 %v3765, 16
          %v3776 = vrot.slane %v3774, 1
          %v3777 = vsel %vm2820, %v3772, %v3776
          %v3779 = vrot.slane %v3761, 1
          %v3780 = vrot.slane %v3765, 1
          %v3781 = vsel %vm2925, %v3779, %v3780
          %s3783 = scalar_lea.vmem %s2, 384
          %v3784 = vld [vmem:[%s3783] sm:$0xf]
          %v3785 = vld [vmem:[%s3783 + $0x4] sm:$0xf]
          %v3786 = vld [vmem:[%s3783 + $0x8] sm:$0xf]
          %v3787 = vld [vmem:[%s3783 + $0xc] sm:$0xf]
          %v3788 = vld [vmem:[%s3783 + $0x10] sm:$0xf]
          %v3789 = vld [vmem:[%s3783 + $0x14] sm:$0xf]
          %v3790 = vld [vmem:[%s3783 + $0x18] sm:$0xf]
          %v3791 = vld [vmem:[%s3783 + $0x1c] sm:$0xf]
          %v3792 = vld [vmem:[%s3783 + $0x20] sm:$0xf]
          %v3793 = vld [vmem:[%s3783 + $0x24] sm:$0xf]
          %v3794 = vld [vmem:[%s3783 + $0x28] sm:$0xf]
          %v3795 = vld [vmem:[%s3783 + $0x2c] sm:$0xf]
          %v3796 = vld [vmem:[%s3783 + $0x30] sm:$0xf]
          %v3797 = vld [vmem:[%s3783 + $0x34] sm:$0xf]
          %v3798 = vld [vmem:[%s3783 + $0x38] sm:$0xf]
          %v3799 = vld [vmem:[%s3783 + $0x3c] sm:$0xf]
          %v3800 = vld [vmem:[%s3783 + $0x40] sm:$0xf]
          %v3801 = vld [vmem:[%s3783 + $0x44] sm:$0xf]
          %v3802 = vld [vmem:[%s3783 + $0x48] sm:$0xf]
          %v3803 = vld [vmem:[%s3783 + $0x4c] sm:$0xf]
          %v3804 = vld [vmem:[%s3783 + $0x50] sm:$0xf]
          %v3805 = vld [vmem:[%s3783 + $0x54] sm:$0xf]
          %v3806 = vld [vmem:[%s3783 + $0x58] sm:$0xf]
          %v3807 = vld [vmem:[%s3783 + $0x5c] sm:$0xf]
          %v3808 = vld [vmem:[%s3783 + $0x60] sm:$0xf]
          %v3809 = vld [vmem:[%s3783 + $0x64] sm:$0xf]
          %v3810 = vld [vmem:[%s3783 + $0x68] sm:$0xf]
          %v3811 = vld [vmem:[%s3783 + $0x6c] sm:$0xf]
          %v3812 = vld [vmem:[%s3783 + $0x70] sm:$0xf]
          %v3813 = vld [vmem:[%s3783 + $0x74] sm:$0xf]
          %v3814 = vld [vmem:[%s3783 + $0x78] sm:$0xf]
          %v3815 = vld [vmem:[%s3783 + $0x7c] sm:$0xf]
          %v3816 = vld [vmem:[%s3783 + $0x80] sm:$0xf]
          %v3817 = vld [vmem:[%s3783 + $0x84] sm:$0xf]
          %v3818 = vld [vmem:[%s3783 + $0x88] sm:$0xf]
          %v3819 = vld [vmem:[%s3783 + $0x8c] sm:$0xf]
          %v3820 = vld [vmem:[%s3783 + $0x90] sm:$0xf]
          %v3821 = vld [vmem:[%s3783 + $0x94] sm:$0xf]
          %v3822 = vld [vmem:[%s3783 + $0x98] sm:$0xf]
          %v3823 = vld [vmem:[%s3783 + $0x9c] sm:$0xf]
          %v3824 = vld [vmem:[%s3783 + $0xa0] sm:$0xf]
          %v3825 = vld [vmem:[%s3783 + $0xa4] sm:$0xf]
          %v3826 = vld [vmem:[%s3783 + $0xa8] sm:$0xf]
          %v3827 = vld [vmem:[%s3783 + $0xac] sm:$0xf]
          %v3828 = vld [vmem:[%s3783 + $0xb0] sm:$0xf]
          %v3829 = vld [vmem:[%s3783 + $0xb4] sm:$0xf]
          %v3830 = vld [vmem:[%s3783 + $0xb8] sm:$0xf]
          %v3831 = vld [vmem:[%s3783 + $0xbc] sm:$0xf]
          %v3880 = vunpack.c.l.b16 %v3784
          %v3881 = vunpack.c.l.b16 %v3785
          %v3882 = vunpack.c.l.b16 %v3786
          %v3883 = vunpack.c.l.b16 %v3787
          %v3884 = vunpack.c.l.b16 %v3788
          %v3885 = vunpack.c.l.b16 %v3789
          %v3886 = vunpack.c.l.b16 %v3790
          %v3887 = vunpack.c.l.b16 %v3791
          %v3888 = vunpack.c.l.b16 %v3792
          %v3889 = vunpack.c.l.b16 %v3793
          %v3890 = vunpack.c.l.b16 %v3794
          %v3891 = vunpack.c.l.b16 %v3795
          %v3892 = vunpack.c.l.b16 %v3796
          %v3893 = vunpack.c.l.b16 %v3797
          %v3894 = vunpack.c.l.b16 %v3798
          %v3895 = vunpack.c.l.b16 %v3799
          %v3896 = vunpack.c.l.b16 %v3800
          %v3897 = vunpack.c.l.b16 %v3801
          %v3898 = vunpack.c.l.b16 %v3802
          %v3899 = vunpack.c.l.b16 %v3803
          %v3900 = vunpack.c.l.b16 %v3804
          %v3901 = vunpack.c.l.b16 %v3805
          %v3902 = vunpack.c.l.b16 %v3806
          %v3903 = vunpack.c.l.b16 %v3807
          %v3904 = vunpack.c.l.b16 %v3808
          %v3905 = vunpack.c.l.b16 %v3809
          %v3906 = vunpack.c.l.b16 %v3810
          %v3907 = vunpack.c.l.b16 %v3811
          %v3908 = vunpack.c.l.b16 %v3812
          %v3909 = vunpack.c.l.b16 %v3813
          %v3910 = vunpack.c.l.b16 %v3814
          %v3911 = vunpack.c.l.b16 %v3815
          %v3912 = vunpack.c.l.b16 %v3816
          %v3913 = vunpack.c.l.b16 %v3817
          %v3914 = vunpack.c.l.b16 %v3818
          %v3915 = vunpack.c.l.b16 %v3819
          %v3916 = vunpack.c.l.b16 %v3820
          %v3917 = vunpack.c.l.b16 %v3821
          %v3918 = vunpack.c.l.b16 %v3822
          %v3919 = vunpack.c.l.b16 %v3823
          %v3920 = vunpack.c.l.b16 %v3824
          %v3921 = vunpack.c.l.b16 %v3825
          %v3922 = vunpack.c.l.b16 %v3826
          %v3923 = vunpack.c.l.b16 %v3827
          %v3924 = vunpack.c.l.b16 %v3828
          %v3925 = vunpack.c.l.b16 %v3829
          %v3926 = vunpack.c.l.b16 %v3830
          %v3927 = vunpack.c.l.b16 %v3831
          %v3928 = vpack.c.b16 %v3881, %v3880
          %v3929 = vpack.c.b16 %v3883, %v3882
          %v3930 = vpack.c.b16 %v3885, %v3884
          %v3931 = vpack.c.b16 %v3887, %v3886
          %v3932 = vpack.c.b16 %v3889, %v3888
          %v3933 = vpack.c.b16 %v3891, %v3890
          %v3934 = vpack.c.b16 %v3893, %v3892
          %v3935 = vpack.c.b16 %v3895, %v3894
          %v3936 = vpack.c.b16 %v3897, %v3896
          %v3937 = vpack.c.b16 %v3899, %v3898
          %v3938 = vpack.c.b16 %v3901, %v3900
          %v3939 = vpack.c.b16 %v3903, %v3902
          %v3940 = vpack.c.b16 %v3905, %v3904
          %v3941 = vpack.c.b16 %v3907, %v3906
          %v3942 = vpack.c.b16 %v3909, %v3908
          %v3943 = vpack.c.b16 %v3911, %v3910
          %v3944 = vpack.c.b16 %v3913, %v3912
          %v3945 = vpack.c.b16 %v3915, %v3914
          %v3946 = vpack.c.b16 %v3917, %v3916
          %v3947 = vpack.c.b16 %v3919, %v3918
          %v3948 = vpack.c.b16 %v3921, %v3920
          %v3949 = vpack.c.b16 %v3923, %v3922
          %v3950 = vpack.c.b16 %v3925, %v3924
          %v3951 = vpack.c.b16 %v3927, %v3926
          %3976 = vmatprep.subr.bf16.mxu0 0
          %3977 = vmatpush1.bf16.msra.mxu0 %v3928
          %3978 = vmatprep.subr.bf16.mxu0 0
          %3979 = vmatpush1.bf16.msra.mxu0 %v3929
          %3980 = vmatprep.subr.bf16.mxu0 0
          %3981 = vmatpush1.bf16.msra.mxu0 %v3930
          %3982 = vmatprep.subr.bf16.mxu0 0
          %3983 = vmatpush1.bf16.msra.mxu0 %v3931
          %3984 = vmatprep.subr.bf16.mxu0 0
          %3985 = vmatpush1.bf16.msra.mxu0 %v3932
          %3986 = vmatprep.subr.bf16.mxu0 0
          %3987 = vmatpush1.bf16.msra.mxu0 %v3933
          %3988 = vmatprep.subr.bf16.mxu0 0
          %3989 = vmatpush1.bf16.msra.mxu0 %v3934
          %3990 = vmatprep.subr.bf16.mxu0 0
          %3991 = vmatpush1.bf16.msra.mxu0 %v3935
          %3992 = vmatprep.subr.bf16.mxu0 0
          %3993 = vmatpush1.bf16.msra.mxu0 %v3936
          %3994 = vmatprep.subr.bf16.mxu0 0
          %3995 = vmatpush1.bf16.msra.mxu0 %v3937
          %3996 = vmatprep.subr.bf16.mxu0 0
          %3997 = vmatpush1.bf16.msra.mxu0 %v3938
          %3998 = vmatprep.subr.bf16.mxu0 0
          %3999 = vmatpush1.bf16.msra.mxu0 %v3939
          %4000 = vmatprep.subr.bf16.mxu0 0
          %4001 = vmatpush1.bf16.msra.mxu0 %v3940
          %4002 = vmatprep.subr.bf16.mxu0 0
          %4003 = vmatpush1.bf16.msra.mxu0 %v3941
          %4004 = vmatprep.subr.bf16.mxu0 0
          %4005 = vmatpush1.bf16.msra.mxu0 %v3942
          %4006 = vmatprep.subr.bf16.mxu0 0
          %4007 = vmatpush1.bf16.msra.mxu0 %v3943
          %4008 = vmatprep.mubr.bf16.mxu0 %v2856
          %4009 = vmatmul.mubr.bf16.gmra.mrb[0].mxu0 %v2782
          %v4010 = vpop.f32.mrb[0].mxu0
          %v4011 = vadd.f32 0.0, %v4010
          %v4012 = vpop.f32.mrb[0].mxu0
          %v4013 = vpop.f32.mrb[0].mxu0
          %v4014 = vadd.f32 0.0, %v4013
          %v4015 = vpop.f32.mrb[0].mxu0
          %4016 = vmatprep.mubr.bf16.mxu0 %v2868
          %4017 = vmatmul.mubr.bf16.gmra.mrb[0].mxu0 %v2783
          %v4018 = vpop.f32.mrb[0].mxu0
          %v4019 = vadd.f32 0.0, %v4018
          %v4020 = vpop.f32.mrb[0].mxu0
          %v4021 = vpop.f32.mrb[0].mxu0
          %v4022 = vadd.f32 0.0, %v4021
          %v4023 = vpop.f32.mrb[0].mxu0
          %4024 = vmatprep.mubr.bf16.mxu0 %v2880
          %4025 = vmatmul.mubr.bf16.gmra.mrb[0].mxu0 %v2784
          %v4026 = vpop.f32.mrb[0].mxu0
          %v4027 = vadd.f32 0.0, %v4026
          %v4028 = vpop.f32.mrb[0].mxu0
          %v4029 = vpop.f32.mrb[0].mxu0
          %v4030 = vadd.f32 0.0, %v4029
          %v4031 = vpop.f32.mrb[0].mxu0
          %4032 = vmatprep.mubr.bf16.mxu0 %v2892
          %4033 = vmatmul.mubr.bf16.gmra.mrb[0].mxu0 %v2785
          %v4034 = vpop.f32.mrb[0].mxu0
          %v4035 = vadd.f32 0.0, %v4034
          %v4036 = vpop.f32.mrb[0].mxu0
          %v4037 = vpop.f32.mrb[0].mxu0
          %v4038 = vadd.f32 0.0, %v4037
          %v4039 = vpop.f32.mrb[0].mxu0
          %4040 = vmatprep.mubr.bf16.mxu0 %v2904
          %4041 = vmatmul.mubr.bf16.gmra.mrb[0].mxu0 %v2786
          %v4042 = vpop.f32.mrb[0].mxu0
          %v4043 = vadd.f32 0.0, %v4042
          %v4044 = vpop.f32.mrb[0].mxu0
          %v4045 = vpop.f32.mrb[0].mxu0
          %v4046 = vadd.f32 0.0, %v4045
          %v4047 = vpop.f32.mrb[0].mxu0
          %4048 = vmatprep.mubr.bf16.mxu0 %v2916
          %4049 = vmatmul.mubr.bf16.gmra.mrb[0].mxu0 %v2787
          %v4050 = vpop.f32.mrb[0].mxu0
          %v4051 = vadd.f32 0.0, %v4050
          %v4052 = vpop.f32.mrb[0].mxu0
          %v4053 = vpop.f32.mrb[0].mxu0
          %v4054 = vadd.f32 0.0, %v4053
          %v4055 = vpop.f32.mrb[0].mxu0
          %4056 = vmatprep.mubr.bf16.mxu0 %v3026
          %4057 = vmatmul.mubr.bf16.gmra.mrb[0].mxu0 %v3010
          %v4058 = vpop.f32.mrb[0].mxu0
          %v4059 = vadd.f32 0.0, %v4058
          %v4060 = vpop.f32.mrb[0].mxu0
          %v4061 = vpop.f32.mrb[0].mxu0
          %v4062 = vadd.f32 0.0, %v4061
          %v4063 = vpop.f32.mrb[0].mxu0
          %4064 = vmatprep.mubr.bf16.mxu0 %v3777
          %4065 = vmatmul.mubr.bf16.gmra.mrb[0].mxu0 %v3761
          %v4066 = vpop.f32.mrb[0].mxu0
          %v4067 = vadd.f32 0.0, %v4066
          %v4068 = vpop.f32.mrb[0].mxu0
          %v4069 = vpop.f32.mrb[0].mxu0
          %v4070 = vadd.f32 0.0, %v4069
          %v4071 = vpop.f32.mrb[0].mxu0
          %4072 = vdwg.mxu0
          %4073 = vmatprep.subr.bf16.mxu0 0
          %4074 = vmatpush1.bf16.msra.mxu0 %v3944
          %4075 = vmatprep.subr.bf16.mxu0 0
          %4076 = vmatpush1.bf16.msra.mxu0 %v3945
          %4077 = vmatprep.subr.bf16.mxu0 0
          %4078 = vmatpush1.bf16.msra.mxu0 %v3946
          %4079 = vmatprep.subr.bf16.mxu0 0
          %4080 = vmatpush1.bf16.msra.mxu0 %v3947
          %4081 = vmatprep.subr.bf16.mxu0 0
          %4082 = vmatpush1.bf16.msra.mxu0 %v3948
          %4083 = vmatprep.subr.bf16.mxu0 0
          %4084 = vmatpush1.bf16.msra.mxu0 %v3949
          %4085 = vmatprep.subr.bf16.mxu0 0
          %4086 = vmatpush1.bf16.msra.mxu0 %v3950
          %4087 = vmatprep.subr.bf16.mxu0 0
          %4088 = vmatpush1.bf16.msra.mxu0 %v3951
          %4089 = vmatprep.subr.bf16.mxu0 0
          %4090 = vmatpush1.bf16.msra.mxu0 0
          %4091 = vmatprep.subr.bf16.mxu0 0
          %4092 = vmatpush1.bf16.msra.mxu0 0
          %4093 = vmatprep.subr.bf16.mxu0 0
          %4094 = vmatpush1.bf16.msra.mxu0 0
          %4095 = vmatprep.subr.bf16.mxu0 0
          %4096 = vmatpush1.bf16.msra.mxu0 0
          %4097 = vmatprep.subr.bf16.mxu0 0
          %4098 = vmatpush1.bf16.msra.mxu0 0
          %4099 = vmatprep.subr.bf16.mxu0 0
          %4100 = vmatpush1.bf16.msra.mxu0 0
          %4101 = vmatprep.subr.bf16.mxu0 0
          %4102 = vmatpush1.bf16.msra.mxu0 0
          %4103 = vmatprep.subr.bf16.mxu0 0
          %4104 = vmatpush1.bf16.msra.mxu0 0
          %4105 = vmatprep.mubr.bf16.mxu0 0
          %4106 = vmatmul.mubr.bf16.gmra.mrb[0].mxu0 %v2934
          %v4107 = vpop.f32.mrb[0].mxu0
          %v4108 = vadd.f32 %v4011, %v4107
          %v4109 = vpop.f32.mrb[0].mxu0
          %v4110 = vpop.f32.mrb[0].mxu0
          %v4111 = vadd.f32 %v4014, %v4110
          %v4112 = vpop.f32.mrb[0].mxu0
          %4113 = vmatprep.mubr.bf16.mxu0 0
          %4114 = vmatmul.mubr.bf16.gmra.mrb[0].mxu0 %v2937
          %v4115 = vpop.f32.mrb[0].mxu0
          %v4116 = vadd.f32 %v4019, %v4115
          %v4117 = vpop.f32.mrb[0].mxu0
          %v4118 = vpop.f32.mrb[0].mxu0
          %v4119 = vadd.f32 %v4022, %v4118
          %v4120 = vpop.f32.mrb[0].mxu0
          %4121 = vmatprep.mubr.bf16.mxu0 0
          %4122 = vmatmul.mubr.bf16.gmra.mrb[0].mxu0 %v2940
          %v4123 = vpop.f32.mrb[0].mxu0
          %v4124 = vadd.f32 %v4027, %v4123
          %v4125 = vpop.f32.mrb[0].mxu0
          %v4126 = vpop.f32.mrb[0].mxu0
          %v4127 = vadd.f32 %v4030, %v4126
          %v4128 = vpop.f32.mrb[0].mxu0
          %4129 = vmatprep.mubr.bf16.mxu0 0
          %4130 = vmatmul.mubr.bf16.gmra.mrb[0].mxu0 %v2943
          %v4131 = vpop.f32.mrb[0].mxu0
          %v4132 = vadd.f32 %v4035, %v4131
          %v4133 = vpop.f32.mrb[0].mxu0
          %v4134 = vpop.f32.mrb[0].mxu0
          %v4135 = vadd.f32 %v4038, %v4134
          %v4136 = vpop.f32.mrb[0].mxu0
          %4137 = vmatprep.mubr.bf16.mxu0 0
          %4138 = vmatmul.mubr.bf16.gmra.mrb[0].mxu0 %v2946
          %v4139 = vpop.f32.mrb[0].mxu0
          %v4140 = vadd.f32 %v4043, %v4139
          %v4141 = vpop.f32.mrb[0].mxu0
          %v4142 = vpop.f32.mrb[0].mxu0
          %v4143 = vadd.f32 %v4046, %v4142
          %v4144 = vpop.f32.mrb[0].mxu0
          %4145 = vmatprep.mubr.bf16.mxu0 0
          %4146 = vmatmul.mubr.bf16.gmra.mrb[0].mxu0 %v2949
          %v4147 = vpop.f32.mrb[0].mxu0
          %v4148 = vadd.f32 %v4051, %v4147
          %v4149 = vpop.f32.mrb[0].mxu0
          %v4150 = vpop.f32.mrb[0].mxu0
          %v4151 = vadd.f32 %v4054, %v4150
          %v4152 = vpop.f32.mrb[0].mxu0
          %4153 = vmatprep.mubr.bf16.mxu0 0
          %4154 = vmatmul.mubr.bf16.gmra.mrb[0].mxu0 %v3030
          %v4155 = vpop.f32.mrb[0].mxu0
          %v4156 = vadd.f32 %v4059, %v4155
          %v4157 = vpop.f32.mrb[0].mxu0
          %v4158 = vpop.f32.mrb[0].mxu0
          %v4159 = vadd.f32 %v4062, %v4158
          %v4160 = vpop.f32.mrb[0].mxu0
          %4161 = vmatprep.mubr.bf16.mxu0 0
          %4162 = vmatmul.mubr.bf16.gmra.mrb[0].mxu0 %v3781
          %v4163 = vpop.f32.mrb[0].mxu0
          %v4164 = vadd.f32 %v4067, %v4163
          %v4165 = vpop.f32.mrb[0].mxu0
          %v4166 = vpop.f32.mrb[0].mxu0
          %v4167 = vadd.f32 %v4070, %v4166
          %v4168 = vpop.f32.mrb[0].mxu0
          %4169 = vdwg.mxu0
          %v4170 = vadd.f32 %v3695, %v4108
          %v4171 = vadd.f32 %v3698, %v4111
          %v4172 = vadd.f32 %v3703, %v4116
          %v4173 = vadd.f32 %v3706, %v4119
          %v4174 = vadd.f32 %v3711, %v4124
          %v4175 = vadd.f32 %v3714, %v4127
          %v4176 = vadd.f32 %v3719, %v4132
          %v4177 = vadd.f32 %v3722, %v4135
          %v4178 = vadd.f32 %v3727, %v4140
          %v4179 = vadd.f32 %v3730, %v4143
          %v4180 = vadd.f32 %v3735, %v4148
          %v4181 = vadd.f32 %v3738, %v4151
          %v4182 = vadd.f32 %v3743, %v4156
          %v4183 = vadd.f32 %v3746, %v4159
          %v4184 = vadd.f32 %v3751, %v4164
          %v4185 = vadd.f32 %v3754, %v4167
          %s4186 = smul.u32 %s2714, 2
          %s4187 = smul.addr %s4186, 4
          %s4188 = scalar_lea.vmem %s234, %s4187
          %v4189 = vld [vmem:[%s4188] sm:$0xf]
          %v4190 = vld [vmem:[%s4188 + $0x4] sm:$0xf]
          %v4191 = vld [vmem:[%s4188 + $0x8] sm:$0xf]
          %v4192 = vld [vmem:[%s4188 + $0xc] sm:$0xf]
          %v4193 = vld [vmem:[%s4188 + $0x10] sm:$0xf]
          %v4194 = vld [vmem:[%s4188 + $0x14] sm:$0xf]
          %v4195 = vld [vmem:[%s4188 + $0x18] sm:$0xf]
          %v4196 = vld [vmem:[%s4188 + $0x1c] sm:$0xf]
          %v4197 = vld [vmem:[%s4188 + $0x20] sm:$0xf]
          %v4198 = vld [vmem:[%s4188 + $0x24] sm:$0xf]
          %v4199 = vld [vmem:[%s4188 + $0x28] sm:$0xf]
          %v4200 = vld [vmem:[%s4188 + $0x2c] sm:$0xf]
          %v4201 = vld [vmem:[%s4188 + $0x30] sm:$0xf]
          %v4202 = vld [vmem:[%s4188 + $0x34] sm:$0xf]
          %v4203 = vld [vmem:[%s4188 + $0x38] sm:$0xf]
          %v4204 = vld [vmem:[%s4188 + $0x3c] sm:$0xf]
          %v4205 = vunpack.c.l.bf16 %v4189
          %v4206 = vunpack.c.l.bf16 %v4190
          %v4207 = vunpack.c.l.bf16 %v4191
          %v4208 = vunpack.c.l.bf16 %v4192
          %v4209 = vunpack.c.l.bf16 %v4193
          %v4210 = vunpack.c.l.bf16 %v4194
          %v4211 = vunpack.c.l.bf16 %v4195
          %v4212 = vunpack.c.l.bf16 %v4196
          %v4213 = vunpack.c.l.bf16 %v4197
          %v4214 = vunpack.c.l.bf16 %v4198
          %v4215 = vunpack.c.l.bf16 %v4199
          %v4216 = vunpack.c.l.bf16 %v4200
          %v4217 = vunpack.c.l.bf16 %v4201
          %v4218 = vunpack.c.l.bf16 %v4202
          %v4219 = vunpack.c.l.bf16 %v4203
          %v4220 = vunpack.c.l.bf16 %v4204
          %v4222 = vlaneseq
          %v4223 = vshrl.u32 %v4222, 7
          %v4224 = vsub.s32 0, %v4223
          %v4225 = vrot.slane %v923, %v4224
          %v4227 = vadd.f32 %v4170, %v4225
          %v4228 = vadd.f32 %v4171, %v4225
          %v4229 = vadd.f32 %v4172, %v4225
          %v4230 = vadd.f32 %v4173, %v4225
          %v4231 = vadd.f32 %v4174, %v4225
          %v4232 = vadd.f32 %v4175, %v4225
          %v4233 = vadd.f32 %v4176, %v4225
          %v4234 = vadd.f32 %v4177, %v4225
          %v4235 = vadd.f32 %v4178, %v4225
          %v4236 = vadd.f32 %v4179, %v4225
          %v4237 = vadd.f32 %v4180, %v4225
          %v4238 = vadd.f32 %v4181, %v4225
          %v4239 = vadd.f32 %v4182, %v4225
          %v4240 = vadd.f32 %v4183, %v4225
          %v4241 = vadd.f32 %v4184, %v4225
          %v4242 = vadd.f32 %v4185, %v4225
          %v4243 = vadd.f32 %v4227, %v4205
          %v4244 = vadd.f32 %v4228, %v4206
          %v4245 = vadd.f32 %v4229, %v4207
          %v4246 = vadd.f32 %v4230, %v4208
          %v4247 = vadd.f32 %v4231, %v4209
          %v4248 = vadd.f32 %v4232, %v4210
          %v4249 = vadd.f32 %v4233, %v4211
          %v4250 = vadd.f32 %v4234, %v4212
          %v4251 = vadd.f32 %v4235, %v4213
          %v4252 = vadd.f32 %v4236, %v4214
          %v4253 = vadd.f32 %v4237, %v4215
          %v4254 = vadd.f32 %v4238, %v4216
          %v4255 = vadd.f32 %v4239, %v4217
          %v4256 = vadd.f32 %v4240, %v4218
          %v4257 = vadd.f32 %v4241, %v4219
          %v4258 = vadd.f32 %v4242, %v4220
          %v4259 = vmax.f32 %v4243, 0.0
          %v4260 = vmax.f32 %v4244, 0.0
          %v4261 = vmax.f32 %v4245, 0.0
          %v4262 = vmax.f32 %v4246, 0.0
          %v4263 = vmax.f32 %v4247, 0.0
          %v4264 = vmax.f32 %v4248, 0.0
          %v4265 = vmax.f32 %v4249, 0.0
          %v4266 = vmax.f32 %v4250, 0.0
          %v4267 = vmax.f32 %v4251, 0.0
          %v4268 = vmax.f32 %v4252, 0.0
          %v4269 = vmax.f32 %v4253, 0.0
          %v4270 = vmax.f32 %v4254, 0.0
          %v4271 = vmax.f32 %v4255, 0.0
          %v4272 = vmax.f32 %v4256, 0.0
          %v4273 = vmax.f32 %v4257, 0.0
          %v4274 = vmax.f32 %v4258, 0.0
          %v4275 = vpack.c.bf16 %v4260, %v4259
          %v4276 = vpack.c.bf16 %v4262, %v4261
          %v4277 = vpack.c.bf16 %v4264, %v4263
          %v4278 = vpack.c.bf16 %v4266, %v4265
          %v4279 = vpack.c.bf16 %v4268, %v4267
          %v4280 = vpack.c.bf16 %v4270, %v4269
          %v4281 = vpack.c.bf16 %v4272, %v4271
          %v4282 = vpack.c.bf16 %v4274, %v4273
          %v4291 = vunpack.c.l.b16 %v4275
          %v4292 = vunpack.c.h.b16 %v4275
          %v4293 = vunpack.c.l.b16 %v4276
          %v4294 = vunpack.c.h.b16 %v4276
          %v4295 = vunpack.c.l.b16 %v4277
          %v4296 = vunpack.c.h.b16 %v4277
          %v4297 = vunpack.c.l.b16 %v4278
          %v4298 = vunpack.c.h.b16 %v4278
          %v4299 = vunpack.c.l.b16 %v4279
          %v4300 = vunpack.c.h.b16 %v4279
          %v4301 = vunpack.c.l.b16 %v4280
          %v4302 = vunpack.c.h.b16 %v4280
          %v4303 = vunpack.c.l.b16 %v4281
          %v4304 = vunpack.c.h.b16 %v4281
          %v4305 = vunpack.c.l.b16 %v4282
          %v4306 = vunpack.c.h.b16 %v4282
          %v4307 = vpack.c.b16 %v4291, %v4291
          %v4308 = vpack.c.b16 %v4292, %v4292
          %v4309 = vpack.c.b16 %v4293, %v4293
          %v4310 = vpack.c.b16 %v4294, %v4294
          %v4311 = vpack.c.b16 %v4295, %v4295
          %v4312 = vpack.c.b16 %v4296, %v4296
          %v4313 = vpack.c.b16 %v4297, %v4297
          %v4314 = vpack.c.b16 %v4298, %v4298
          %v4315 = vpack.c.b16 %v4299, %v4299
          %v4316 = vpack.c.b16 %v4300, %v4300
          %v4317 = vpack.c.b16 %v4301, %v4301
          %v4318 = vpack.c.b16 %v4302, %v4302
          %v4319 = vpack.c.b16 %v4303, %v4303
          %v4320 = vpack.c.b16 %v4304, %v4304
          %v4321 = vpack.c.b16 %v4305, %v4305
          %v4322 = vpack.c.b16 %v4306, %v4306
          %s4339 = smul.addr %s4186, 4
          %s4340 = scalar_lea.vmem %s239, %s4339
          %4341 = vst [vmem:[%s4340] sm:$0xf] %v4307
          %4342 = vst [vmem:[%s4340 + $0x4] sm:$0xf] %v4308
          %4343 = vst [vmem:[%s4340 + $0x8] sm:$0xf] %v4309
          %4344 = vst [vmem:[%s4340 + $0xc] sm:$0xf] %v4310
          %4345 = vst [vmem:[%s4340 + $0x10] sm:$0xf] %v4311
          %4346 = vst [vmem:[%s4340 + $0x14] sm:$0xf] %v4312
          %4347 = vst [vmem:[%s4340 + $0x18] sm:$0xf] %v4313
          %4348 = vst [vmem:[%s4340 + $0x1c] sm:$0xf] %v4314
          %4349 = vst [vmem:[%s4340 + $0x20] sm:$0xf] %v4315
          %4350 = vst [vmem:[%s4340 + $0x24] sm:$0xf] %v4316
          %4351 = vst [vmem:[%s4340 + $0x28] sm:$0xf] %v4317
          %4352 = vst [vmem:[%s4340 + $0x2c] sm:$0xf] %v4318
          %4353 = vst [vmem:[%s4340 + $0x30] sm:$0xf] %v4319
          %4354 = vst [vmem:[%s4340 + $0x34] sm:$0xf] %v4320
          %4355 = vst [vmem:[%s4340 + $0x38] sm:$0xf] %v4321
          %4356 = vst [vmem:[%s4340 + $0x3c] sm:$0xf] %v4322
        $region56: #{basic_block_forward.1} parent=39 // loop_footer
          %s2713 = sadd.s32 1, %s2709
        $region57: #{basic_block_forward.1} parent=39 // loop_footer_branch
          %2708 = sbr.rel target = $region53
        $region58: #{basic_block_forward.1} parent=39 // loop_exit
          _
        %p4357 = scmp.lt.s32.totalorder %s17, 1
        %s4358 = scalar_select %p4357, %s17, 1
        %s4359 = smul.addr %s4358, 32
        %s4360 = smul.addr %s4359, 4
        %s4361 = scalar_lea.vmem %s5, %s4360
        // Predicated region
        $region59: #{basic_block_forward.1} parent=39 // pred_check
          %p4362 = pneg %p145
        $region60: #{basic_block_forward.1} parent=39 // pred_check_branch
          %4364 = sbr.rel (%p4362) target = $region62
        $region61: #{basic_block_forward.1} parent=39 // pred_region
          _
        $region62: #{basic_block_forward.1} parent=39 // pred_fallthru
          _
      $region40: #{basic_block_forward.1} parent=5 // pred_fallthru
        _
      %p4365 = scmp.le.s32.totalorder 2, %s12
      // Predicated region
      $region63: #{basic_block_forward.1} parent=5 // pred_check
        %p4366 = pneg %p4365
      $region64: #{basic_block_forward.1} parent=5 // pred_check_branch
        %4368 = sbr.rel (%p4366) target = $region66
      $region65: #{basic_block_forward.1} parent=5 // pred_region
        %s4369 = ssub.s32 %s12, 2
        // Predicated region
        $region67: #{basic_block_forward.1} parent=65 // pred_check
          %p4370 = pneg %p151
        $region68: #{basic_block_forward.1} parent=65 // pred_check_branch
          %4372 = sbr.rel (%p4370) target = $region70
        $region69: #{basic_block_forward.1} parent=65 // pred_region
          %p4373 = scmp.lt.s32.totalorder %s18, 1
          %s4374 = scalar_select %p4373, %s18, 1
          %s4375 = smul.addr %s4374, 32
          %s4376 = smul.addr %s4375, 4
          %s4377 = scalar_lea.vmem %s5, %s4376
        $region70: #{basic_block_forward.1} parent=65 // pred_fallthru
          _
      $region66: #{basic_block_forward.1} parent=5 // pred_fallthru
        _
    $region6: #{basic_block_forward.1} parent=1 // loop_footer
      %s16 = sadd.s32 1, %s12
    $region7: #{basic_block_forward.1} parent=1 // loop_footer_branch
      %11 = sbr.rel target = $region3
    $region8: #{basic_block_forward.1} parent=1 // loop_exit
      _
    %4378 = vsyncpa [#allocation5], 1
    %s4379 = scalar_lea.sflag [#allocation5], 1
    %4380 = vsyncpa %s4379, 1

</llo_original>
